<compile_context>
chip_gen: v5e
topology: v5e:2x2
jax: 0.10.0
libtpu: 0.0.40
codegen_flags: <defaults>
</compile_context>

<pallas_src>
import functools

import jax
import jax.numpy as jnp
from jax.experimental import pallas as pl
from jax.experimental.pallas import tpu as pltpu


# ---------------- Pallas kernel ------------------------------------------------

def minipointnet_kernel(x_ref,
                        w1_ref, b1_ref,          # conv1 (8 -> 64), Cin zero-padded 3->8
                        w2_ref, b2_ref,          # conv2 (64 -> 128)
                        w3_ref, b3_ref,          # conv3 (128 -> 1024)
                        wf1_ref, bf1_ref,        # fc1   (1024 -> 512)
                        wf2_ref, bf2_ref,        # fc2   (512 -> 256)
                        wf3_ref, bf3_ref,        # fc3   (256 -> 3)
                        o_ref,                   # (1, 1, 3) block of (B, 1, 3)
                        acc_ref,                 # VMEM (1, 1024) running max
                        *, mxu_dtype):
    t = pl.program_id(1)                         # point-tile index (reduction axis)
    n_t = pl.num_programs(1)

    @pl.when(t == 0)
    def _():
        acc_ref[...] = jnp.full(acc_ref.shape, -jnp.inf, dtype=acc_ref.dtype)

    def dense(h, w_ref, b_ref, relu=True):
        # MXU matmul (optionally bf16 operands), f32 accumulation, f32 bias/ReLU on VPU.
        y = jnp.dot(h.astype(mxu_dtype), w_ref[...],
                    preferred_element_type=jnp.float32)
        y = y + b_ref[...].astype(jnp.float32)
        return jnp.maximum(y, 0.0) if relu else y

    # Point-wise "conv" layers on this point tile: (tile_pts, 8) -> (tile_pts, 1024).
    x = x_ref[...].astype(jnp.float32)
    h = dense(x, w1_ref, b1_ref)
    h = dense(h, w2_ref, b2_ref)
    h = dense(h, w3_ref, b3_ref)

    # Fused global max-pool: running max over point tiles (per batch element).
    acc_ref[...] = jnp.maximum(acc_ref[...], jnp.max(h, axis=0, keepdims=True))

    # MLP head + store only once per batch element, at the last point tile.
    @pl.when(t == n_t - 1)
    def _():
        g = acc_ref[...]                                        # (1, 1024)
        f = dense(g, wf1_ref, bf1_ref)
        f = dense(f, wf2_ref, bf2_ref)
        out = dense(f, wf3_ref, bf3_ref, relu=False)            # (1, 3)
        o_ref[...] = out.reshape(o_ref.shape).astype(o_ref.dtype)


# ---------------- wrapper -------------------------------------------------------

_CIN_PAD = 8  # pad Cin=3 to a full sublane so layer 1 is a clean MXU matmul


def _choose_tile_pts(n_points):
    for cand in (1024, 512, 256, 128, 64, 32, 16, 8):
        if n_points % cand == 0:
            return cand
    raise ValueError("n_points must be a multiple of 8")


def minipointnet_forward(x, params, *, tile_pts=None, mxu_dtype=jnp.float32):
    B, N, Cin = x.shape
    assert Cin == 3, "MiniPointNet expects 3 input channels"
    if tile_pts is None:
        tile_pts = _choose_tile_pts(N)
    assert tile_pts % 8 == 0 and N % tile_pts == 0, (
        "tile_pts must be a multiple of 8 and divide n_points")
    n_tiles = N // tile_pts

    C1 = params["w1"].shape[1]
    C2 = params["w2"].shape[1]
    C3 = params["w3"].shape[1]
    H1 = params["wfc1"].shape[1]
    H2 = params["wfc2"].shape[1]
    H3 = params["wfc3"].shape[1]

    # Flatten + zero-pad Cin 3 -> 8 (layer-1 result is unchanged since w1 rows 3..7 = 0).
    x2d = x.reshape(B * N, Cin)
    x2d = jnp.pad(x2d, ((0, 0), (0, _CIN_PAD - Cin)))
    w1p = jnp.pad(params["w1"], ((0, _CIN_PAD - Cin), (0, 0)))

    # MXU operand dtype (weights); biases stay f32 (added after f32 accumulation).
    w1p = w1p.astype(mxu_dtype)
    w2 = params["w2"].astype(mxu_dtype)
    w3 = params["w3"].astype(mxu_dtype)
    wf1 = params["wfc1"].astype(mxu_dtype)
    wf2 = params["wfc2"].astype(mxu_dtype)
    wf3 = params["wfc3"].astype(mxu_dtype)

    flops = (2 * B * N * (_CIN_PAD * C1 + C1 * C2 + C2 * C3)
             + 2 * B * (C3 * H1 + H1 * H2 + H2 * H3))
    param_bytes = sum(int(p.size) * p.dtype.itemsize for p in params.values())
    bytes_accessed = (int(x.size) * x.dtype.itemsize + param_bytes
                      + B * H3 * jnp.dtype(x.dtype).itemsize)

    def x_map(b, t, nt=n_tiles):
        return (b * nt + t, 0)

    def const_map(b, t):
        return (0, 0)

    def full_spec(arr):
        # Full-array block, constant index_map -> fetched once, VMEM-resident.
        return pl.BlockSpec(arr.shape, const_map)

    weights = (w1p, params["b1"], w2, params["b2"], w3, params["b3"],
               wf1, params["bfc1"], wf2, params["bfc2"], wf3, params["bfc3"])

    kernel = functools.partial(minipointnet_kernel, mxu_dtype=mxu_dtype)

    out3d = pl.pallas_call(
        kernel,
        out_shape=jax.ShapeDtypeStruct((B, 1, H3), x.dtype),
        grid_spec=pltpu.PrefetchScalarGridSpec(
            num_scalar_prefetch=0,
            grid=(B, n_tiles),
            in_specs=[pl.BlockSpec((tile_pts, _CIN_PAD), x_map)]
                     + [full_spec(w) for w in weights],
            out_specs=pl.BlockSpec((1, 1, H3), lambda b, t: (b, 0, 0)),
            scratch_shapes=[pltpu.VMEM((1, C3), jnp.float32)],
        ),
        compiler_params=pltpu.CompilerParams(
            dimension_semantics=("parallel", "arbitrary"),
            vmem_limit_bytes=48 * 1024 * 1024,
        ),
        cost_estimate=pl.CostEstimate(flops=flops, transcendentals=0,
                                      bytes_accessed=bytes_accessed),
    )(x2d, *weights)

    return out3d.reshape(B, H3)


# ---------------- pure-JAX reference (correctness check) ------------------------

def minipointnet_reference(x, params):
    h = jax.nn.relu(x @ params["w1"] + params["b1"])
    h = jax.nn.relu(h @ params["w2"] + params["b2"])
    h = jax.nn.relu(h @ params["w3"] + params["b3"])
    g = jnp.max(h, axis=1)
    f = jax.nn.relu(g @ params["wfc1"] + params["bfc1"])
    f = jax.nn.relu(f @ params["wfc2"] + params["bfc2"])
    return f @ params["wfc3"] + params["bfc3"]


# ---------------- main -----------------------------------------------------------

if __name__ == "__main__":
    B, N = 2, 32                       # small batch, 32 points per cloud
    key = jax.random.PRNGKey(0)
    ks = jax.random.split(key, 13)

    x = jax.random.normal(ks[0], (B, N, 3), dtype=jnp.float32)

    def w(k, i, o):
        return 0.02 * jax.random.normal(k, (i, o), jnp.float32)

    def b(k, o):
        return 0.02 * jax.random.normal(k, (1, o), jnp.float32)

    params = {
        # conv weights stored (in, out): PyTorch Conv1d weight (out, in, 1) transposed
        "w1": w(ks[1], 3, 64),       "b1": b(ks[2], 64),
        "w2": w(ks[3], 64, 128),     "b2": b(ks[4], 128),
        "w3": w(ks[5], 128, 1024),   "b3": b(ks[6], 1024),
        # fc weights stored (in, out): PyTorch Linear weight (out, in) transposed
        "wfc1": w(ks[7], 1024, 512), "bfc1": b(ks[8], 512),
        "wfc2": w(ks[9], 512, 256),  "bfc2": b(ks[10], 256),
        "wfc3": w(ks[11], 256, 3),   "bfc3": b(ks[12], 3),
    }

    # tile_pts=8 forces 4 point-tiles per batch element so the pipelined grid and the
    # running-max accumulator (init / accumulate / finalize) are actually exercised.
    # For real point clouds use the default (auto-picks up to 1024 points per tile) and
    # mxu_dtype=jnp.bfloat16 for ~3-4x MXU throughput (loosen the tolerance then).
    out = jax.block_until_ready(
        minipointnet_forward(x, params, tile_pts=8, mxu_dtype=jnp.float32))
    ref = minipointnet_reference(x, params)

    assert out.shape == (B, 3)
    assert jnp.allclose(out, ref, atol=1e-4, rtol=1e-4), (
        f"max abs diff {jnp.max(jnp.abs(out - ref))}")

    print("KERNEL_OK")
</pallas_src>

<mosaic_0001>
module attributes {stable_mosaic.version = 11 : i64} {
  func.func @minipointnet_kernel(%arg0: i32, %arg1: i32, %arg2: memref<8x8xf32, #tpu.memory_space<vmem>>, %arg3: memref<8x64xf32, #tpu.memory_space<vmem>>, %arg4: memref<1x64xf32, #tpu.memory_space<vmem>>, %arg5: memref<64x128xf32, #tpu.memory_space<vmem>>, %arg6: memref<1x128xf32, #tpu.memory_space<vmem>>, %arg7: memref<128x1024xf32, #tpu.memory_space<vmem>>, %arg8: memref<1x1024xf32, #tpu.memory_space<vmem>>, %arg9: memref<1024x512xf32, #tpu.memory_space<vmem>>, %arg10: memref<1x512xf32, #tpu.memory_space<vmem>>, %arg11: memref<512x256xf32, #tpu.memory_space<vmem>>, %arg12: memref<1x256xf32, #tpu.memory_space<vmem>>, %arg13: memref<256x3xf32, #tpu.memory_space<vmem>>, %arg14: memref<1x3xf32, #tpu.memory_space<vmem>>, %arg15: memref<1x1x3xf32, #tpu.memory_space<vmem>>, %arg16: memref<1x1024xf32, #tpu.memory_space<vmem>>) attributes {dimension_semantics = [#tpu.dimension_semantics<parallel>, #tpu.dimension_semantics<arbitrary>], iteration_bounds = array<i64: 2, 4>, scalar_prefetch = 0 : i64, scratch_operands = 1 : i64, tpu.core_type = #tpu.core_type<tc>, window_params = [{transform_indices = @transform_0, window_bounds = array<i64: 8, 8>}, {pipeline_mode = #tpu.pipeline_mode<synchronous>, transform_indices = @transform_1, window_bounds = array<i64: 8, 64>}, {pipeline_mode = #tpu.pipeline_mode<synchronous>, transform_indices = @transform_2, window_bounds = array<i64: 1, 64>}, {pipeline_mode = #tpu.pipeline_mode<synchronous>, transform_indices = @transform_3, window_bounds = array<i64: 64, 128>}, {pipeline_mode = #tpu.pipeline_mode<synchronous>, transform_indices = @transform_4, window_bounds = array<i64: 1, 128>}, {pipeline_mode = #tpu.pipeline_mode<synchronous>, transform_indices = @transform_5, window_bounds = array<i64: 128, 1024>}, {pipeline_mode = #tpu.pipeline_mode<synchronous>, transform_indices = @transform_6, window_bounds = array<i64: 1, 1024>}, {pipeline_mode = #tpu.pipeline_mode<synchronous>, transform_indices = @transform_7, window_bounds = array<i64: 1024, 512>}, {pipeline_mode = #tpu.pipeline_mode<synchronous>, transform_indices = @transform_8, window_bounds = array<i64: 1, 512>}, {pipeline_mode = #tpu.pipeline_mode<synchronous>, transform_indices = @transform_9, window_bounds = array<i64: 512, 256>}, {pipeline_mode = #tpu.pipeline_mode<synchronous>, transform_indices = @transform_10, window_bounds = array<i64: 1, 256>}, {pipeline_mode = #tpu.pipeline_mode<synchronous>, transform_indices = @transform_11, window_bounds = array<i64: 256, 3>}, {pipeline_mode = #tpu.pipeline_mode<synchronous>, transform_indices = @transform_12, window_bounds = array<i64: 1, 3>}, {transform_indices = @transform_13, window_bounds = array<i64: 1, 1, 3>}]} {
    %c0_i32 = arith.constant 0 : i32
    %0 = arith.cmpi eq, %arg1, %c0_i32 : i32
    %1 = arith.extui %0 : i1 to i32
    %c0_i32_0 = arith.constant 0 : i32
    %2 = arith.cmpi ne, %1, %c0_i32_0 : i32
    scf.if %2 {
      %cst_25 = arith.constant 0xFF800000 : f32
      %33 = vector.broadcast %cst_25 : f32 to vector<1x1024xf32>
      %c0_26 = arith.constant 0 : index
      %c0_27 = arith.constant 0 : index
      %34 = vector.load %arg16[%c0_26, %c0_27] : memref<1x1024xf32, #tpu.memory_space<vmem>>, vector<1x1024xf32>
      tpu.vector_store %arg16[%c0_26, %c0_27], %33 {strides = array<i32>} : memref<1x1024xf32, #tpu.memory_space<vmem>>, vector<1x1024xf32>,
    } else {
    }
    %c0 = arith.constant 0 : index
    %c0_1 = arith.constant 0 : index
    %3 = vector.load %arg2[%c0, %c0_1] : memref<8x8xf32, #tpu.memory_space<vmem>>, vector<8x8xf32>
    %c0_2 = arith.constant 0 : index
    %c0_3 = arith.constant 0 : index
    %4 = vector.load %arg3[%c0_2, %c0_3] : memref<8x64xf32, #tpu.memory_space<vmem>>, vector<8x64xf32>
    %cst = arith.constant dense<0.000000e+00> : vector<8x64xf32>
    %5 = tpu.matmul %3, %4, %cst {dimension_numbers = #tpu.dot_dimension_numbers<[1], [0], [0], [1], [0, 0, 1, 1], [], []>} : vector<8x8xf32>, vector<8x64xf32>, vector<8x64xf32> -> vector<8x64xf32>
    %c0_4 = arith.constant 0 : index
    %c0_5 = arith.constant 0 : index
    %6 = vector.load %arg4[%c0_4, %c0_5] : memref<1x64xf32, #tpu.memory_space<vmem>>, vector<1x64xf32>
    %7 = vector.broadcast %6 : vector<1x64xf32> to vector<8x64xf32>
    %8 = arith.addf %5, %7 : vector<8x64xf32>
    %cst_6 = arith.constant 0.000000e+00 : f32
    %9 = vector.broadcast %cst_6 : f32 to vector<8x64xf32>
    %10 = arith.maximumf %8, %9 : vector<8x64xf32>
    %c0_7 = arith.constant 0 : index
    %c0_8 = arith.constant 0 : index
    %11 = vector.load %arg5[%c0_7, %c0_8] : memref<64x128xf32, #tpu.memory_space<vmem>>, vector<64x128xf32>
    %cst_9 = arith.constant dense<0.000000e+00> : vector<8x128xf32>
    %12 = tpu.matmul %10, %11, %cst_9 {dimension_numbers = #tpu.dot_dimension_numbers<[1], [0], [0], [1], [0, 0, 1, 1], [], []>} : vector<8x64xf32>, vector<64x128xf32>, vector<8x128xf32> -> vector<8x128xf32>
    %c0_10 = arith.constant 0 : index
    %c0_11 = arith.constant 0 : index
    %13 = vector.load %arg6[%c0_10, %c0_11] : memref<1x128xf32, #tpu.memory_space<vmem>>, vector<1x128xf32>
    %14 = vector.broadcast %13 : vector<1x128xf32> to vector<8x128xf32>
    %15 = arith.addf %12, %14 : vector<8x128xf32>
    %cst_12 = arith.constant 0.000000e+00 : f32
    %16 = vector.broadcast %cst_12 : f32 to vector<8x128xf32>
    %17 = arith.maximumf %15, %16 : vector<8x128xf32>
    %c0_13 = arith.constant 0 : index
    %c0_14 = arith.constant 0 : index
    %18 = vector.load %arg7[%c0_13, %c0_14] : memref<128x1024xf32, #tpu.memory_space<vmem>>, vector<128x1024xf32>
    %cst_15 = arith.constant dense<0.000000e+00> : vector<8x1024xf32>
    %19 = tpu.matmul %17, %18, %cst_15 {dimension_numbers = #tpu.dot_dimension_numbers<[1], [0], [0], [1], [0, 0, 1, 1], [], []>} : vector<8x128xf32>, vector<128x1024xf32>, vector<8x1024xf32> -> vector<8x1024xf32>
    %c0_16 = arith.constant 0 : index
    %c0_17 = arith.constant 0 : index
    %20 = vector.load %arg8[%c0_16, %c0_17] : memref<1x1024xf32, #tpu.memory_space<vmem>>, vector<1x1024xf32>
    %21 = vector.broadcast %20 : vector<1x1024xf32> to vector<8x1024xf32>
    %22 = arith.addf %19, %21 : vector<8x1024xf32>
    %cst_18 = arith.constant 0.000000e+00 : f32
    %23 = vector.broadcast %cst_18 : f32 to vector<8x1024xf32>
    %24 = arith.maximumf %22, %23 : vector<8x1024xf32>
    %c0_19 = arith.constant 0 : index
    %c0_20 = arith.constant 0 : index
    %25 = vector.load %arg16[%c0_19, %c0_20] : memref<1x1024xf32, #tpu.memory_space<vmem>>, vector<1x1024xf32>
    %cst_21 = arith.constant dense<0xFF800000> : vector<1024xf32>
    %26 = vector.multi_reduction <maximumf>, %24, %cst_21 [0] : vector<8x1024xf32> to vector<1024xf32>
    %27 = vector.shape_cast %26 : vector<1024xf32> to vector<1x1024xf32>
    %28 = arith.maximumf %25, %27 : vector<1x1024xf32>
    %c0_22 = arith.constant 0 : index
    %c0_23 = arith.constant 0 : index
    %29 = vector.load %arg16[%c0_22, %c0_23] : memref<1x1024xf32, #tpu.memory_space<vmem>>, vector<1x1024xf32>
    tpu.vector_store %arg16[%c0_22, %c0_23], %28 {strides = array<i32>} : memref<1x1024xf32, #tpu.memory_space<vmem>>, vector<1x1024xf32>,
    %c3_i32 = arith.constant 3 : i32
    %30 = arith.cmpi eq, %arg1, %c3_i32 : i32
    %31 = arith.extui %30 : i1 to i32
    %c0_i32_24 = arith.constant 0 : i32
    %32 = arith.cmpi ne, %31, %c0_i32_24 : i32
    scf.if %32 {
      %c0_25 = arith.constant 0 : index
      %c0_26 = arith.constant 0 : index
      %33 = vector.load %arg16[%c0_25, %c0_26] : memref<1x1024xf32, #tpu.memory_space<vmem>>, vector<1x1024xf32>
      %c0_27 = arith.constant 0 : index
      %c0_28 = arith.constant 0 : index
      %34 = vector.load %arg9[%c0_27, %c0_28] : memref<1024x512xf32, #tpu.memory_space<vmem>>, vector<1024x512xf32>
      %cst_29 = arith.constant dense<0.000000e+00> : vector<1x512xf32>
      %35 = tpu.matmul %33, %34, %cst_29 {dimension_numbers = #tpu.dot_dimension_numbers<[1], [0], [0], [1], [0, 0, 1, 1], [], []>} : vector<1x1024xf32>, vector<1024x512xf32>, vector<1x512xf32> -> vector<1x512xf32>
      %c0_30 = arith.constant 0 : index
      %c0_31 = arith.constant 0 : index
      %36 = vector.load %arg10[%c0_30, %c0_31] : memref<1x512xf32, #tpu.memory_space<vmem>>, vector<1x512xf32>
      %37 = arith.addf %35, %36 : vector<1x512xf32>
      %cst_32 = arith.constant 0.000000e+00 : f32
      %38 = vector.broadcast %cst_32 : f32 to vector<1x512xf32>
      %39 = arith.maximumf %37, %38 : vector<1x512xf32>
      %c0_33 = arith.constant 0 : index
      %c0_34 = arith.constant 0 : index
      %40 = vector.load %arg11[%c0_33, %c0_34] : memref<512x256xf32, #tpu.memory_space<vmem>>, vector<512x256xf32>
      %cst_35 = arith.constant dense<0.000000e+00> : vector<1x256xf32>
      %41 = tpu.matmul %39, %40, %cst_35 {dimension_numbers = #tpu.dot_dimension_numbers<[1], [0], [0], [1], [0, 0, 1, 1], [], []>} : vector<1x512xf32>, vector<512x256xf32>, vector<1x256xf32> -> vector<1x256xf32>
      %c0_36 = arith.constant 0 : index
      %c0_37 = arith.constant 0 : index
      %42 = vector.load %arg12[%c0_36, %c0_37] : memref<1x256xf32, #tpu.memory_space<vmem>>, vector<1x256xf32>
      %43 = arith.addf %41, %42 : vector<1x256xf32>
      %cst_38 = arith.constant 0.000000e+00 : f32
      %44 = vector.broadcast %cst_38 : f32 to vector<1x256xf32>
      %45 = arith.maximumf %43, %44 : vector<1x256xf32>
      %c0_39 = arith.constant 0 : index
      %c0_40 = arith.constant 0 : index
      %46 = vector.load %arg13[%c0_39, %c0_40] : memref<256x3xf32, #tpu.memory_space<vmem>>, vector<256x3xf32>
      %cst_41 = arith.constant dense<0.000000e+00> : vector<1x3xf32>
      %47 = tpu.matmul %45, %46, %cst_41 {dimension_numbers = #tpu.dot_dimension_numbers<[1], [0], [0], [1], [0, 0, 1, 1], [], []>} : vector<1x256xf32>, vector<256x3xf32>, vector<1x3xf32> -> vector<1x3xf32>
      %c0_42 = arith.constant 0 : index
      %c0_43 = arith.constant 0 : index
      %48 = vector.load %arg14[%c0_42, %c0_43] : memref<1x3xf32, #tpu.memory_space<vmem>>, vector<1x3xf32>
      %49 = arith.addf %47, %48 : vector<1x3xf32>
      %50 = vector.shape_cast %49 : vector<1x3xf32> to vector<1x1x3xf32>
      %c0_44 = arith.constant 0 : index
      %c0_45 = arith.constant 0 : index
      %c0_46 = arith.constant 0 : index
      %51 = vector.load %arg15[%c0_44, %c0_45, %c0_46] : memref<1x1x3xf32, #tpu.memory_space<vmem>>, vector<1x1x3xf32>
      tpu.vector_store %arg15[%c0_44, %c0_45, %c0_46], %50 {strides = array<i32>} : memref<1x1x3xf32, #tpu.memory_space<vmem>>, vector<1x1x3xf32>,
    } else {
    }
    return
  }
  func.func @transform_0(%arg0: i32, %arg1: i32) -> (i32, i32) {
    %c4_i32 = arith.constant 4 : i32
    %0 = arith.muli %arg0, %c4_i32 : i32
    %1 = arith.addi %0, %arg1 : i32
    %c0_i32 = arith.constant 0 : i32
    %c0_i32_0 = arith.constant 0 : i32
    return %1, %c0_i32 : i32, i32
  }
  func.func @transform_1(%arg0: i32, %arg1: i32) -> (i32, i32) {
    %c0_i32 = arith.constant 0 : i32
    %c0_i32_0 = arith.constant 0 : i32
    %c0_i32_1 = arith.constant 0 : i32
    return %c0_i32, %c0_i32_0 : i32, i32
  }
  func.func @transform_2(%arg0: i32, %arg1: i32) -> (i32, i32) {
    %c0_i32 = arith.constant 0 : i32
    %c0_i32_0 = arith.constant 0 : i32
    %c0_i32_1 = arith.constant 0 : i32
    return %c0_i32, %c0_i32_0 : i32, i32
  }
  func.func @transform_3(%arg0: i32, %arg1: i32) -> (i32, i32) {
    %c0_i32 = arith.constant 0 : i32
    %c0_i32_0 = arith.constant 0 : i32
    %c0_i32_1 = arith.constant 0 : i32
    return %c0_i32, %c0_i32_0 : i32, i32
  }
  func.func @transform_4(%arg0: i32, %arg1: i32) -> (i32, i32) {
    %c0_i32 = arith.constant 0 : i32
    %c0_i32_0 = arith.constant 0 : i32
    %c0_i32_1 = arith.constant 0 : i32
    return %c0_i32, %c0_i32_0 : i32, i32
  }
  func.func @transform_5(%arg0: i32, %arg1: i32) -> (i32, i32) {
    %c0_i32 = arith.constant 0 : i32
    %c0_i32_0 = arith.constant 0 : i32
    %c0_i32_1 = arith.constant 0 : i32
    return %c0_i32, %c0_i32_0 : i32, i32
  }
  func.func @transform_6(%arg0: i32, %arg1: i32) -> (i32, i32) {
    %c0_i32 = arith.constant 0 : i32
    %c0_i32_0 = arith.constant 0 : i32
    %c0_i32_1 = arith.constant 0 : i32
    return %c0_i32, %c0_i32_0 : i32, i32
  }
  func.func @transform_7(%arg0: i32, %arg1: i32) -> (i32, i32) {
    %c0_i32 = arith.constant 0 : i32
    %c0_i32_0 = arith.constant 0 : i32
    %c0_i32_1 = arith.constant 0 : i32
    return %c0_i32, %c0_i32_0 : i32, i32
  }
  func.func @transform_8(%arg0: i32, %arg1: i32) -> (i32, i32) {
    %c0_i32 = arith.constant 0 : i32
    %c0_i32_0 = arith.constant 0 : i32
    %c0_i32_1 = arith.constant 0 : i32
    return %c0_i32, %c0_i32_0 : i32, i32
  }
  func.func @transform_9(%arg0: i32, %arg1: i32) -> (i32, i32) {
    %c0_i32 = arith.constant 0 : i32
    %c0_i32_0 = arith.constant 0 : i32
    %c0_i32_1 = arith.constant 0 : i32
    return %c0_i32, %c0_i32_0 : i32, i32
  }
  func.func @transform_10(%arg0: i32, %arg1: i32) -> (i32, i32) {
    %c0_i32 = arith.constant 0 : i32
    %c0_i32_0 = arith.constant 0 : i32
    %c0_i32_1 = arith.constant 0 : i32
    return %c0_i32, %c0_i32_0 : i32, i32
  }
  func.func @transform_11(%arg0: i32, %arg1: i32) -> (i32, i32) {
    %c0_i32 = arith.constant 0 : i32
    %c0_i32_0 = arith.constant 0 : i32
    %c0_i32_1 = arith.constant 0 : i32
    return %c0_i32, %c0_i32_0 : i32, i32
  }
  func.func @transform_12(%arg0: i32, %arg1: i32) -> (i32, i32) {
    %c0_i32 = arith.constant 0 : i32
    %c0_i32_0 = arith.constant 0 : i32
    %c0_i32_1 = arith.constant 0 : i32
    return %c0_i32, %c0_i32_0 : i32, i32
  }
  func.func @transform_13(%arg0: i32, %arg1: i32) -> (i32, i32, i32) {
    %c0_i32 = arith.constant 0 : i32
    %c0_i32_0 = arith.constant 0 : i32
    %c0_i32_1 = arith.constant 0 : i32
    return %arg0, %c0_i32, %c0_i32_0 : i32, i32, i32
  }
}

</mosaic_0001>

<llo_original>
// kernel: tpu_custom_call.1
$region0: #{tpu_custom_call.1}
  #allocation0 [shape = 'u32[]', space=smem, size = 0x4, offset = 0x4, fixed_abs, tag = 'smem constant byte address 0x4 - core index']
  #allocation1 [shape = 'u32[72,128]{1,0:T(1,128)}', space=vmem, size = 0x9000, scoped, tag = 'internal scratch']
  #allocation2 [shape = 'f32[1,1024]{1,0:T(1,128)}', space=vmem, size = 0x1000, scoped, tag = 'scratch operand']
  %s0 = inlined_call_operand.vmem [shape: f32[64,8], index: 0, kind: input, shape index: {}]
  %s1 = inlined_call_operand.hbm [shape: f32[8,64], index: 1, kind: input, shape index: {}]
  %s2 = inlined_call_operand.hbm [shape: f32[1,64], index: 2, kind: input, shape index: {}]
  %s3 = inlined_call_operand.hbm [shape: f32[64,128], index: 3, kind: input, shape index: {}]
  %s4 = inlined_call_operand.hbm [shape: f32[1,128], index: 4, kind: input, shape index: {}]
  %s5 = inlined_call_operand.hbm [shape: f32[128,1024], index: 5, kind: input, shape index: {}]
  %s6 = inlined_call_operand.hbm [shape: f32[1,1024], index: 6, kind: input, shape index: {}]
  %s7 = inlined_call_operand.hbm [shape: f32[1024,512], index: 7, kind: input, shape index: {}]
  %s8 = inlined_call_operand.hbm [shape: f32[1,512], index: 8, kind: input, shape index: {}]
  %s9 = inlined_call_operand.hbm [shape: f32[512,256], index: 9, kind: input, shape index: {}]
  %s10 = inlined_call_operand.hbm [shape: f32[1,256], index: 10, kind: input, shape index: {}]
  %s11 = inlined_call_operand.vmem [shape: f32[256,3], index: 11, kind: input, shape index: {}]
  %s12 = inlined_call_operand.hbm [shape: f32[1,3], index: 12, kind: input, shape index: {}]
  %s13 = inlined_call_operand.hbm [shape: f32[2,1,3], index: 13, kind: output, shape index: {}]
  %s14 = sld [smem:[#allocation0]]
  $region137: #{tpu_custom_call.1} parent=0
    _
  %s16 = ssub.s32 1, %s14
  %s17 = scalar_select 0, %s16, %s14
  $region1: #{tpu_custom_call.1} parent=0
    #allocation3 [shape = 'u8[4096]{0}', space=vmem, size = 0x1000, scoped, tag = 'input window, operand 1, single buffered']
    #allocation4 [shape = 's32[2]{0}', space=sflag, size = 0x8, scoped, tag = 'scoped memory for tpu_custom_call.1']
    #allocation5 [shape = 's32[2]{0}', space=sflag, size = 0x8, scoped, tag = 'scoped memory for tpu_custom_call.1']
    #allocation6 [shape = 'u8[512]{0}', space=vmem, size = 0x400, scoped, tag = 'input window, operand 2, single buffered']
    #allocation7 [shape = 's32[1]{0}', space=sflag, size = 0x4, scoped, tag = 'scoped memory for tpu_custom_call.1']
    #allocation8 [shape = 'u8[32768]{0}', space=vmem, size = 0x8000, scoped, tag = 'input window, operand 3, single buffered']
    #allocation9 [shape = 'u8[512]{0}', space=vmem, size = 0x400, scoped, tag = 'input window, operand 4, single buffered']
    #allocation10 [shape = 's32[1]{0}', space=sflag, size = 0x4, scoped, tag = 'scoped memory for tpu_custom_call.1']
    #allocation11 [shape = 'u8[524288]{0}', space=vmem, size = 0x80000, scoped, tag = 'input window, operand 5, single buffered']
    #allocation12 [shape = 'u8[4096]{0}', space=vmem, size = 0x1000, scoped, tag = 'input window, operand 6, single buffered']
    #allocation13 [shape = 's32[1]{0}', space=sflag, size = 0x4, scoped, tag = 'scoped memory for tpu_custom_call.1']
    #allocation14 [shape = 'u8[2097152]{0}', space=vmem, size = 0x200000, scoped, tag = 'input window, operand 7, single buffered']
    #allocation15 [shape = 'u8[2048]{0}', space=vmem, size = 0x800, scoped, tag = 'input window, operand 8, single buffered']
    #allocation16 [shape = 's32[1]{0}', space=sflag, size = 0x4, scoped, tag = 'scoped memory for tpu_custom_call.1']
    #allocation17 [shape = 'u8[524288]{0}', space=vmem, size = 0x80000, scoped, tag = 'input window, operand 9, single buffered']
    #allocation18 [shape = 'u8[1024]{0}', space=vmem, size = 0x400, scoped, tag = 'input window, operand 10, single buffered']
    #allocation19 [shape = 's32[1]{0}', space=sflag, size = 0x4, scoped, tag = 'scoped memory for tpu_custom_call.1']
    #allocation20 [shape = 'u8[512]{0}', space=vmem, size = 0x400, scoped, tag = 'input window, operand 12, single buffered']
    #allocation21 [shape = 'u8[1024]{0}', space=vmem, size = 0x400, scoped, tag = 'output window, operand 0']
    %18 = vsyncpa [#allocation4], 0
    %19 = vsyncpa [#allocation7], 0
    %20 = vsyncpa [#allocation10], 0
    %21 = vsyncpa [#allocation13], 0
    %22 = vsyncpa [#allocation16], 0
    %23 = vsyncpa [#allocation19], 0
    %24 = vsyncpa [#allocation5], 0
    %s25 = scalar_lea.sflag [#allocation5], 1
    %26 = vsyncpa %s25, 0
    loop: start=0, step=1, limit=10
    $region2: #{tpu_custom_call.1} parent=1 // loop_pre_header
      _
    $region3: #{tpu_custom_call.1} parent=1 // loop_header
      %s28 = sphi 0, %s32
      %p29 = scmp.ge.s32.totalorder %s28, 10
      %s35 = sphi 0, %s47
      %s36 = sphi 0, %s43
      %s37 = sphi 0, %s35
      %s38 = sphi 0, %s36
      %s39 = sphi 0, %s37
      %s40 = sphi 0, %s38
      %s54 = sphi 0, %s56
      %s57 = sphi 0, %s54
      %s58 = sphi 0, %s57
      %s74 = sphi 0, %s58
      %s78 = sphi 0, %s78
      %s80 = sphi 0, %s78
      %s81 = sphi 0, %s80
      %s95 = sphi 0, %s81
      %s99 = sphi 0, %s99
      %s101 = sphi 0, %s99
      %s102 = sphi 0, %s101
      %s116 = sphi 0, %s102
      %s120 = sphi 0, %s120
      %s122 = sphi 0, %s120
      %s123 = sphi 0, %s122
      %s137 = sphi 0, %s123
      %s141 = sphi 0, %s141
      %s143 = sphi 0, %s141
      %s144 = sphi 0, %s143
      %s158 = sphi 0, %s144
      %s162 = sphi 0, %s162
      %s164 = sphi 0, %s162
      %s165 = sphi 0, %s164
      %s179 = sphi 0, %s165
      %s183 = sphi 0, %s183
      %s185 = sphi 0, %s183
      %s186 = sphi 0, %s185
      %s200 = sphi 0, %s186
      %s204 = sphi 0, %s204
      %s206 = sphi 0, %s204
      %s207 = sphi 0, %s206
      %s221 = sphi 0, %s207
      %s225 = sphi 0, %s225
      %s227 = sphi 0, %s225
      %s228 = sphi 0, %s227
      %s242 = sphi 0, %s228
      %s246 = sphi 0, %s246
      %s248 = sphi 0, %s246
      %s249 = sphi 0, %s248
      %s263 = sphi 0, %s249
      %s267 = sphi 0, %s267
      %s269 = sphi 0, %s267
      %s270 = sphi 0, %s269
      %s284 = sphi 0, %s270
      %s288 = sphi 0, %s288
      %s290 = sphi 0, %s288
      %s291 = sphi 0, %s290
      %s305 = sphi 0, %s291
      %s309 = sphi 0, %s309
      %s311 = sphi 0, %s309
      %s312 = sphi 0, %s311
      %s326 = sphi 0, %s312
      %s332 = sphi 0, %s334
      %s335 = sphi 0, %s332
      %s336 = sphi 0, %s335
      %s352 = sphi 0, %s336
    $region4: #{tpu_custom_call.1} parent=1 // loop_header_branch
      %31 = sbr.rel (%p29) target = $region8
    $region5: #{tpu_custom_call.1} parent=1 // loop_body
      %s33 = ssub.s32 %s28, 1
      %s34 = ssub.s32 %s28, 2
      %s41 = sadd.s32 1, %s36
      %p42 = scmp.ge.s32.totalorder %s41, 4
      %s43 = scalar_select %p42, 0, %s41
      %s44 = sadd.s32 1, %s35
      %s45 = scalar_select %p42, %s44, %s35
      %p46 = scmp.ge.s32.totalorder %s45, 2
      %s47 = scalar_select %p46, 0, %s45
      %s48 = smul.u32 %s35, 4
      %s49 = sadd.s32 %s48, %s36
      %s50 = smul.u32 %s47, 4
      %s51 = sadd.s32 %s50, %s43
      %s52 = ssub.s32 %s49, %s51
      %p53 = scmp.eq.s32.totalorder %s52, 0
      %s55 = sadd.s32 %s54, 1
      %s56 = scalar_select %p53, %s54, %s55
      %p59 = pneg %p53
      %p60 = scmp.eq.s32.totalorder %s28, 7
      %p61 = por %p59, %p60
      %p62 = scmp.ne.s32.totalorder %s54, %s57
      %p63 = scmp.eq.s32.totalorder %s28, 0
      %p64 = por %p62, %p63
      %p65 = scmp.ne.s32.totalorder %s54, %s57
      %p66 = scmp.eq.s32.totalorder %s33, 7
      %p67 = por %p65, %p66
      %p68 = scmp.ne.s32.totalorder %s57, %s58
      %p69 = scmp.eq.s32.totalorder %s33, 0
      %p70 = por %p68, %p69
      %p71 = scmp.ne.s32.totalorder %s57, %s58
      %p72 = scmp.eq.s32.totalorder %s34, 7
      %p73 = por %p71, %p72
      %p75 = scmp.ne.s32.totalorder %s58, %s74
      %p76 = scmp.eq.s32.totalorder %s34, 0
      %p77 = por %p75, %p76
      %s79 = sadd.s32 %s78, 1
      %p82 = scmp.eq.s32.totalorder %s28, 7
      %p83 = scmp.ne.s32.totalorder %s78, %s80
      %p84 = scmp.eq.s32.totalorder %s28, 0
      %p85 = por %p83, %p84
      %p86 = scmp.ne.s32.totalorder %s78, %s80
      %p87 = scmp.eq.s32.totalorder %s33, 7
      %p88 = por %p86, %p87
      %p89 = scmp.ne.s32.totalorder %s80, %s81
      %p90 = scmp.eq.s32.totalorder %s33, 0
      %p91 = por %p89, %p90
      %p92 = scmp.ne.s32.totalorder %s80, %s81
      %p93 = scmp.eq.s32.totalorder %s34, 7
      %p94 = por %p92, %p93
      %p96 = scmp.ne.s32.totalorder %s81, %s95
      %p97 = scmp.eq.s32.totalorder %s34, 0
      %p98 = por %p96, %p97
      %s100 = sadd.s32 %s99, 1
      %p103 = scmp.eq.s32.totalorder %s28, 7
      %p104 = scmp.ne.s32.totalorder %s99, %s101
      %p105 = scmp.eq.s32.totalorder %s28, 0
      %p106 = por %p104, %p105
      %p107 = scmp.ne.s32.totalorder %s99, %s101
      %p108 = scmp.eq.s32.totalorder %s33, 7
      %p109 = por %p107, %p108
      %p110 = scmp.ne.s32.totalorder %s101, %s102
      %p111 = scmp.eq.s32.totalorder %s33, 0
      %p112 = por %p110, %p111
      %p113 = scmp.ne.s32.totalorder %s101, %s102
      %p114 = scmp.eq.s32.totalorder %s34, 7
      %p115 = por %p113, %p114
      %p117 = scmp.ne.s32.totalorder %s102, %s116
      %p118 = scmp.eq.s32.totalorder %s34, 0
      %p119 = por %p117, %p118
      %s121 = sadd.s32 %s120, 1
      %p124 = scmp.eq.s32.totalorder %s28, 7
      %p125 = scmp.ne.s32.totalorder %s120, %s122
      %p126 = scmp.eq.s32.totalorder %s28, 0
      %p127 = por %p125, %p126
      %p128 = scmp.ne.s32.totalorder %s120, %s122
      %p129 = scmp.eq.s32.totalorder %s33, 7
      %p130 = por %p128, %p129
      %p131 = scmp.ne.s32.totalorder %s122, %s123
      %p132 = scmp.eq.s32.totalorder %s33, 0
      %p133 = por %p131, %p132
      %p134 = scmp.ne.s32.totalorder %s122, %s123
      %p135 = scmp.eq.s32.totalorder %s34, 7
      %p136 = por %p134, %p135
      %p138 = scmp.ne.s32.totalorder %s123, %s137
      %p139 = scmp.eq.s32.totalorder %s34, 0
      %p140 = por %p138, %p139
      %s142 = sadd.s32 %s141, 1
      %p145 = scmp.eq.s32.totalorder %s28, 7
      %p146 = scmp.ne.s32.totalorder %s141, %s143
      %p147 = scmp.eq.s32.totalorder %s28, 0
      %p148 = por %p146, %p147
      %p149 = scmp.ne.s32.totalorder %s141, %s143
      %p150 = scmp.eq.s32.totalorder %s33, 7
      %p151 = por %p149, %p150
      %p152 = scmp.ne.s32.totalorder %s143, %s144
      %p153 = scmp.eq.s32.totalorder %s33, 0
      %p154 = por %p152, %p153
      %p155 = scmp.ne.s32.totalorder %s143, %s144
      %p156 = scmp.eq.s32.totalorder %s34, 7
      %p157 = por %p155, %p156
      %p159 = scmp.ne.s32.totalorder %s144, %s158
      %p160 = scmp.eq.s32.totalorder %s34, 0
      %p161 = por %p159, %p160
      %s163 = sadd.s32 %s162, 1
      %p166 = scmp.eq.s32.totalorder %s28, 7
      %p167 = scmp.ne.s32.totalorder %s162, %s164
      %p168 = scmp.eq.s32.totalorder %s28, 0
      %p169 = por %p167, %p168
      %p170 = scmp.ne.s32.totalorder %s162, %s164
      %p171 = scmp.eq.s32.totalorder %s33, 7
      %p172 = por %p170, %p171
      %p173 = scmp.ne.s32.totalorder %s164, %s165
      %p174 = scmp.eq.s32.totalorder %s33, 0
      %p175 = por %p173, %p174
      %p176 = scmp.ne.s32.totalorder %s164, %s165
      %p177 = scmp.eq.s32.totalorder %s34, 7
      %p178 = por %p176, %p177
      %p180 = scmp.ne.s32.totalorder %s165, %s179
      %p181 = scmp.eq.s32.totalorder %s34, 0
      %p182 = por %p180, %p181
      %s184 = sadd.s32 %s183, 1
      %p187 = scmp.eq.s32.totalorder %s28, 7
      %p188 = scmp.ne.s32.totalorder %s183, %s185
      %p189 = scmp.eq.s32.totalorder %s28, 0
      %p190 = por %p188, %p189
      %p191 = scmp.ne.s32.totalorder %s183, %s185
      %p192 = scmp.eq.s32.totalorder %s33, 7
      %p193 = por %p191, %p192
      %p194 = scmp.ne.s32.totalorder %s185, %s186
      %p195 = scmp.eq.s32.totalorder %s33, 0
      %p196 = por %p194, %p195
      %p197 = scmp.ne.s32.totalorder %s185, %s186
      %p198 = scmp.eq.s32.totalorder %s34, 7
      %p199 = por %p197, %p198
      %p201 = scmp.ne.s32.totalorder %s186, %s200
      %p202 = scmp.eq.s32.totalorder %s34, 0
      %p203 = por %p201, %p202
      %s205 = sadd.s32 %s204, 1
      %p208 = scmp.eq.s32.totalorder %s28, 7
      %p209 = scmp.ne.s32.totalorder %s204, %s206
      %p210 = scmp.eq.s32.totalorder %s28, 0
      %p211 = por %p209, %p210
      %p212 = scmp.ne.s32.totalorder %s204, %s206
      %p213 = scmp.eq.s32.totalorder %s33, 7
      %p214 = por %p212, %p213
      %p215 = scmp.ne.s32.totalorder %s206, %s207
      %p216 = scmp.eq.s32.totalorder %s33, 0
      %p217 = por %p215, %p216
      %p218 = scmp.ne.s32.totalorder %s206, %s207
      %p219 = scmp.eq.s32.totalorder %s34, 7
      %p220 = por %p218, %p219
      %p222 = scmp.ne.s32.totalorder %s207, %s221
      %p223 = scmp.eq.s32.totalorder %s34, 0
      %p224 = por %p222, %p223
      %s226 = sadd.s32 %s225, 1
      %p229 = scmp.eq.s32.totalorder %s28, 7
      %p230 = scmp.ne.s32.totalorder %s225, %s227
      %p231 = scmp.eq.s32.totalorder %s28, 0
      %p232 = por %p230, %p231
      %p233 = scmp.ne.s32.totalorder %s225, %s227
      %p234 = scmp.eq.s32.totalorder %s33, 7
      %p235 = por %p233, %p234
      %p236 = scmp.ne.s32.totalorder %s227, %s228
      %p237 = scmp.eq.s32.totalorder %s33, 0
      %p238 = por %p236, %p237
      %p239 = scmp.ne.s32.totalorder %s227, %s228
      %p240 = scmp.eq.s32.totalorder %s34, 7
      %p241 = por %p239, %p240
      %p243 = scmp.ne.s32.totalorder %s228, %s242
      %p244 = scmp.eq.s32.totalorder %s34, 0
      %p245 = por %p243, %p244
      %s247 = sadd.s32 %s246, 1
      %p250 = scmp.eq.s32.totalorder %s28, 7
      %p251 = scmp.ne.s32.totalorder %s246, %s248
      %p252 = scmp.eq.s32.totalorder %s28, 0
      %p253 = por %p251, %p252
      %p254 = scmp.ne.s32.totalorder %s246, %s248
      %p255 = scmp.eq.s32.totalorder %s33, 7
      %p256 = por %p254, %p255
      %p257 = scmp.ne.s32.totalorder %s248, %s249
      %p258 = scmp.eq.s32.totalorder %s33, 0
      %p259 = por %p257, %p258
      %p260 = scmp.ne.s32.totalorder %s248, %s249
      %p261 = scmp.eq.s32.totalorder %s34, 7
      %p262 = por %p260, %p261
      %p264 = scmp.ne.s32.totalorder %s249, %s263
      %p265 = scmp.eq.s32.totalorder %s34, 0
      %p266 = por %p264, %p265
      %s268 = sadd.s32 %s267, 1
      %p271 = scmp.eq.s32.totalorder %s28, 7
      %p272 = scmp.ne.s32.totalorder %s267, %s269
      %p273 = scmp.eq.s32.totalorder %s28, 0
      %p274 = por %p272, %p273
      %p275 = scmp.ne.s32.totalorder %s267, %s269
      %p276 = scmp.eq.s32.totalorder %s33, 7
      %p277 = por %p275, %p276
      %p278 = scmp.ne.s32.totalorder %s269, %s270
      %p279 = scmp.eq.s32.totalorder %s33, 0
      %p280 = por %p278, %p279
      %p281 = scmp.ne.s32.totalorder %s269, %s270
      %p282 = scmp.eq.s32.totalorder %s34, 7
      %p283 = por %p281, %p282
      %p285 = scmp.ne.s32.totalorder %s270, %s284
      %p286 = scmp.eq.s32.totalorder %s34, 0
      %p287 = por %p285, %p286
      %s289 = sadd.s32 %s288, 1
      %p292 = scmp.eq.s32.totalorder %s28, 7
      %p293 = scmp.ne.s32.totalorder %s288, %s290
      %p294 = scmp.eq.s32.totalorder %s28, 0
      %p295 = por %p293, %p294
      %p296 = scmp.ne.s32.totalorder %s288, %s290
      %p297 = scmp.eq.s32.totalorder %s33, 7
      %p298 = por %p296, %p297
      %p299 = scmp.ne.s32.totalorder %s290, %s291
      %p300 = scmp.eq.s32.totalorder %s33, 0
      %p301 = por %p299, %p300
      %p302 = scmp.ne.s32.totalorder %s290, %s291
      %p303 = scmp.eq.s32.totalorder %s34, 7
      %p304 = por %p302, %p303
      %p306 = scmp.ne.s32.totalorder %s291, %s305
      %p307 = scmp.eq.s32.totalorder %s34, 0
      %p308 = por %p306, %p307
      %s310 = sadd.s32 %s309, 1
      %p313 = scmp.eq.s32.totalorder %s28, 7
      %p314 = scmp.ne.s32.totalorder %s309, %s311
      %p315 = scmp.eq.s32.totalorder %s28, 0
      %p316 = por %p314, %p315
      %p317 = scmp.ne.s32.totalorder %s309, %s311
      %p318 = scmp.eq.s32.totalorder %s33, 7
      %p319 = por %p317, %p318
      %p320 = scmp.ne.s32.totalorder %s311, %s312
      %p321 = scmp.eq.s32.totalorder %s33, 0
      %p322 = por %p320, %p321
      %p323 = scmp.ne.s32.totalorder %s311, %s312
      %p324 = scmp.eq.s32.totalorder %s34, 7
      %p325 = por %p323, %p324
      %p327 = scmp.ne.s32.totalorder %s312, %s326
      %p328 = scmp.eq.s32.totalorder %s34, 0
      %p329 = por %p327, %p328
      %s330 = ssub.s32 %s35, %s47
      %p331 = scmp.eq.s32.totalorder %s330, 0
      %s333 = sadd.s32 %s332, 1
      %s334 = scalar_select %p331, %s332, %s333
      %p337 = pneg %p331
      %p338 = scmp.eq.s32.totalorder %s28, 7
      %p339 = por %p337, %p338
      %p340 = scmp.ne.s32.totalorder %s332, %s335
      %p341 = scmp.eq.s32.totalorder %s28, 0
      %p342 = por %p340, %p341
      %p343 = scmp.ne.s32.totalorder %s332, %s335
      %p344 = scmp.eq.s32.totalorder %s33, 7
      %p345 = por %p343, %p344
      %p346 = scmp.ne.s32.totalorder %s335, %s336
      %p347 = scmp.eq.s32.totalorder %s33, 0
      %p348 = por %p346, %p347
      %p349 = scmp.ne.s32.totalorder %s335, %s336
      %p350 = scmp.eq.s32.totalorder %s34, 7
      %p351 = por %p349, %p350
      %p353 = scmp.ne.s32.totalorder %s336, %s352
      %p354 = scmp.eq.s32.totalorder %s34, 0
      %p355 = por %p353, %p354
      %p356 = scmp.le.s32.totalorder 1, %s28
      %p357 = scmp.lt.s32.totalorder %s28, 9
      %p358 = pnand %p356, %p357
      %p359 = pneg %p358
      // Predicated region
      $region9: #{tpu_custom_call.1} parent=5 // pred_check
        _
      $region10: #{tpu_custom_call.1} parent=5 // pred_check_branch
        %361 = sbr.rel (%p358) target = $region12
      $region11: #{tpu_custom_call.1} parent=5 // pred_region
        %s362 = ssub.s32 %s28, 1
        // Predicated region
        $region13: #{tpu_custom_call.1} parent=11 // pred_check
          %p363 = pneg %p91
        $region14: #{tpu_custom_call.1} parent=11 // pred_check_branch
          %365 = sbr.rel (%p363) target = $region16
        $region15: #{tpu_custom_call.1} parent=11 // pred_region
          %367 = vsyncadd [#allocation4], 0
          %s369 = sshll.u32 %s1, 4
          %s370 = int_to_ptr.hbm [resolvable:$true] %s369
          %s371 = sshll.u32 [#allocation3], 4
          %s372 = int_to_ptr.vmem [resolvable:$true] %s371
          %374 = dma.hbm_to_vmem [thread:$0]  %s370, 128, %s372, [#allocation4]
        $region16: #{tpu_custom_call.1} parent=11 // pred_fallthru
          _
        // Predicated region
        $region17: #{tpu_custom_call.1} parent=11 // pred_check
          %p375 = pneg %p112
        $region18: #{tpu_custom_call.1} parent=11 // pred_check_branch
          %377 = sbr.rel (%p375) target = $region20
        $region19: #{tpu_custom_call.1} parent=11 // pred_region
          %379 = vsyncadd [#allocation7], 0
          %s381 = sshll.u32 %s2, 4
          %s382 = int_to_ptr.hbm [resolvable:$true] %s381
          %s383 = sshll.u32 [#allocation6], 4
          %s384 = int_to_ptr.vmem [resolvable:$true] %s383
          %386 = dma.hbm_to_vmem [thread:$0]  %s382, 16, %s384, [#allocation7]
        $region20: #{tpu_custom_call.1} parent=11 // pred_fallthru
          _
        // Predicated region
        $region21: #{tpu_custom_call.1} parent=11 // pred_check
          %p387 = pneg %p133
        $region22: #{tpu_custom_call.1} parent=11 // pred_check_branch
          %389 = sbr.rel (%p387) target = $region24
        $region23: #{tpu_custom_call.1} parent=11 // pred_region
          %391 = vsyncadd [#allocation7], 0
          %s392 = sshll.u32 %s3, 4
          %s393 = int_to_ptr.hbm [resolvable:$true] %s392
          %s394 = sshll.u32 [#allocation8], 4
          %s395 = int_to_ptr.vmem [resolvable:$true] %s394
          %400 = dma.hbm_to_vmem [thread:$0]  %s393, 1024, %s395, [#allocation7], 128, 128, 8
        $region24: #{tpu_custom_call.1} parent=11 // pred_fallthru
          _
        // Predicated region
        $region25: #{tpu_custom_call.1} parent=11 // pred_check
          %p401 = pneg %p154
        $region26: #{tpu_custom_call.1} parent=11 // pred_check_branch
          %403 = sbr.rel (%p401) target = $region28
        $region27: #{tpu_custom_call.1} parent=11 // pred_region
          %405 = vsyncadd [#allocation10], 0
          %s407 = sshll.u32 %s4, 4
          %s408 = int_to_ptr.hbm [resolvable:$true] %s407
          %s409 = sshll.u32 [#allocation9], 4
          %s410 = int_to_ptr.vmem [resolvable:$true] %s409
          %412 = dma.hbm_to_vmem [thread:$0]  %s408, 16, %s410, [#allocation10]
        $region28: #{tpu_custom_call.1} parent=11 // pred_fallthru
          _
        // Predicated region
        $region29: #{tpu_custom_call.1} parent=11 // pred_check
          %p413 = pneg %p175
        $region30: #{tpu_custom_call.1} parent=11 // pred_check_branch
          %415 = sbr.rel (%p413) target = $region32
        $region31: #{tpu_custom_call.1} parent=11 // pred_region
          %417 = vsyncadd [#allocation10], 0
          %s418 = sshll.u32 %s5, 4
          %s419 = int_to_ptr.hbm [resolvable:$true] %s418
          %s420 = sshll.u32 [#allocation11], 4
          %s421 = int_to_ptr.vmem [resolvable:$true] %s420
          %426 = dma.hbm_to_vmem [thread:$0]  %s419, 16384, %s421, [#allocation10], 1024, 1024, 64
        $region32: #{tpu_custom_call.1} parent=11 // pred_fallthru
          _
        // Predicated region
        $region33: #{tpu_custom_call.1} parent=11 // pred_check
          %p427 = pneg %p196
        $region34: #{tpu_custom_call.1} parent=11 // pred_check_branch
          %429 = sbr.rel (%p427) target = $region36
        $region35: #{tpu_custom_call.1} parent=11 // pred_region
          %431 = vsyncadd [#allocation13], 0
          %s433 = sshll.u32 %s6, 4
          %s434 = int_to_ptr.hbm [resolvable:$true] %s433
          %s435 = sshll.u32 [#allocation12], 4
          %s436 = int_to_ptr.vmem [resolvable:$true] %s435
          %438 = dma.hbm_to_vmem [thread:$0]  %s434, 128, %s436, [#allocation13]
        $region36: #{tpu_custom_call.1} parent=11 // pred_fallthru
          _
        // Predicated region
        $region37: #{tpu_custom_call.1} parent=11 // pred_check
          %p439 = pneg %p217
        $region38: #{tpu_custom_call.1} parent=11 // pred_check_branch
          %441 = sbr.rel (%p439) target = $region40
        $region39: #{tpu_custom_call.1} parent=11 // pred_region
          %443 = vsyncadd [#allocation13], 0
          %s444 = sshll.u32 %s7, 4
          %s445 = int_to_ptr.hbm [resolvable:$true] %s444
          %s446 = sshll.u32 [#allocation14], 4
          %s447 = int_to_ptr.vmem [resolvable:$true] %s446
          %452 = dma.hbm_to_vmem [thread:$0]  %s445, 65536, %s447, [#allocation13], 512, 512, 32
        $region40: #{tpu_custom_call.1} parent=11 // pred_fallthru
          _
        // Predicated region
        $region41: #{tpu_custom_call.1} parent=11 // pred_check
          %p453 = pneg %p238
        $region42: #{tpu_custom_call.1} parent=11 // pred_check_branch
          %455 = sbr.rel (%p453) target = $region44
        $region43: #{tpu_custom_call.1} parent=11 // pred_region
          %457 = vsyncadd [#allocation16], 0
          %s459 = sshll.u32 %s8, 4
          %s460 = int_to_ptr.hbm [resolvable:$true] %s459
          %s461 = sshll.u32 [#allocation15], 4
          %s462 = int_to_ptr.vmem [resolvable:$true] %s461
          %464 = dma.hbm_to_vmem [thread:$0]  %s460, 64, %s462, [#allocation16]
        $region44: #{tpu_custom_call.1} parent=11 // pred_fallthru
          _
        // Predicated region
        $region45: #{tpu_custom_call.1} parent=11 // pred_check
          %p465 = pneg %p259
        $region46: #{tpu_custom_call.1} parent=11 // pred_check_branch
          %467 = sbr.rel (%p465) target = $region48
        $region47: #{tpu_custom_call.1} parent=11 // pred_region
          %469 = vsyncadd [#allocation16], 0
          %s470 = sshll.u32 %s9, 4
          %s471 = int_to_ptr.hbm [resolvable:$true] %s470
          %s472 = sshll.u32 [#allocation17], 4
          %s473 = int_to_ptr.vmem [resolvable:$true] %s472
          %478 = dma.hbm_to_vmem [thread:$0]  %s471, 16384, %s473, [#allocation16], 256, 256, 16
        $region48: #{tpu_custom_call.1} parent=11 // pred_fallthru
          _
        // Predicated region
        $region49: #{tpu_custom_call.1} parent=11 // pred_check
          %p479 = pneg %p280
        $region50: #{tpu_custom_call.1} parent=11 // pred_check_branch
          %481 = sbr.rel (%p479) target = $region52
        $region51: #{tpu_custom_call.1} parent=11 // pred_region
          %483 = vsyncadd [#allocation19], 0
          %s485 = sshll.u32 %s10, 4
          %s486 = int_to_ptr.hbm [resolvable:$true] %s485
          %s487 = sshll.u32 [#allocation18], 4
          %s488 = int_to_ptr.vmem [resolvable:$true] %s487
          %490 = dma.hbm_to_vmem [thread:$0]  %s486, 32, %s488, [#allocation19]
        $region52: #{tpu_custom_call.1} parent=11 // pred_fallthru
          _
        // Predicated region
        $region53: #{tpu_custom_call.1} parent=11 // pred_check
          %p491 = pneg %p301
        $region54: #{tpu_custom_call.1} parent=11 // pred_check_branch
          %493 = sbr.rel (%p491) target = $region56
        $region55: #{tpu_custom_call.1} parent=11 // pred_region
          _
        $region56: #{tpu_custom_call.1} parent=11 // pred_fallthru
          _
        // Predicated region
        $region57: #{tpu_custom_call.1} parent=11 // pred_check
          %p494 = pneg %p322
        $region58: #{tpu_custom_call.1} parent=11 // pred_check_branch
          %496 = sbr.rel (%p494) target = $region60
        $region59: #{tpu_custom_call.1} parent=11 // pred_region
          %498 = vsyncadd [#allocation19], 0
          %s500 = sshll.u32 %s12, 4
          %s501 = int_to_ptr.hbm [resolvable:$true] %s500
          %s502 = sshll.u32 [#allocation20], 4
          %s503 = int_to_ptr.vmem [resolvable:$true] %s502
          %505 = dma.hbm_to_vmem [thread:$0]  %s501, 16, %s503, [#allocation19]
        $region60: #{tpu_custom_call.1} parent=11 // pred_fallthru
          _
      $region12: #{tpu_custom_call.1} parent=5 // pred_fallthru
        _
      %p506 = scmp.lt.s32.totalorder %s28, 8
      // Predicated region
      $region61: #{tpu_custom_call.1} parent=5 // pred_check
        %p507 = pneg %p506
      $region62: #{tpu_custom_call.1} parent=5 // pred_check_branch
        %509 = sbr.rel (%p507) target = $region64
      $region63: #{tpu_custom_call.1} parent=5 // pred_region
        // Predicated region
        $region65: #{tpu_custom_call.1} parent=63 // pred_check
          %p510 = pneg %p64
        $region66: #{tpu_custom_call.1} parent=63 // pred_check_branch
          %512 = sbr.rel (%p510) target = $region68
        $region67: #{tpu_custom_call.1} parent=63 // pred_region
          %s513 = smul.u32 %s35, 4
          %s514 = sadd.s32 %s513, %s36
          %p515 = scmp.lt.s32.totalorder %s514, 7
          %s516 = scalar_select %p515, %s514, 7
          %s517 = smul.addr %s516, 8
          %s518 = scalar_lea.vmem %s0, %s517
          %s519 = smul.u32 %s35, 4
          %s520 = sadd.s32 %s519, %s36
        $region68: #{tpu_custom_call.1} parent=63 // pred_fallthru
          _
      $region64: #{tpu_custom_call.1} parent=5 // pred_fallthru
        _
      %p521 = scmp.le.s32.totalorder 1, %s28
      %p522 = scmp.lt.s32.totalorder %s28, 9
      %p523 = pnand %p521, %p522
      %p524 = pneg %p523
      // Predicated region
      $region69: #{tpu_custom_call.1} parent=5 // pred_check
        _
      $region70: #{tpu_custom_call.1} parent=5 // pred_check_branch
        %526 = sbr.rel (%p523) target = $region72
      $region71: #{tpu_custom_call.1} parent=5 // pred_region
        %s527 = ssub.s32 %s28, 1
        // Predicated region
        $region73: #{tpu_custom_call.1} parent=71 // pred_check
          %p528 = pneg %p91
        $region74: #{tpu_custom_call.1} parent=71 // pred_check_branch
          %530 = sbr.rel (%p528) target = $region76
        $region75: #{tpu_custom_call.1} parent=71 // pred_region
          %532 = dma.done [#allocation4], 128
        $region76: #{tpu_custom_call.1} parent=71 // pred_fallthru
          _
        // Predicated region
        $region77: #{tpu_custom_call.1} parent=71 // pred_check
          %p533 = pneg %p112
        $region78: #{tpu_custom_call.1} parent=71 // pred_check_branch
          %535 = sbr.rel (%p533) target = $region80
        $region79: #{tpu_custom_call.1} parent=71 // pred_region
          %537 = dma.done [#allocation7], 16
        $region80: #{tpu_custom_call.1} parent=71 // pred_fallthru
          _
        // Predicated region
        $region81: #{tpu_custom_call.1} parent=71 // pred_check
          %p538 = pneg %p133
        $region82: #{tpu_custom_call.1} parent=71 // pred_check_branch
          %540 = sbr.rel (%p538) target = $region84
        $region83: #{tpu_custom_call.1} parent=71 // pred_region
          %542 = dma.done [#allocation7], 1024
        $region84: #{tpu_custom_call.1} parent=71 // pred_fallthru
          _
        // Predicated region
        $region85: #{tpu_custom_call.1} parent=71 // pred_check
          %p543 = pneg %p154
        $region86: #{tpu_custom_call.1} parent=71 // pred_check_branch
          %545 = sbr.rel (%p543) target = $region88
        $region87: #{tpu_custom_call.1} parent=71 // pred_region
          %547 = dma.done [#allocation10], 16
        $region88: #{tpu_custom_call.1} parent=71 // pred_fallthru
          _
        // Predicated region
        $region89: #{tpu_custom_call.1} parent=71 // pred_check
          %p548 = pneg %p175
        $region90: #{tpu_custom_call.1} parent=71 // pred_check_branch
          %550 = sbr.rel (%p548) target = $region92
        $region91: #{tpu_custom_call.1} parent=71 // pred_region
          %552 = dma.done [#allocation10], 16384
        $region92: #{tpu_custom_call.1} parent=71 // pred_fallthru
          _
        // Predicated region
        $region93: #{tpu_custom_call.1} parent=71 // pred_check
          %p553 = pneg %p196
        $region94: #{tpu_custom_call.1} parent=71 // pred_check_branch
          %555 = sbr.rel (%p553) target = $region96
        $region95: #{tpu_custom_call.1} parent=71 // pred_region
          %557 = dma.done [#allocation13], 128
        $region96: #{tpu_custom_call.1} parent=71 // pred_fallthru
          _
        // Predicated region
        $region97: #{tpu_custom_call.1} parent=71 // pred_check
          %p558 = pneg %p217
        $region98: #{tpu_custom_call.1} parent=71 // pred_check_branch
          %560 = sbr.rel (%p558) target = $region100
        $region99: #{tpu_custom_call.1} parent=71 // pred_region
          %562 = dma.done [#allocation13], 65536
        $region100: #{tpu_custom_call.1} parent=71 // pred_fallthru
          _
        // Predicated region
        $region101: #{tpu_custom_call.1} parent=71 // pred_check
          %p563 = pneg %p238
        $region102: #{tpu_custom_call.1} parent=71 // pred_check_branch
          %565 = sbr.rel (%p563) target = $region104
        $region103: #{tpu_custom_call.1} parent=71 // pred_region
          %567 = dma.done [#allocation16], 64
        $region104: #{tpu_custom_call.1} parent=71 // pred_fallthru
          _
        // Predicated region
        $region105: #{tpu_custom_call.1} parent=71 // pred_check
          %p568 = pneg %p259
        $region106: #{tpu_custom_call.1} parent=71 // pred_check_branch
          %570 = sbr.rel (%p568) target = $region108
        $region107: #{tpu_custom_call.1} parent=71 // pred_region
          %572 = dma.done [#allocation16], 16384
        $region108: #{tpu_custom_call.1} parent=71 // pred_fallthru
          _
        // Predicated region
        $region109: #{tpu_custom_call.1} parent=71 // pred_check
          %p573 = pneg %p280
        $region110: #{tpu_custom_call.1} parent=71 // pred_check_branch
          %575 = sbr.rel (%p573) target = $region112
        $region111: #{tpu_custom_call.1} parent=71 // pred_region
          %577 = dma.done [#allocation19], 32
        $region112: #{tpu_custom_call.1} parent=71 // pred_fallthru
          _
        // Predicated region
        $region113: #{tpu_custom_call.1} parent=71 // pred_check
          %p578 = pneg %p322
        $region114: #{tpu_custom_call.1} parent=71 // pred_check_branch
          %580 = sbr.rel (%p578) target = $region116
        $region115: #{tpu_custom_call.1} parent=71 // pred_region
          %582 = dma.done [#allocation19], 16
        $region116: #{tpu_custom_call.1} parent=71 // pred_fallthru
          _
        %s583 = smul.u32 %s37, 4
        %s584 = sadd.s32 %s583, %s38
        %p585 = scmp.lt.s32.totalorder %s584, 7
        %s586 = scalar_select %p585, %s584, 7
        %s587 = smul.addr %s586, 8
        %s588 = scalar_lea.vmem %s0, %s587
        %p589 = pneg %p70
        %p590 = pneg %p67
        %p591 = pneg %p91
        %p592 = pneg %p88
        %p593 = pneg %p112
        %p594 = pneg %p109
        %p595 = pneg %p133
        %p596 = pneg %p130
        %p597 = pneg %p154
        %p598 = pneg %p151
        %p599 = pneg %p175
        %p600 = pneg %p172
        %p601 = pneg %p196
        %p602 = pneg %p193
        %p603 = pneg %p217
        %p604 = pneg %p214
        %p605 = pneg %p238
        %p606 = pneg %p235
        %p607 = pneg %p259
        %p608 = pneg %p256
        %p609 = pneg %p280
        %p610 = pneg %p277
        %p611 = pneg %p301
        %p612 = pneg %p298
        %p613 = pneg %p322
        %p614 = pneg %p319
        %p615 = pneg %p348
        %p616 = pneg %p345
        %s617 = sand.u32 %s335, 1
        %s618 = scalar_lea.sflag [#allocation5], %s617
        %s619 = sand.u32 %s335, 1
        %s620 = scalar_lea.vmem [#allocation21], %s619
        %s621 = smul.u32 %s37, 4
        %s622 = sadd.s32 %s621, %s38
        %p623 = scmp.lt.s32.totalorder %s622, 7
        %s624 = scalar_select %p623, %s622, 7
        %s625 = smul.addr %s624, 8
        %s626 = scalar_lea.vmem %s0, %s625
        %s627 = smul.u32 %s37, 4
        %s628 = sadd.s32 %s627, %s38
        %p629 = scmp.eq.s32.totalorder %s38, 0
        // Predicated region
        $region117: #{tpu_custom_call.1} parent=71 // pred_check
          %p630 = pneg %p629
        $region118: #{tpu_custom_call.1} parent=71 // pred_check_branch
          %632 = sbr.rel (%p630) target = $region120
        $region119: #{tpu_custom_call.1} parent=71 // pred_region
          %633 = vst [vmem:[#allocation2] sm:$0xff] -inf
        $region120: #{tpu_custom_call.1} parent=71 // pred_fallthru
          _
        %v634 = vld [vmem:[%s626] sm:$0xff]
        %v635 = vld [vmem:[#allocation3] sm:$0xff]
        %v636 = vld [vmem:[#allocation6] sm:$0x1]
        %v638 = vperm.slane %v636, 0
        %vm640 = vcmask 64512
        %v642 = vsel %vm640, %v634, 0
        %644 = vmatpush.msra.mxu0 0.0
        %645 = vmatpush.msra.mxu0 0.0
        %646 = vmatpush.msra.mxu0 0.0
        %647 = vmatpush.msra.mxu0 0.0
        %648 = vmatpush.msra.mxu0 0.0
        %649 = vmatpush.msra.mxu0 0.0
        %650 = vmatpush.msra.mxu0 0.0
        %651 = vmatpush.msra.mxu0 0.0
        %652 = vmatpush.msra.mxu0 0.0
        %653 = vmatpush.msra.mxu0 0.0
        %654 = vmatpush.msra.mxu0 0.0
        %655 = vmatpush.msra.mxu0 0.0
        %656 = vmatpush.msra.mxu0 0.0
        %657 = vmatpush.msra.mxu0 0.0
        %658 = vmatpush.msra.mxu0 0.0
        %659 = vmatpush.msra.mxu0 %v635
        %660 = vmatmul.f32.gmra.mxu0 %v642
        %v661 = vpop.f32.mrf.mxu0
        %v662 = vadd.f32 %v638, %v661
        %663 = vdwg.mxu0
        %v664 = vmax.f32 %v662, 0.0
        %v665 = vld [vmem:[#allocation8] sm:$0xff]
        %v666 = vld [vmem:[#allocation8 + $0x8] sm:$0xff]
        %v667 = vld [vmem:[#allocation8 + $0x10] sm:$0xff]
        %v668 = vld [vmem:[#allocation8 + $0x18] sm:$0xff]
        %v669 = vld [vmem:[#allocation8 + $0x20] sm:$0xff]
        %v670 = vld [vmem:[#allocation8 + $0x28] sm:$0xff]
        %v671 = vld [vmem:[#allocation8 + $0x30] sm:$0xff]
        %v672 = vld [vmem:[#allocation8 + $0x38] sm:$0xff]
        %v673 = vld [vmem:[#allocation9] sm:$0x1]
        %v675 = vperm.slane %v673, 0
        %vm677 = vcmask 523264
        %v679 = vsel %vm677, %v664, 0
        %681 = vmatpush.msra.mxu0 0.0
        %682 = vmatpush.msra.mxu0 0.0
        %683 = vmatpush.msra.mxu0 0.0
        %684 = vmatpush.msra.mxu0 0.0
        %685 = vmatpush.msra.mxu0 0.0
        %686 = vmatpush.msra.mxu0 0.0
        %687 = vmatpush.msra.mxu0 0.0
        %688 = vmatpush.msra.mxu0 0.0
        %689 = vmatpush.msra.mxu0 %v672
        %690 = vmatpush.msra.mxu0 %v671
        %691 = vmatpush.msra.mxu0 %v670
        %692 = vmatpush.msra.mxu0 %v669
        %693 = vmatpush.msra.mxu0 %v668
        %694 = vmatpush.msra.mxu0 %v667
        %695 = vmatpush.msra.mxu0 %v666
        %696 = vmatpush.msra.mxu0 %v665
        %697 = vmatmul.f32.gmra.mxu0 %v679
        %v698 = vpop.f32.mrf.mxu0
        %v699 = vadd.f32 %v675, %v698
        %700 = vdwg.mxu0
        %v701 = vmax.f32 %v699, 0.0
        %v702 = vld [vmem:[#allocation11] sm:$0xff]
        %v703 = vld [vmem:[#allocation11 + $0x8] sm:$0xff]
        %v704 = vld [vmem:[#allocation11 + $0x10] sm:$0xff]
        %v705 = vld [vmem:[#allocation11 + $0x18] sm:$0xff]
        %v706 = vld [vmem:[#allocation11 + $0x20] sm:$0xff]
        %v707 = vld [vmem:[#allocation11 + $0x28] sm:$0xff]
        %v708 = vld [vmem:[#allocation11 + $0x30] sm:$0xff]
        %v709 = vld [vmem:[#allocation11 + $0x38] sm:$0xff]
        %v710 = vld [vmem:[#allocation11 + $0x40] sm:$0xff]
        %v711 = vld [vmem:[#allocation11 + $0x48] sm:$0xff]
        %v712 = vld [vmem:[#allocation11 + $0x50] sm:$0xff]
        %v713 = vld [vmem:[#allocation11 + $0x58] sm:$0xff]
        %v714 = vld [vmem:[#allocation11 + $0x60] sm:$0xff]
        %v715 = vld [vmem:[#allocation11 + $0x68] sm:$0xff]
        %v716 = vld [vmem:[#allocation11 + $0x70] sm:$0xff]
        %v717 = vld [vmem:[#allocation11 + $0x78] sm:$0xff]
        %v718 = vld [vmem:[#allocation11 + $0x80] sm:$0xff]
        %v719 = vld [vmem:[#allocation11 + $0x88] sm:$0xff]
        %v720 = vld [vmem:[#allocation11 + $0x90] sm:$0xff]
        %v721 = vld [vmem:[#allocation11 + $0x98] sm:$0xff]
        %v722 = vld [vmem:[#allocation11 + $0xa0] sm:$0xff]
        %v723 = vld [vmem:[#allocation11 + $0xa8] sm:$0xff]
        %v724 = vld [vmem:[#allocation11 + $0xb0] sm:$0xff]
        %v725 = vld [vmem:[#allocation11 + $0xb8] sm:$0xff]
        %v726 = vld [vmem:[#allocation11 + $0xc0] sm:$0xff]
        %v727 = vld [vmem:[#allocation11 + $0xc8] sm:$0xff]
        %v728 = vld [vmem:[#allocation11 + $0xd0] sm:$0xff]
        %v729 = vld [vmem:[#allocation11 + $0xd8] sm:$0xff]
        %v730 = vld [vmem:[#allocation11 + $0xe0] sm:$0xff]
        %v731 = vld [vmem:[#allocation11 + $0xe8] sm:$0xff]
        %v732 = vld [vmem:[#allocation11 + $0xf0] sm:$0xff]
        %v733 = vld [vmem:[#allocation11 + $0xf8] sm:$0xff]
        %v734 = vld [vmem:[#allocation11 + $0x100] sm:$0xff]
        %v735 = vld [vmem:[#allocation11 + $0x108] sm:$0xff]
        %v736 = vld [vmem:[#allocation11 + $0x110] sm:$0xff]
        %v737 = vld [vmem:[#allocation11 + $0x118] sm:$0xff]
        %v738 = vld [vmem:[#allocation11 + $0x120] sm:$0xff]
        %v739 = vld [vmem:[#allocation11 + $0x128] sm:$0xff]
        %v740 = vld [vmem:[#allocation11 + $0x130] sm:$0xff]
        %v741 = vld [vmem:[#allocation11 + $0x138] sm:$0xff]
        %v742 = vld [vmem:[#allocation11 + $0x140] sm:$0xff]
        %v743 = vld [vmem:[#allocation11 + $0x148] sm:$0xff]
        %v744 = vld [vmem:[#allocation11 + $0x150] sm:$0xff]
        %v745 = vld [vmem:[#allocation11 + $0x158] sm:$0xff]
        %v746 = vld [vmem:[#allocation11 + $0x160] sm:$0xff]
        %v747 = vld [vmem:[#allocation11 + $0x168] sm:$0xff]
        %v748 = vld [vmem:[#allocation11 + $0x170] sm:$0xff]
        %v749 = vld [vmem:[#allocation11 + $0x178] sm:$0xff]
        %v750 = vld [vmem:[#allocation11 + $0x180] sm:$0xff]
        %v751 = vld [vmem:[#allocation11 + $0x188] sm:$0xff]
        %v752 = vld [vmem:[#allocation11 + $0x190] sm:$0xff]
        %v753 = vld [vmem:[#allocation11 + $0x198] sm:$0xff]
        %v754 = vld [vmem:[#allocation11 + $0x1a0] sm:$0xff]
        %v755 = vld [vmem:[#allocation11 + $0x1a8] sm:$0xff]
        %v756 = vld [vmem:[#allocation11 + $0x1b0] sm:$0xff]
        %v757 = vld [vmem:[#allocation11 + $0x1b8] sm:$0xff]
        %v758 = vld [vmem:[#allocation11 + $0x1c0] sm:$0xff]
        %v759 = vld [vmem:[#allocation11 + $0x1c8] sm:$0xff]
        %v760 = vld [vmem:[#allocation11 + $0x1d0] sm:$0xff]
        %v761 = vld [vmem:[#allocation11 + $0x1d8] sm:$0xff]
        %v762 = vld [vmem:[#allocation11 + $0x1e0] sm:$0xff]
        %v763 = vld [vmem:[#allocation11 + $0x1e8] sm:$0xff]
        %v764 = vld [vmem:[#allocation11 + $0x1f0] sm:$0xff]
        %v765 = vld [vmem:[#allocation11 + $0x1f8] sm:$0xff]
        %v766 = vld [vmem:[#allocation11 + $0x200] sm:$0xff]
        %v767 = vld [vmem:[#allocation11 + $0x208] sm:$0xff]
        %v768 = vld [vmem:[#allocation11 + $0x210] sm:$0xff]
        %v769 = vld [vmem:[#allocation11 + $0x218] sm:$0xff]
        %v770 = vld [vmem:[#allocation11 + $0x220] sm:$0xff]
        %v771 = vld [vmem:[#allocation11 + $0x228] sm:$0xff]
        %v772 = vld [vmem:[#allocation11 + $0x230] sm:$0xff]
        %v773 = vld [vmem:[#allocation11 + $0x238] sm:$0xff]
        %v774 = vld [vmem:[#allocation11 + $0x240] sm:$0xff]
        %v775 = vld [vmem:[#allocation11 + $0x248] sm:$0xff]
        %v776 = vld [vmem:[#allocation11 + $0x250] sm:$0xff]
        %v777 = vld [vmem:[#allocation11 + $0x258] sm:$0xff]
        %v778 = vld [vmem:[#allocation11 + $0x260] sm:$0xff]
        %v779 = vld [vmem:[#allocation11 + $0x268] sm:$0xff]
        %v780 = vld [vmem:[#allocation11 + $0x270] sm:$0xff]
        %v781 = vld [vmem:[#allocation11 + $0x278] sm:$0xff]
        %v782 = vld [vmem:[#allocation11 + $0x280] sm:$0xff]
        %v783 = vld [vmem:[#allocation11 + $0x288] sm:$0xff]
        %v784 = vld [vmem:[#allocation11 + $0x290] sm:$0xff]
        %v785 = vld [vmem:[#allocation11 + $0x298] sm:$0xff]
        %v786 = vld [vmem:[#allocation11 + $0x2a0] sm:$0xff]
        %v787 = vld [vmem:[#allocation11 + $0x2a8] sm:$0xff]
        %v788 = vld [vmem:[#allocation11 + $0x2b0] sm:$0xff]
        %v789 = vld [vmem:[#allocation11 + $0x2b8] sm:$0xff]
        %v790 = vld [vmem:[#allocation11 + $0x2c0] sm:$0xff]
        %v791 = vld [vmem:[#allocation11 + $0x2c8] sm:$0xff]
        %v792 = vld [vmem:[#allocation11 + $0x2d0] sm:$0xff]
        %v793 = vld [vmem:[#allocation11 + $0x2d8] sm:$0xff]
        %v794 = vld [vmem:[#allocation11 + $0x2e0] sm:$0xff]
        %v795 = vld [vmem:[#allocation11 + $0x2e8] sm:$0xff]
        %v796 = vld [vmem:[#allocation11 + $0x2f0] sm:$0xff]
        %v797 = vld [vmem:[#allocation11 + $0x2f8] sm:$0xff]
        %v798 = vld [vmem:[#allocation11 + $0x300] sm:$0xff]
        %v799 = vld [vmem:[#allocation11 + $0x308] sm:$0xff]
        %v800 = vld [vmem:[#allocation11 + $0x310] sm:$0xff]
        %v801 = vld [vmem:[#allocation11 + $0x318] sm:$0xff]
        %v802 = vld [vmem:[#allocation11 + $0x320] sm:$0xff]
        %v803 = vld [vmem:[#allocation11 + $0x328] sm:$0xff]
        %v804 = vld [vmem:[#allocation11 + $0x330] sm:$0xff]
        %v805 = vld [vmem:[#allocation11 + $0x338] sm:$0xff]
        %v806 = vld [vmem:[#allocation11 + $0x340] sm:$0xff]
        %v807 = vld [vmem:[#allocation11 + $0x348] sm:$0xff]
        %v808 = vld [vmem:[#allocation11 + $0x350] sm:$0xff]
        %v809 = vld [vmem:[#allocation11 + $0x358] sm:$0xff]
        %v810 = vld [vmem:[#allocation11 + $0x360] sm:$0xff]
        %v811 = vld [vmem:[#allocation11 + $0x368] sm:$0xff]
        %v812 = vld [vmem:[#allocation11 + $0x370] sm:$0xff]
        %v813 = vld [vmem:[#allocation11 + $0x378] sm:$0xff]
        %v814 = vld [vmem:[#allocation11 + $0x380] sm:$0xff]
        %v815 = vld [vmem:[#allocation11 + $0x388] sm:$0xff]
        %v816 = vld [vmem:[#allocation11 + $0x390] sm:$0xff]
        %v817 = vld [vmem:[#allocation11 + $0x398] sm:$0xff]
        %v818 = vld [vmem:[#allocation11 + $0x3a0] sm:$0xff]
        %v819 = vld [vmem:[#allocation11 + $0x3a8] sm:$0xff]
        %v820 = vld [vmem:[#allocation11 + $0x3b0] sm:$0xff]
        %v821 = vld [vmem:[#allocation11 + $0x3b8] sm:$0xff]
        %v822 = vld [vmem:[#allocation11 + $0x3c0] sm:$0xff]
        %v823 = vld [vmem:[#allocation11 + $0x3c8] sm:$0xff]
        %v824 = vld [vmem:[#allocation11 + $0x3d0] sm:$0xff]
        %v825 = vld [vmem:[#allocation11 + $0x3d8] sm:$0xff]
        %v826 = vld [vmem:[#allocation11 + $0x3e0] sm:$0xff]
        %v827 = vld [vmem:[#allocation11 + $0x3e8] sm:$0xff]
        %v828 = vld [vmem:[#allocation11 + $0x3f0] sm:$0xff]
        %v829 = vld [vmem:[#allocation11 + $0x3f8] sm:$0xff]
        %v830 = vld [vmem:[#allocation12] sm:$0xff]
        %v832 = vperm.slane %v830, 0
        %v833 = vperm.slane %v830, 1
        %v834 = vperm.slane %v830, 2
        %v835 = vperm.slane %v830, 3
        %v836 = vperm.slane %v830, 4
        %v837 = vperm.slane %v830, 5
        %v838 = vperm.slane %v830, 6
        %v839 = vperm.slane %v830, 7
        %848 = vmatpush.msra.mxu0 %v822
        %849 = vmatpush.msra.mxu0 %v814
        %850 = vmatpush.msra.mxu0 %v806
        %851 = vmatpush.msra.mxu0 %v798
        %852 = vmatpush.msra.mxu0 %v790
        %853 = vmatpush.msra.mxu0 %v782
        %854 = vmatpush.msra.mxu0 %v774
        %855 = vmatpush.msra.mxu0 %v766
        %856 = vmatpush.msra.mxu0 %v758
        %857 = vmatpush.msra.mxu0 %v750
        %858 = vmatpush.msra.mxu0 %v742
        %859 = vmatpush.msra.mxu0 %v734
        %860 = vmatpush.msra.mxu0 %v726
        %861 = vmatpush.msra.mxu0 %v718
        %862 = vmatpush.msra.mxu0 %v710
        %863 = vmatpush.msra.mxu0 %v702
        %864 = vmatmul.f32.gmra.mxu0 %v701
        %v865 = vpop.f32.mrf.mxu0
        %v866 = vadd.f32 %v832, %v865
        %867 = vdwg.mxu0
        %868 = vmatpush.msra.mxu0 %v823
        %869 = vmatpush.msra.mxu0 %v815
        %870 = vmatpush.msra.mxu0 %v807
        %871 = vmatpush.msra.mxu0 %v799
        %872 = vmatpush.msra.mxu0 %v791
        %873 = vmatpush.msra.mxu0 %v783
        %874 = vmatpush.msra.mxu0 %v775
        %875 = vmatpush.msra.mxu0 %v767
        %876 = vmatpush.msra.mxu0 %v759
        %877 = vmatpush.msra.mxu0 %v751
        %878 = vmatpush.msra.mxu0 %v743
        %879 = vmatpush.msra.mxu0 %v735
        %880 = vmatpush.msra.mxu0 %v727
        %881 = vmatpush.msra.mxu0 %v719
        %882 = vmatpush.msra.mxu0 %v711
        %883 = vmatpush.msra.mxu0 %v703
        %884 = vmatmul.f32.gmra.mxu0 %v701
        %v885 = vpop.f32.mrf.mxu0
        %v886 = vadd.f32 %v833, %v885
        %887 = vdwg.mxu0
        %888 = vmatpush.msra.mxu0 %v824
        %889 = vmatpush.msra.mxu0 %v816
        %890 = vmatpush.msra.mxu0 %v808
        %891 = vmatpush.msra.mxu0 %v800
        %892 = vmatpush.msra.mxu0 %v792
        %893 = vmatpush.msra.mxu0 %v784
        %894 = vmatpush.msra.mxu0 %v776
        %895 = vmatpush.msra.mxu0 %v768
        %896 = vmatpush.msra.mxu0 %v760
        %897 = vmatpush.msra.mxu0 %v752
        %898 = vmatpush.msra.mxu0 %v744
        %899 = vmatpush.msra.mxu0 %v736
        %900 = vmatpush.msra.mxu0 %v728
        %901 = vmatpush.msra.mxu0 %v720
        %902 = vmatpush.msra.mxu0 %v712
        %903 = vmatpush.msra.mxu0 %v704
        %904 = vmatmul.f32.gmra.mxu0 %v701
        %v905 = vpop.f32.mrf.mxu0
        %v906 = vadd.f32 %v834, %v905
        %907 = vdwg.mxu0
        %908 = vmatpush.msra.mxu0 %v825
        %909 = vmatpush.msra.mxu0 %v817
        %910 = vmatpush.msra.mxu0 %v809
        %911 = vmatpush.msra.mxu0 %v801
        %912 = vmatpush.msra.mxu0 %v793
        %913 = vmatpush.msra.mxu0 %v785
        %914 = vmatpush.msra.mxu0 %v777
        %915 = vmatpush.msra.mxu0 %v769
        %916 = vmatpush.msra.mxu0 %v761
        %917 = vmatpush.msra.mxu0 %v753
        %918 = vmatpush.msra.mxu0 %v745
        %919 = vmatpush.msra.mxu0 %v737
        %920 = vmatpush.msra.mxu0 %v729
        %921 = vmatpush.msra.mxu0 %v721
        %922 = vmatpush.msra.mxu0 %v713
        %923 = vmatpush.msra.mxu0 %v705
        %924 = vmatmul.f32.gmra.mxu0 %v701
        %v925 = vpop.f32.mrf.mxu0
        %v926 = vadd.f32 %v835, %v925
        %927 = vdwg.mxu0
        %928 = vmatpush.msra.mxu0 %v826
        %929 = vmatpush.msra.mxu0 %v818
        %930 = vmatpush.msra.mxu0 %v810
        %931 = vmatpush.msra.mxu0 %v802
        %932 = vmatpush.msra.mxu0 %v794
        %933 = vmatpush.msra.mxu0 %v786
        %934 = vmatpush.msra.mxu0 %v778
        %935 = vmatpush.msra.mxu0 %v770
        %936 = vmatpush.msra.mxu0 %v762
        %937 = vmatpush.msra.mxu0 %v754
        %938 = vmatpush.msra.mxu0 %v746
        %939 = vmatpush.msra.mxu0 %v738
        %940 = vmatpush.msra.mxu0 %v730
        %941 = vmatpush.msra.mxu0 %v722
        %942 = vmatpush.msra.mxu0 %v714
        %943 = vmatpush.msra.mxu0 %v706
        %944 = vmatmul.f32.gmra.mxu0 %v701
        %v945 = vpop.f32.mrf.mxu0
        %v946 = vadd.f32 %v836, %v945
        %947 = vdwg.mxu0
        %948 = vmatpush.msra.mxu0 %v827
        %949 = vmatpush.msra.mxu0 %v819
        %950 = vmatpush.msra.mxu0 %v811
        %951 = vmatpush.msra.mxu0 %v803
        %952 = vmatpush.msra.mxu0 %v795
        %953 = vmatpush.msra.mxu0 %v787
        %954 = vmatpush.msra.mxu0 %v779
        %955 = vmatpush.msra.mxu0 %v771
        %956 = vmatpush.msra.mxu0 %v763
        %957 = vmatpush.msra.mxu0 %v755
        %958 = vmatpush.msra.mxu0 %v747
        %959 = vmatpush.msra.mxu0 %v739
        %960 = vmatpush.msra.mxu0 %v731
        %961 = vmatpush.msra.mxu0 %v723
        %962 = vmatpush.msra.mxu0 %v715
        %963 = vmatpush.msra.mxu0 %v707
        %964 = vmatmul.f32.gmra.mxu0 %v701
        %v965 = vpop.f32.mrf.mxu0
        %v966 = vadd.f32 %v837, %v965
        %967 = vdwg.mxu0
        %968 = vmatpush.msra.mxu0 %v828
        %969 = vmatpush.msra.mxu0 %v820
        %970 = vmatpush.msra.mxu0 %v812
        %971 = vmatpush.msra.mxu0 %v804
        %972 = vmatpush.msra.mxu0 %v796
        %973 = vmatpush.msra.mxu0 %v788
        %974 = vmatpush.msra.mxu0 %v780
        %975 = vmatpush.msra.mxu0 %v772
        %976 = vmatpush.msra.mxu0 %v764
        %977 = vmatpush.msra.mxu0 %v756
        %978 = vmatpush.msra.mxu0 %v748
        %979 = vmatpush.msra.mxu0 %v740
        %980 = vmatpush.msra.mxu0 %v732
        %981 = vmatpush.msra.mxu0 %v724
        %982 = vmatpush.msra.mxu0 %v716
        %983 = vmatpush.msra.mxu0 %v708
        %984 = vmatmul.f32.gmra.mxu0 %v701
        %v985 = vpop.f32.mrf.mxu0
        %v986 = vadd.f32 %v838, %v985
        %987 = vdwg.mxu0
        %988 = vmatpush.msra.mxu0 %v829
        %989 = vmatpush.msra.mxu0 %v821
        %990 = vmatpush.msra.mxu0 %v813
        %991 = vmatpush.msra.mxu0 %v805
        %992 = vmatpush.msra.mxu0 %v797
        %993 = vmatpush.msra.mxu0 %v789
        %994 = vmatpush.msra.mxu0 %v781
        %995 = vmatpush.msra.mxu0 %v773
        %996 = vmatpush.msra.mxu0 %v765
        %997 = vmatpush.msra.mxu0 %v757
        %998 = vmatpush.msra.mxu0 %v749
        %999 = vmatpush.msra.mxu0 %v741
        %1000 = vmatpush.msra.mxu0 %v733
        %1001 = vmatpush.msra.mxu0 %v725
        %1002 = vmatpush.msra.mxu0 %v717
        %1003 = vmatpush.msra.mxu0 %v709
        %1004 = vmatmul.f32.gmra.mxu0 %v701
        %v1005 = vpop.f32.mrf.mxu0
        %v1006 = vadd.f32 %v839, %v1005
        %1007 = vdwg.mxu0
        %v1008 = vmax.f32 %v866, 0.0
        %v1009 = vmax.f32 %v886, 0.0
        %v1010 = vmax.f32 %v906, 0.0
        %v1011 = vmax.f32 %v926, 0.0
        %v1012 = vmax.f32 %v946, 0.0
        %v1013 = vmax.f32 %v966, 0.0
        %v1014 = vmax.f32 %v986, 0.0
        %v1015 = vmax.f32 %v1006, 0.0
        %v1016 = vld [vmem:[#allocation2] sm:$0xff]
        %v1017 = vrot.slane %v1008, 4
        %v1018 = vmax.f32 %v1008, %v1017
        %v1019 = vrot.slane %v1018, 2
        %v1020 = vmax.f32 %v1018, %v1019
        %v1021 = vrot.slane %v1020, 1
        %v1022 = vmax.f32 %v1020, %v1021
        %v1023 = vrot.slane %v1009, 4
        %v1024 = vmax.f32 %v1009, %v1023
        %v1025 = vrot.slane %v1024, 2
        %v1026 = vmax.f32 %v1024, %v1025
        %v1027 = vrot.slane %v1026, 1
        %v1028 = vmax.f32 %v1026, %v1027
        %v1029 = vrot.slane %v1010, 4
        %v1030 = vmax.f32 %v1010, %v1029
        %v1031 = vrot.slane %v1030, 2
        %v1032 = vmax.f32 %v1030, %v1031
        %v1033 = vrot.slane %v1032, 1
        %v1034 = vmax.f32 %v1032, %v1033
        %v1035 = vrot.slane %v1011, 4
        %v1036 = vmax.f32 %v1011, %v1035
        %v1037 = vrot.slane %v1036, 2
        %v1038 = vmax.f32 %v1036, %v1037
        %v1039 = vrot.slane %v1038, 1
        %v1040 = vmax.f32 %v1038, %v1039
        %v1041 = vrot.slane %v1012, 4
        %v1042 = vmax.f32 %v1012, %v1041
        %v1043 = vrot.slane %v1042, 2
        %v1044 = vmax.f32 %v1042, %v1043
        %v1045 = vrot.slane %v1044, 1
        %v1046 = vmax.f32 %v1044, %v1045
        %v1047 = vrot.slane %v1013, 4
        %v1048 = vmax.f32 %v1013, %v1047
        %v1049 = vrot.slane %v1048, 2
        %v1050 = vmax.f32 %v1048, %v1049
        %v1051 = vrot.slane %v1050, 1
        %v1052 = vmax.f32 %v1050, %v1051
        %v1053 = vrot.slane %v1014, 4
        %v1054 = vmax.f32 %v1014, %v1053
        %v1055 = vrot.slane %v1054, 2
        %v1056 = vmax.f32 %v1054, %v1055
        %v1057 = vrot.slane %v1056, 1
        %v1058 = vmax.f32 %v1056, %v1057
        %v1059 = vrot.slane %v1015, 4
        %v1060 = vmax.f32 %v1015, %v1059
        %v1061 = vrot.slane %v1060, 2
        %v1062 = vmax.f32 %v1060, %v1061
        %v1063 = vrot.slane %v1062, 1
        %v1064 = vmax.f32 %v1062, %v1063
        %v1073 = vrot.slane %v1028, 7
        %v1074 = vrot.slane %v1034, 6
        %v1075 = vrot.slane %v1040, 5
        %v1076 = vrot.slane %v1046, 4
        %v1077 = vrot.slane %v1052, 3
        %v1078 = vrot.slane %v1058, 2
        %v1079 = vrot.slane %v1064, 1
        %vm1080 = vcmask 1040384
        %v1081 = vsel %vm1080, %v1022, %v1073
        %vm1082 = vcmask 1042434
        %v1083 = vsel %vm1082, %v1074, %v1075
        %vm1084 = vcmask 1041408
        %v1085 = vsel %vm1084, %v1081, %v1083
        %vm1086 = vcmask 1044484
        %v1087 = vsel %vm1086, %v1076, %v1077
        %vm1088 = vcmask 1046534
        %v1089 = vsel %vm1088, %v1078, %v1079
        %vm1090 = vcmask 1045508
        %v1091 = vsel %vm1090, %v1087, %v1089
        %vm1092 = vcmask 1043456
        %v1093 = vsel %vm1092, %v1085, %v1091
        %v1095 = vmax.f32 %v1016, %v1093
        %1096 = vst [vmem:[#allocation2] sm:$0xff] %v1095
        %p1097 = scmp.eq.s32.totalorder %s38, 3
        // Predicated region
        $region121: #{tpu_custom_call.1} parent=71 // pred_check
          %p1098 = pneg %p1097
        $region122: #{tpu_custom_call.1} parent=71 // pred_check_branch
          %1100 = sbr.rel (%p1098) target = $region124
        $region123: #{tpu_custom_call.1} parent=71 // pred_region
          %v1101 = vld [vmem:[#allocation2] sm:$0xff]
          %v1102 = vld [vmem:[#allocation14] sm:$0xff]
          %v1103 = vld [vmem:[#allocation14 + $0x8] sm:$0xff]
          %v1104 = vld [vmem:[#allocation14 + $0x10] sm:$0xff]
          %v1105 = vld [vmem:[#allocation14 + $0x18] sm:$0xff]
          %v1106 = vld [vmem:[#allocation14 + $0x20] sm:$0xff]
          %v1107 = vld [vmem:[#allocation14 + $0x28] sm:$0xff]
          %v1108 = vld [vmem:[#allocation14 + $0x30] sm:$0xff]
          %v1109 = vld [vmem:[#allocation14 + $0x38] sm:$0xff]
          %v1110 = vld [vmem:[#allocation14 + $0x40] sm:$0xff]
          %v1111 = vld [vmem:[#allocation14 + $0x48] sm:$0xff]
          %v1112 = vld [vmem:[#allocation14 + $0x50] sm:$0xff]
          %v1113 = vld [vmem:[#allocation14 + $0x58] sm:$0xff]
          %v1114 = vld [vmem:[#allocation14 + $0x60] sm:$0xff]
          %v1115 = vld [vmem:[#allocation14 + $0x68] sm:$0xff]
          %v1116 = vld [vmem:[#allocation14 + $0x70] sm:$0xff]
          %v1117 = vld [vmem:[#allocation14 + $0x78] sm:$0xff]
          %v1118 = vld [vmem:[#allocation14 + $0x80] sm:$0xff]
          %v1119 = vld [vmem:[#allocation14 + $0x88] sm:$0xff]
          %v1120 = vld [vmem:[#allocation14 + $0x90] sm:$0xff]
          %v1121 = vld [vmem:[#allocation14 + $0x98] sm:$0xff]
          %v1122 = vld [vmem:[#allocation14 + $0xa0] sm:$0xff]
          %v1123 = vld [vmem:[#allocation14 + $0xa8] sm:$0xff]
          %v1124 = vld [vmem:[#allocation14 + $0xb0] sm:$0xff]
          %v1125 = vld [vmem:[#allocation14 + $0xb8] sm:$0xff]
          %v1126 = vld [vmem:[#allocation14 + $0xc0] sm:$0xff]
          %v1127 = vld [vmem:[#allocation14 + $0xc8] sm:$0xff]
          %v1128 = vld [vmem:[#allocation14 + $0xd0] sm:$0xff]
          %v1129 = vld [vmem:[#allocation14 + $0xd8] sm:$0xff]
          %v1130 = vld [vmem:[#allocation14 + $0xe0] sm:$0xff]
          %v1131 = vld [vmem:[#allocation14 + $0xe8] sm:$0xff]
          %v1132 = vld [vmem:[#allocation14 + $0xf0] sm:$0xff]
          %v1133 = vld [vmem:[#allocation14 + $0xf8] sm:$0xff]
          %v1134 = vld [vmem:[#allocation14 + $0x100] sm:$0xff]
          %v1135 = vld [vmem:[#allocation14 + $0x108] sm:$0xff]
          %v1136 = vld [vmem:[#allocation14 + $0x110] sm:$0xff]
          %v1137 = vld [vmem:[#allocation14 + $0x118] sm:$0xff]
          %v1138 = vld [vmem:[#allocation14 + $0x120] sm:$0xff]
          %v1139 = vld [vmem:[#allocation14 + $0x128] sm:$0xff]
          %v1140 = vld [vmem:[#allocation14 + $0x130] sm:$0xff]
          %v1141 = vld [vmem:[#allocation14 + $0x138] sm:$0xff]
          %v1142 = vld [vmem:[#allocation14 + $0x140] sm:$0xff]
          %v1143 = vld [vmem:[#allocation14 + $0x148] sm:$0xff]
          %v1144 = vld [vmem:[#allocation14 + $0x150] sm:$0xff]
          %v1145 = vld [vmem:[#allocation14 + $0x158] sm:$0xff]
          %v1146 = vld [vmem:[#allocation14 + $0x160] sm:$0xff]
          %v1147 = vld [vmem:[#allocation14 + $0x168] sm:$0xff]
          %v1148 = vld [vmem:[#allocation14 + $0x170] sm:$0xff]
          %v1149 = vld [vmem:[#allocation14 + $0x178] sm:$0xff]
          %v1150 = vld [vmem:[#allocation14 + $0x180] sm:$0xff]
          %v1151 = vld [vmem:[#allocation14 + $0x188] sm:$0xff]
          %v1152 = vld [vmem:[#allocation14 + $0x190] sm:$0xff]
          %v1153 = vld [vmem:[#allocation14 + $0x198] sm:$0xff]
          %v1154 = vld [vmem:[#allocation14 + $0x1a0] sm:$0xff]
          %v1155 = vld [vmem:[#allocation14 + $0x1a8] sm:$0xff]
          %v1156 = vld [vmem:[#allocation14 + $0x1b0] sm:$0xff]
          %v1157 = vld [vmem:[#allocation14 + $0x1b8] sm:$0xff]
          %v1158 = vld [vmem:[#allocation14 + $0x1c0] sm:$0xff]
          %v1159 = vld [vmem:[#allocation14 + $0x1c8] sm:$0xff]
          %v1160 = vld [vmem:[#allocation14 + $0x1d0] sm:$0xff]
          %v1161 = vld [vmem:[#allocation14 + $0x1d8] sm:$0xff]
          %v1162 = vld [vmem:[#allocation14 + $0x1e0] sm:$0xff]
          %v1163 = vld [vmem:[#allocation14 + $0x1e8] sm:$0xff]
          %v1164 = vld [vmem:[#allocation14 + $0x1f0] sm:$0xff]
          %v1165 = vld [vmem:[#allocation14 + $0x1f8] sm:$0xff]
          %v1166 = vld [vmem:[#allocation14 + $0x200] sm:$0xff]
          %v1167 = vld [vmem:[#allocation14 + $0x208] sm:$0xff]
          %v1168 = vld [vmem:[#allocation14 + $0x210] sm:$0xff]
          %v1169 = vld [vmem:[#allocation14 + $0x218] sm:$0xff]
          %v1170 = vld [vmem:[#allocation14 + $0x220] sm:$0xff]
          %v1171 = vld [vmem:[#allocation14 + $0x228] sm:$0xff]
          %v1172 = vld [vmem:[#allocation14 + $0x230] sm:$0xff]
          %v1173 = vld [vmem:[#allocation14 + $0x238] sm:$0xff]
          %v1174 = vld [vmem:[#allocation14 + $0x240] sm:$0xff]
          %v1175 = vld [vmem:[#allocation14 + $0x248] sm:$0xff]
          %v1176 = vld [vmem:[#allocation14 + $0x250] sm:$0xff]
          %v1177 = vld [vmem:[#allocation14 + $0x258] sm:$0xff]
          %v1178 = vld [vmem:[#allocation14 + $0x260] sm:$0xff]
          %v1179 = vld [vmem:[#allocation14 + $0x268] sm:$0xff]
          %v1180 = vld [vmem:[#allocation14 + $0x270] sm:$0xff]
          %v1181 = vld [vmem:[#allocation14 + $0x278] sm:$0xff]
          %v1182 = vld [vmem:[#allocation14 + $0x280] sm:$0xff]
          %v1183 = vld [vmem:[#allocation14 + $0x288] sm:$0xff]
          %v1184 = vld [vmem:[#allocation14 + $0x290] sm:$0xff]
          %v1185 = vld [vmem:[#allocation14 + $0x298] sm:$0xff]
          %v1186 = vld [vmem:[#allocation14 + $0x2a0] sm:$0xff]
          %v1187 = vld [vmem:[#allocation14 + $0x2a8] sm:$0xff]
          %v1188 = vld [vmem:[#allocation14 + $0x2b0] sm:$0xff]
          %v1189 = vld [vmem:[#allocation14 + $0x2b8] sm:$0xff]
          %v1190 = vld [vmem:[#allocation14 + $0x2c0] sm:$0xff]
          %v1191 = vld [vmem:[#allocation14 + $0x2c8] sm:$0xff]
          %v1192 = vld [vmem:[#allocation14 + $0x2d0] sm:$0xff]
          %v1193 = vld [vmem:[#allocation14 + $0x2d8] sm:$0xff]
          %v1194 = vld [vmem:[#allocation14 + $0x2e0] sm:$0xff]
          %v1195 = vld [vmem:[#allocation14 + $0x2e8] sm:$0xff]
          %v1196 = vld [vmem:[#allocation14 + $0x2f0] sm:$0xff]
          %v1197 = vld [vmem:[#allocation14 + $0x2f8] sm:$0xff]
          %v1198 = vld [vmem:[#allocation14 + $0x300] sm:$0xff]
          %v1199 = vld [vmem:[#allocation14 + $0x308] sm:$0xff]
          %v1200 = vld [vmem:[#allocation14 + $0x310] sm:$0xff]
          %v1201 = vld [vmem:[#allocation14 + $0x318] sm:$0xff]
          %v1202 = vld [vmem:[#allocation14 + $0x320] sm:$0xff]
          %v1203 = vld [vmem:[#allocation14 + $0x328] sm:$0xff]
          %v1204 = vld [vmem:[#allocation14 + $0x330] sm:$0xff]
          %v1205 = vld [vmem:[#allocation14 + $0x338] sm:$0xff]
          %v1206 = vld [vmem:[#allocation14 + $0x340] sm:$0xff]
          %v1207 = vld [vmem:[#allocation14 + $0x348] sm:$0xff]
          %v1208 = vld [vmem:[#allocation14 + $0x350] sm:$0xff]
          %v1209 = vld [vmem:[#allocation14 + $0x358] sm:$0xff]
          %v1210 = vld [vmem:[#allocation14 + $0x360] sm:$0xff]
          %v1211 = vld [vmem:[#allocation14 + $0x368] sm:$0xff]
          %v1212 = vld [vmem:[#allocation14 + $0x370] sm:$0xff]
          %v1213 = vld [vmem:[#allocation14 + $0x378] sm:$0xff]
          %v1214 = vld [vmem:[#allocation14 + $0x380] sm:$0xff]
          %v1215 = vld [vmem:[#allocation14 + $0x388] sm:$0xff]
          %v1216 = vld [vmem:[#allocation14 + $0x390] sm:$0xff]
          %v1217 = vld [vmem:[#allocation14 + $0x398] sm:$0xff]
          %v1218 = vld [vmem:[#allocation14 + $0x3a0] sm:$0xff]
          %v1219 = vld [vmem:[#allocation14 + $0x3a8] sm:$0xff]
          %v1220 = vld [vmem:[#allocation14 + $0x3b0] sm:$0xff]
          %v1221 = vld [vmem:[#allocation14 + $0x3b8] sm:$0xff]
          %v1222 = vld [vmem:[#allocation14 + $0x3c0] sm:$0xff]
          %v1223 = vld [vmem:[#allocation14 + $0x3c8] sm:$0xff]
          %v1224 = vld [vmem:[#allocation14 + $0x3d0] sm:$0xff]
          %v1225 = vld [vmem:[#allocation14 + $0x3d8] sm:$0xff]
          %v1226 = vld [vmem:[#allocation14 + $0x3e0] sm:$0xff]
          %v1227 = vld [vmem:[#allocation14 + $0x3e8] sm:$0xff]
          %v1228 = vld [vmem:[#allocation14 + $0x3f0] sm:$0xff]
          %v1229 = vld [vmem:[#allocation14 + $0x3f8] sm:$0xff]
          %v1230 = vld [vmem:[#allocation14 + $0x400] sm:$0xff]
          %v1231 = vld [vmem:[#allocation14 + $0x408] sm:$0xff]
          %v1232 = vld [vmem:[#allocation14 + $0x410] sm:$0xff]
          %v1233 = vld [vmem:[#allocation14 + $0x418] sm:$0xff]
          %v1234 = vld [vmem:[#allocation14 + $0x420] sm:$0xff]
          %v1235 = vld [vmem:[#allocation14 + $0x428] sm:$0xff]
          %v1236 = vld [vmem:[#allocation14 + $0x430] sm:$0xff]
          %v1237 = vld [vmem:[#allocation14 + $0x438] sm:$0xff]
          %v1238 = vld [vmem:[#allocation14 + $0x440] sm:$0xff]
          %v1239 = vld [vmem:[#allocation14 + $0x448] sm:$0xff]
          %v1240 = vld [vmem:[#allocation14 + $0x450] sm:$0xff]
          %v1241 = vld [vmem:[#allocation14 + $0x458] sm:$0xff]
          %v1242 = vld [vmem:[#allocation14 + $0x460] sm:$0xff]
          %v1243 = vld [vmem:[#allocation14 + $0x468] sm:$0xff]
          %v1244 = vld [vmem:[#allocation14 + $0x470] sm:$0xff]
          %v1245 = vld [vmem:[#allocation14 + $0x478] sm:$0xff]
          %v1246 = vld [vmem:[#allocation14 + $0x480] sm:$0xff]
          %v1247 = vld [vmem:[#allocation14 + $0x488] sm:$0xff]
          %v1248 = vld [vmem:[#allocation14 + $0x490] sm:$0xff]
          %v1249 = vld [vmem:[#allocation14 + $0x498] sm:$0xff]
          %v1250 = vld [vmem:[#allocation14 + $0x4a0] sm:$0xff]
          %v1251 = vld [vmem:[#allocation14 + $0x4a8] sm:$0xff]
          %v1252 = vld [vmem:[#allocation14 + $0x4b0] sm:$0xff]
          %v1253 = vld [vmem:[#allocation14 + $0x4b8] sm:$0xff]
          %v1254 = vld [vmem:[#allocation14 + $0x4c0] sm:$0xff]
          %v1255 = vld [vmem:[#allocation14 + $0x4c8] sm:$0xff]
          %v1256 = vld [vmem:[#allocation14 + $0x4d0] sm:$0xff]
          %v1257 = vld [vmem:[#allocation14 + $0x4d8] sm:$0xff]
          %v1258 = vld [vmem:[#allocation14 + $0x4e0] sm:$0xff]
          %v1259 = vld [vmem:[#allocation14 + $0x4e8] sm:$0xff]
          %v1260 = vld [vmem:[#allocation14 + $0x4f0] sm:$0xff]
          %v1261 = vld [vmem:[#allocation14 + $0x4f8] sm:$0xff]
          %v1262 = vld [vmem:[#allocation14 + $0x500] sm:$0xff]
          %v1263 = vld [vmem:[#allocation14 + $0x508] sm:$0xff]
          %v1264 = vld [vmem:[#allocation14 + $0x510] sm:$0xff]
          %v1265 = vld [vmem:[#allocation14 + $0x518] sm:$0xff]
          %v1266 = vld [vmem:[#allocation14 + $0x520] sm:$0xff]
          %v1267 = vld [vmem:[#allocation14 + $0x528] sm:$0xff]
          %v1268 = vld [vmem:[#allocation14 + $0x530] sm:$0xff]
          %v1269 = vld [vmem:[#allocation14 + $0x538] sm:$0xff]
          %v1270 = vld [vmem:[#allocation14 + $0x540] sm:$0xff]
          %v1271 = vld [vmem:[#allocation14 + $0x548] sm:$0xff]
          %v1272 = vld [vmem:[#allocation14 + $0x550] sm:$0xff]
          %v1273 = vld [vmem:[#allocation14 + $0x558] sm:$0xff]
          %v1274 = vld [vmem:[#allocation14 + $0x560] sm:$0xff]
          %v1275 = vld [vmem:[#allocation14 + $0x568] sm:$0xff]
          %v1276 = vld [vmem:[#allocation14 + $0x570] sm:$0xff]
          %v1277 = vld [vmem:[#allocation14 + $0x578] sm:$0xff]
          %v1278 = vld [vmem:[#allocation14 + $0x580] sm:$0xff]
          %v1279 = vld [vmem:[#allocation14 + $0x588] sm:$0xff]
          %v1280 = vld [vmem:[#allocation14 + $0x590] sm:$0xff]
          %v1281 = vld [vmem:[#allocation14 + $0x598] sm:$0xff]
          %v1282 = vld [vmem:[#allocation14 + $0x5a0] sm:$0xff]
          %v1283 = vld [vmem:[#allocation14 + $0x5a8] sm:$0xff]
          %v1284 = vld [vmem:[#allocation14 + $0x5b0] sm:$0xff]
          %v1285 = vld [vmem:[#allocation14 + $0x5b8] sm:$0xff]
          %v1286 = vld [vmem:[#allocation14 + $0x5c0] sm:$0xff]
          %v1287 = vld [vmem:[#allocation14 + $0x5c8] sm:$0xff]
          %v1288 = vld [vmem:[#allocation14 + $0x5d0] sm:$0xff]
          %v1289 = vld [vmem:[#allocation14 + $0x5d8] sm:$0xff]
          %v1290 = vld [vmem:[#allocation14 + $0x5e0] sm:$0xff]
          %v1291 = vld [vmem:[#allocation14 + $0x5e8] sm:$0xff]
          %v1292 = vld [vmem:[#allocation14 + $0x5f0] sm:$0xff]
          %v1293 = vld [vmem:[#allocation14 + $0x5f8] sm:$0xff]
          %v1294 = vld [vmem:[#allocation14 + $0x600] sm:$0xff]
          %v1295 = vld [vmem:[#allocation14 + $0x608] sm:$0xff]
          %v1296 = vld [vmem:[#allocation14 + $0x610] sm:$0xff]
          %v1297 = vld [vmem:[#allocation14 + $0x618] sm:$0xff]
          %v1298 = vld [vmem:[#allocation14 + $0x620] sm:$0xff]
          %v1299 = vld [vmem:[#allocation14 + $0x628] sm:$0xff]
          %v1300 = vld [vmem:[#allocation14 + $0x630] sm:$0xff]
          %v1301 = vld [vmem:[#allocation14 + $0x638] sm:$0xff]
          %v1302 = vld [vmem:[#allocation14 + $0x640] sm:$0xff]
          %v1303 = vld [vmem:[#allocation14 + $0x648] sm:$0xff]
          %v1304 = vld [vmem:[#allocation14 + $0x650] sm:$0xff]
          %v1305 = vld [vmem:[#allocation14 + $0x658] sm:$0xff]
          %v1306 = vld [vmem:[#allocation14 + $0x660] sm:$0xff]
          %v1307 = vld [vmem:[#allocation14 + $0x668] sm:$0xff]
          %v1308 = vld [vmem:[#allocation14 + $0x670] sm:$0xff]
          %v1309 = vld [vmem:[#allocation14 + $0x678] sm:$0xff]
          %v1310 = vld [vmem:[#allocation14 + $0x680] sm:$0xff]
          %v1311 = vld [vmem:[#allocation14 + $0x688] sm:$0xff]
          %v1312 = vld [vmem:[#allocation14 + $0x690] sm:$0xff]
          %v1313 = vld [vmem:[#allocation14 + $0x698] sm:$0xff]
          %v1314 = vld [vmem:[#allocation14 + $0x6a0] sm:$0xff]
          %v1315 = vld [vmem:[#allocation14 + $0x6a8] sm:$0xff]
          %v1316 = vld [vmem:[#allocation14 + $0x6b0] sm:$0xff]
          %v1317 = vld [vmem:[#allocation14 + $0x6b8] sm:$0xff]
          %v1318 = vld [vmem:[#allocation14 + $0x6c0] sm:$0xff]
          %v1319 = vld [vmem:[#allocation14 + $0x6c8] sm:$0xff]
          %v1320 = vld [vmem:[#allocation14 + $0x6d0] sm:$0xff]
          %v1321 = vld [vmem:[#allocation14 + $0x6d8] sm:$0xff]
          %v1322 = vld [vmem:[#allocation14 + $0x6e0] sm:$0xff]
          %v1323 = vld [vmem:[#allocation14 + $0x6e8] sm:$0xff]
          %v1324 = vld [vmem:[#allocation14 + $0x6f0] sm:$0xff]
          %v1325 = vld [vmem:[#allocation14 + $0x6f8] sm:$0xff]
          %v1326 = vld [vmem:[#allocation14 + $0x700] sm:$0xff]
          %v1327 = vld [vmem:[#allocation14 + $0x708] sm:$0xff]
          %v1328 = vld [vmem:[#allocation14 + $0x710] sm:$0xff]
          %v1329 = vld [vmem:[#allocation14 + $0x718] sm:$0xff]
          %v1330 = vld [vmem:[#allocation14 + $0x720] sm:$0xff]
          %v1331 = vld [vmem:[#allocation14 + $0x728] sm:$0xff]
          %v1332 = vld [vmem:[#allocation14 + $0x730] sm:$0xff]
          %v1333 = vld [vmem:[#allocation14 + $0x738] sm:$0xff]
          %v1334 = vld [vmem:[#allocation14 + $0x740] sm:$0xff]
          %v1335 = vld [vmem:[#allocation14 + $0x748] sm:$0xff]
          %v1336 = vld [vmem:[#allocation14 + $0x750] sm:$0xff]
          %v1337 = vld [vmem:[#allocation14 + $0x758] sm:$0xff]
          %v1338 = vld [vmem:[#allocation14 + $0x760] sm:$0xff]
          %v1339 = vld [vmem:[#allocation14 + $0x768] sm:$0xff]
          %v1340 = vld [vmem:[#allocation14 + $0x770] sm:$0xff]
          %v1341 = vld [vmem:[#allocation14 + $0x778] sm:$0xff]
          %v1342 = vld [vmem:[#allocation14 + $0x780] sm:$0xff]
          %v1343 = vld [vmem:[#allocation14 + $0x788] sm:$0xff]
          %v1344 = vld [vmem:[#allocation14 + $0x790] sm:$0xff]
          %v1345 = vld [vmem:[#allocation14 + $0x798] sm:$0xff]
          %v1346 = vld [vmem:[#allocation14 + $0x7a0] sm:$0xff]
          %v1347 = vld [vmem:[#allocation14 + $0x7a8] sm:$0xff]
          %v1348 = vld [vmem:[#allocation14 + $0x7b0] sm:$0xff]
          %v1349 = vld [vmem:[#allocation14 + $0x7b8] sm:$0xff]
          %v1350 = vld [vmem:[#allocation14 + $0x7c0] sm:$0xff]
          %v1351 = vld [vmem:[#allocation14 + $0x7c8] sm:$0xff]
          %v1352 = vld [vmem:[#allocation14 + $0x7d0] sm:$0xff]
          %v1353 = vld [vmem:[#allocation14 + $0x7d8] sm:$0xff]
          %v1354 = vld [vmem:[#allocation14 + $0x7e0] sm:$0xff]
          %v1355 = vld [vmem:[#allocation14 + $0x7e8] sm:$0xff]
          %v1356 = vld [vmem:[#allocation14 + $0x7f0] sm:$0xff]
          %v1357 = vld [vmem:[#allocation14 + $0x7f8] sm:$0xff]
          %v1358 = vld [vmem:[#allocation14 + $0x800] sm:$0xff]
          %v1359 = vld [vmem:[#allocation14 + $0x808] sm:$0xff]
          %v1360 = vld [vmem:[#allocation14 + $0x810] sm:$0xff]
          %v1361 = vld [vmem:[#allocation14 + $0x818] sm:$0xff]
          %v1362 = vld [vmem:[#allocation14 + $0x820] sm:$0xff]
          %v1363 = vld [vmem:[#allocation14 + $0x828] sm:$0xff]
          %v1364 = vld [vmem:[#allocation14 + $0x830] sm:$0xff]
          %v1365 = vld [vmem:[#allocation14 + $0x838] sm:$0xff]
          %v1366 = vld [vmem:[#allocation14 + $0x840] sm:$0xff]
          %v1367 = vld [vmem:[#allocation14 + $0x848] sm:$0xff]
          %v1368 = vld [vmem:[#allocation14 + $0x850] sm:$0xff]
          %v1369 = vld [vmem:[#allocation14 + $0x858] sm:$0xff]
          %v1370 = vld [vmem:[#allocation14 + $0x860] sm:$0xff]
          %v1371 = vld [vmem:[#allocation14 + $0x868] sm:$0xff]
          %v1372 = vld [vmem:[#allocation14 + $0x870] sm:$0xff]
          %v1373 = vld [vmem:[#allocation14 + $0x878] sm:$0xff]
          %v1374 = vld [vmem:[#allocation14 + $0x880] sm:$0xff]
          %v1375 = vld [vmem:[#allocation14 + $0x888] sm:$0xff]
          %v1376 = vld [vmem:[#allocation14 + $0x890] sm:$0xff]
          %v1377 = vld [vmem:[#allocation14 + $0x898] sm:$0xff]
          %v1378 = vld [vmem:[#allocation14 + $0x8a0] sm:$0xff]
          %v1379 = vld [vmem:[#allocation14 + $0x8a8] sm:$0xff]
          %v1380 = vld [vmem:[#allocation14 + $0x8b0] sm:$0xff]
          %v1381 = vld [vmem:[#allocation14 + $0x8b8] sm:$0xff]
          %v1382 = vld [vmem:[#allocation14 + $0x8c0] sm:$0xff]
          %v1383 = vld [vmem:[#allocation14 + $0x8c8] sm:$0xff]
          %v1384 = vld [vmem:[#allocation14 + $0x8d0] sm:$0xff]
          %v1385 = vld [vmem:[#allocation14 + $0x8d8] sm:$0xff]
          %v1386 = vld [vmem:[#allocation14 + $0x8e0] sm:$0xff]
          %v1387 = vld [vmem:[#allocation14 + $0x8e8] sm:$0xff]
          %v1388 = vld [vmem:[#allocation14 + $0x8f0] sm:$0xff]
          %v1389 = vld [vmem:[#allocation14 + $0x8f8] sm:$0xff]
          %v1390 = vld [vmem:[#allocation14 + $0x900] sm:$0xff]
          %v1391 = vld [vmem:[#allocation14 + $0x908] sm:$0xff]
          %v1392 = vld [vmem:[#allocation14 + $0x910] sm:$0xff]
          %v1393 = vld [vmem:[#allocation14 + $0x918] sm:$0xff]
          %v1394 = vld [vmem:[#allocation14 + $0x920] sm:$0xff]
          %v1395 = vld [vmem:[#allocation14 + $0x928] sm:$0xff]
          %v1396 = vld [vmem:[#allocation14 + $0x930] sm:$0xff]
          %v1397 = vld [vmem:[#allocation14 + $0x938] sm:$0xff]
          %v1398 = vld [vmem:[#allocation14 + $0x940] sm:$0xff]
          %v1399 = vld [vmem:[#allocation14 + $0x948] sm:$0xff]
          %v1400 = vld [vmem:[#allocation14 + $0x950] sm:$0xff]
          %v1401 = vld [vmem:[#allocation14 + $0x958] sm:$0xff]
          %v1402 = vld [vmem:[#allocation14 + $0x960] sm:$0xff]
          %v1403 = vld [vmem:[#allocation14 + $0x968] sm:$0xff]
          %v1404 = vld [vmem:[#allocation14 + $0x970] sm:$0xff]
          %v1405 = vld [vmem:[#allocation14 + $0x978] sm:$0xff]
          %v1406 = vld [vmem:[#allocation14 + $0x980] sm:$0xff]
          %v1407 = vld [vmem:[#allocation14 + $0x988] sm:$0xff]
          %v1408 = vld [vmem:[#allocation14 + $0x990] sm:$0xff]
          %v1409 = vld [vmem:[#allocation14 + $0x998] sm:$0xff]
          %v1410 = vld [vmem:[#allocation14 + $0x9a0] sm:$0xff]
          %v1411 = vld [vmem:[#allocation14 + $0x9a8] sm:$0xff]
          %v1412 = vld [vmem:[#allocation14 + $0x9b0] sm:$0xff]
          %v1413 = vld [vmem:[#allocation14 + $0x9b8] sm:$0xff]
          %v1414 = vld [vmem:[#allocation14 + $0x9c0] sm:$0xff]
          %v1415 = vld [vmem:[#allocation14 + $0x9c8] sm:$0xff]
          %v1416 = vld [vmem:[#allocation14 + $0x9d0] sm:$0xff]
          %v1417 = vld [vmem:[#allocation14 + $0x9d8] sm:$0xff]
          %v1418 = vld [vmem:[#allocation14 + $0x9e0] sm:$0xff]
          %v1419 = vld [vmem:[#allocation14 + $0x9e8] sm:$0xff]
          %v1420 = vld [vmem:[#allocation14 + $0x9f0] sm:$0xff]
          %v1421 = vld [vmem:[#allocation14 + $0x9f8] sm:$0xff]
          %v1422 = vld [vmem:[#allocation14 + $0xa00] sm:$0xff]
          %v1423 = vld [vmem:[#allocation14 + $0xa08] sm:$0xff]
          %v1424 = vld [vmem:[#allocation14 + $0xa10] sm:$0xff]
          %v1425 = vld [vmem:[#allocation14 + $0xa18] sm:$0xff]
          %v1426 = vld [vmem:[#allocation14 + $0xa20] sm:$0xff]
          %v1427 = vld [vmem:[#allocation14 + $0xa28] sm:$0xff]
          %v1428 = vld [vmem:[#allocation14 + $0xa30] sm:$0xff]
          %v1429 = vld [vmem:[#allocation14 + $0xa38] sm:$0xff]
          %v1430 = vld [vmem:[#allocation14 + $0xa40] sm:$0xff]
          %v1431 = vld [vmem:[#allocation14 + $0xa48] sm:$0xff]
          %v1432 = vld [vmem:[#allocation14 + $0xa50] sm:$0xff]
          %v1433 = vld [vmem:[#allocation14 + $0xa58] sm:$0xff]
          %v1434 = vld [vmem:[#allocation14 + $0xa60] sm:$0xff]
          %v1435 = vld [vmem:[#allocation14 + $0xa68] sm:$0xff]
          %v1436 = vld [vmem:[#allocation14 + $0xa70] sm:$0xff]
          %v1437 = vld [vmem:[#allocation14 + $0xa78] sm:$0xff]
          %v1438 = vld [vmem:[#allocation14 + $0xa80] sm:$0xff]
          %v1439 = vld [vmem:[#allocation14 + $0xa88] sm:$0xff]
          %v1440 = vld [vmem:[#allocation14 + $0xa90] sm:$0xff]
          %v1441 = vld [vmem:[#allocation14 + $0xa98] sm:$0xff]
          %v1442 = vld [vmem:[#allocation14 + $0xaa0] sm:$0xff]
          %v1443 = vld [vmem:[#allocation14 + $0xaa8] sm:$0xff]
          %v1444 = vld [vmem:[#allocation14 + $0xab0] sm:$0xff]
          %v1445 = vld [vmem:[#allocation14 + $0xab8] sm:$0xff]
          %v1446 = vld [vmem:[#allocation14 + $0xac0] sm:$0xff]
          %v1447 = vld [vmem:[#allocation14 + $0xac8] sm:$0xff]
          %v1448 = vld [vmem:[#allocation14 + $0xad0] sm:$0xff]
          %v1449 = vld [vmem:[#allocation14 + $0xad8] sm:$0xff]
          %v1450 = vld [vmem:[#allocation14 + $0xae0] sm:$0xff]
          %v1451 = vld [vmem:[#allocation14 + $0xae8] sm:$0xff]
          %v1452 = vld [vmem:[#allocation14 + $0xaf0] sm:$0xff]
          %v1453 = vld [vmem:[#allocation14 + $0xaf8] sm:$0xff]
          %v1454 = vld [vmem:[#allocation14 + $0xb00] sm:$0xff]
          %v1455 = vld [vmem:[#allocation14 + $0xb08] sm:$0xff]
          %v1456 = vld [vmem:[#allocation14 + $0xb10] sm:$0xff]
          %v1457 = vld [vmem:[#allocation14 + $0xb18] sm:$0xff]
          %v1458 = vld [vmem:[#allocation14 + $0xb20] sm:$0xff]
          %v1459 = vld [vmem:[#allocation14 + $0xb28] sm:$0xff]
          %v1460 = vld [vmem:[#allocation14 + $0xb30] sm:$0xff]
          %v1461 = vld [vmem:[#allocation14 + $0xb38] sm:$0xff]
          %v1462 = vld [vmem:[#allocation14 + $0xb40] sm:$0xff]
          %v1463 = vld [vmem:[#allocation14 + $0xb48] sm:$0xff]
          %v1464 = vld [vmem:[#allocation14 + $0xb50] sm:$0xff]
          %v1465 = vld [vmem:[#allocation14 + $0xb58] sm:$0xff]
          %v1466 = vld [vmem:[#allocation14 + $0xb60] sm:$0xff]
          %v1467 = vld [vmem:[#allocation14 + $0xb68] sm:$0xff]
          %v1468 = vld [vmem:[#allocation14 + $0xb70] sm:$0xff]
          %v1469 = vld [vmem:[#allocation14 + $0xb78] sm:$0xff]
          %v1470 = vld [vmem:[#allocation14 + $0xb80] sm:$0xff]
          %v1471 = vld [vmem:[#allocation14 + $0xb88] sm:$0xff]
          %v1472 = vld [vmem:[#allocation14 + $0xb90] sm:$0xff]
          %v1473 = vld [vmem:[#allocation14 + $0xb98] sm:$0xff]
          %v1474 = vld [vmem:[#allocation14 + $0xba0] sm:$0xff]
          %v1475 = vld [vmem:[#allocation14 + $0xba8] sm:$0xff]
          %v1476 = vld [vmem:[#allocation14 + $0xbb0] sm:$0xff]
          %v1477 = vld [vmem:[#allocation14 + $0xbb8] sm:$0xff]
          %v1478 = vld [vmem:[#allocation14 + $0xbc0] sm:$0xff]
          %v1479 = vld [vmem:[#allocation14 + $0xbc8] sm:$0xff]
          %v1480 = vld [vmem:[#allocation14 + $0xbd0] sm:$0xff]
          %v1481 = vld [vmem:[#allocation14 + $0xbd8] sm:$0xff]
          %v1482 = vld [vmem:[#allocation14 + $0xbe0] sm:$0xff]
          %v1483 = vld [vmem:[#allocation14 + $0xbe8] sm:$0xff]
          %v1484 = vld [vmem:[#allocation14 + $0xbf0] sm:$0xff]
          %v1485 = vld [vmem:[#allocation14 + $0xbf8] sm:$0xff]
          %v1486 = vld [vmem:[#allocation14 + $0xc00] sm:$0xff]
          %v1487 = vld [vmem:[#allocation14 + $0xc08] sm:$0xff]
          %v1488 = vld [vmem:[#allocation14 + $0xc10] sm:$0xff]
          %v1489 = vld [vmem:[#allocation14 + $0xc18] sm:$0xff]
          %v1490 = vld [vmem:[#allocation14 + $0xc20] sm:$0xff]
          %v1491 = vld [vmem:[#allocation14 + $0xc28] sm:$0xff]
          %v1492 = vld [vmem:[#allocation14 + $0xc30] sm:$0xff]
          %v1493 = vld [vmem:[#allocation14 + $0xc38] sm:$0xff]
          %v1494 = vld [vmem:[#allocation14 + $0xc40] sm:$0xff]
          %v1495 = vld [vmem:[#allocation14 + $0xc48] sm:$0xff]
          %v1496 = vld [vmem:[#allocation14 + $0xc50] sm:$0xff]
          %v1497 = vld [vmem:[#allocation14 + $0xc58] sm:$0xff]
          %v1498 = vld [vmem:[#allocation14 + $0xc60] sm:$0xff]
          %v1499 = vld [vmem:[#allocation14 + $0xc68] sm:$0xff]
          %v1500 = vld [vmem:[#allocation14 + $0xc70] sm:$0xff]
          %v1501 = vld [vmem:[#allocation14 + $0xc78] sm:$0xff]
          %v1502 = vld [vmem:[#allocation14 + $0xc80] sm:$0xff]
          %v1503 = vld [vmem:[#allocation14 + $0xc88] sm:$0xff]
          %v1504 = vld [vmem:[#allocation14 + $0xc90] sm:$0xff]
          %v1505 = vld [vmem:[#allocation14 + $0xc98] sm:$0xff]
          %v1506 = vld [vmem:[#allocation14 + $0xca0] sm:$0xff]
          %v1507 = vld [vmem:[#allocation14 + $0xca8] sm:$0xff]
          %v1508 = vld [vmem:[#allocation14 + $0xcb0] sm:$0xff]
          %v1509 = vld [vmem:[#allocation14 + $0xcb8] sm:$0xff]
          %v1510 = vld [vmem:[#allocation14 + $0xcc0] sm:$0xff]
          %v1511 = vld [vmem:[#allocation14 + $0xcc8] sm:$0xff]
          %v1512 = vld [vmem:[#allocation14 + $0xcd0] sm:$0xff]
          %v1513 = vld [vmem:[#allocation14 + $0xcd8] sm:$0xff]
          %v1514 = vld [vmem:[#allocation14 + $0xce0] sm:$0xff]
          %v1515 = vld [vmem:[#allocation14 + $0xce8] sm:$0xff]
          %v1516 = vld [vmem:[#allocation14 + $0xcf0] sm:$0xff]
          %v1517 = vld [vmem:[#allocation14 + $0xcf8] sm:$0xff]
          %v1518 = vld [vmem:[#allocation14 + $0xd00] sm:$0xff]
          %v1519 = vld [vmem:[#allocation14 + $0xd08] sm:$0xff]
          %v1520 = vld [vmem:[#allocation14 + $0xd10] sm:$0xff]
          %v1521 = vld [vmem:[#allocation14 + $0xd18] sm:$0xff]
          %v1522 = vld [vmem:[#allocation14 + $0xd20] sm:$0xff]
          %v1523 = vld [vmem:[#allocation14 + $0xd28] sm:$0xff]
          %v1524 = vld [vmem:[#allocation14 + $0xd30] sm:$0xff]
          %v1525 = vld [vmem:[#allocation14 + $0xd38] sm:$0xff]
          %v1526 = vld [vmem:[#allocation14 + $0xd40] sm:$0xff]
          %v1527 = vld [vmem:[#allocation14 + $0xd48] sm:$0xff]
          %v1528 = vld [vmem:[#allocation14 + $0xd50] sm:$0xff]
          %v1529 = vld [vmem:[#allocation14 + $0xd58] sm:$0xff]
          %v1530 = vld [vmem:[#allocation14 + $0xd60] sm:$0xff]
          %v1531 = vld [vmem:[#allocation14 + $0xd68] sm:$0xff]
          %v1532 = vld [vmem:[#allocation14 + $0xd70] sm:$0xff]
          %v1533 = vld [vmem:[#allocation14 + $0xd78] sm:$0xff]
          %v1534 = vld [vmem:[#allocation14 + $0xd80] sm:$0xff]
          %v1535 = vld [vmem:[#allocation14 + $0xd88] sm:$0xff]
          %v1536 = vld [vmem:[#allocation14 + $0xd90] sm:$0xff]
          %v1537 = vld [vmem:[#allocation14 + $0xd98] sm:$0xff]
          %v1538 = vld [vmem:[#allocation14 + $0xda0] sm:$0xff]
          %v1539 = vld [vmem:[#allocation14 + $0xda8] sm:$0xff]
          %v1540 = vld [vmem:[#allocation14 + $0xdb0] sm:$0xff]
          %v1541 = vld [vmem:[#allocation14 + $0xdb8] sm:$0xff]
          %v1542 = vld [vmem:[#allocation14 + $0xdc0] sm:$0xff]
          %v1543 = vld [vmem:[#allocation14 + $0xdc8] sm:$0xff]
          %v1544 = vld [vmem:[#allocation14 + $0xdd0] sm:$0xff]
          %v1545 = vld [vmem:[#allocation14 + $0xdd8] sm:$0xff]
          %v1546 = vld [vmem:[#allocation14 + $0xde0] sm:$0xff]
          %v1547 = vld [vmem:[#allocation14 + $0xde8] sm:$0xff]
          %v1548 = vld [vmem:[#allocation14 + $0xdf0] sm:$0xff]
          %v1549 = vld [vmem:[#allocation14 + $0xdf8] sm:$0xff]
          %v1550 = vld [vmem:[#allocation14 + $0xe00] sm:$0xff]
          %v1551 = vld [vmem:[#allocation14 + $0xe08] sm:$0xff]
          %v1552 = vld [vmem:[#allocation14 + $0xe10] sm:$0xff]
          %v1553 = vld [vmem:[#allocation14 + $0xe18] sm:$0xff]
          %v1554 = vld [vmem:[#allocation14 + $0xe20] sm:$0xff]
          %v1555 = vld [vmem:[#allocation14 + $0xe28] sm:$0xff]
          %v1556 = vld [vmem:[#allocation14 + $0xe30] sm:$0xff]
          %v1557 = vld [vmem:[#allocation14 + $0xe38] sm:$0xff]
          %v1558 = vld [vmem:[#allocation14 + $0xe40] sm:$0xff]
          %v1559 = vld [vmem:[#allocation14 + $0xe48] sm:$0xff]
          %v1560 = vld [vmem:[#allocation14 + $0xe50] sm:$0xff]
          %v1561 = vld [vmem:[#allocation14 + $0xe58] sm:$0xff]
          %v1562 = vld [vmem:[#allocation14 + $0xe60] sm:$0xff]
          %v1563 = vld [vmem:[#allocation14 + $0xe68] sm:$0xff]
          %v1564 = vld [vmem:[#allocation14 + $0xe70] sm:$0xff]
          %v1565 = vld [vmem:[#allocation14 + $0xe78] sm:$0xff]
          %v1566 = vld [vmem:[#allocation14 + $0xe80] sm:$0xff]
          %v1567 = vld [vmem:[#allocation14 + $0xe88] sm:$0xff]
          %v1568 = vld [vmem:[#allocation14 + $0xe90] sm:$0xff]
          %v1569 = vld [vmem:[#allocation14 + $0xe98] sm:$0xff]
          %v1570 = vld [vmem:[#allocation14 + $0xea0] sm:$0xff]
          %v1571 = vld [vmem:[#allocation14 + $0xea8] sm:$0xff]
          %v1572 = vld [vmem:[#allocation14 + $0xeb0] sm:$0xff]
          %v1573 = vld [vmem:[#allocation14 + $0xeb8] sm:$0xff]
          %v1574 = vld [vmem:[#allocation14 + $0xec0] sm:$0xff]
          %v1575 = vld [vmem:[#allocation14 + $0xec8] sm:$0xff]
          %v1576 = vld [vmem:[#allocation14 + $0xed0] sm:$0xff]
          %v1577 = vld [vmem:[#allocation14 + $0xed8] sm:$0xff]
          %v1578 = vld [vmem:[#allocation14 + $0xee0] sm:$0xff]
          %v1579 = vld [vmem:[#allocation14 + $0xee8] sm:$0xff]
          %v1580 = vld [vmem:[#allocation14 + $0xef0] sm:$0xff]
          %v1581 = vld [vmem:[#allocation14 + $0xef8] sm:$0xff]
          %v1582 = vld [vmem:[#allocation14 + $0xf00] sm:$0xff]
          %v1583 = vld [vmem:[#allocation14 + $0xf08] sm:$0xff]
          %v1584 = vld [vmem:[#allocation14 + $0xf10] sm:$0xff]
          %v1585 = vld [vmem:[#allocation14 + $0xf18] sm:$0xff]
          %v1586 = vld [vmem:[#allocation14 + $0xf20] sm:$0xff]
          %v1587 = vld [vmem:[#allocation14 + $0xf28] sm:$0xff]
          %v1588 = vld [vmem:[#allocation14 + $0xf30] sm:$0xff]
          %v1589 = vld [vmem:[#allocation14 + $0xf38] sm:$0xff]
          %v1590 = vld [vmem:[#allocation14 + $0xf40] sm:$0xff]
          %v1591 = vld [vmem:[#allocation14 + $0xf48] sm:$0xff]
          %v1592 = vld [vmem:[#allocation14 + $0xf50] sm:$0xff]
          %v1593 = vld [vmem:[#allocation14 + $0xf58] sm:$0xff]
          %v1594 = vld [vmem:[#allocation14 + $0xf60] sm:$0xff]
          %v1595 = vld [vmem:[#allocation14 + $0xf68] sm:$0xff]
          %v1596 = vld [vmem:[#allocation14 + $0xf70] sm:$0xff]
          %v1597 = vld [vmem:[#allocation14 + $0xf78] sm:$0xff]
          %v1598 = vld [vmem:[#allocation14 + $0xf80] sm:$0xff]
          %v1599 = vld [vmem:[#allocation14 + $0xf88] sm:$0xff]
          %v1600 = vld [vmem:[#allocation14 + $0xf90] sm:$0xff]
          %v1601 = vld [vmem:[#allocation14 + $0xf98] sm:$0xff]
          %v1602 = vld [vmem:[#allocation14 + $0xfa0] sm:$0xff]
          %v1603 = vld [vmem:[#allocation14 + $0xfa8] sm:$0xff]
          %v1604 = vld [vmem:[#allocation14 + $0xfb0] sm:$0xff]
          %v1605 = vld [vmem:[#allocation14 + $0xfb8] sm:$0xff]
          %v1606 = vld [vmem:[#allocation14 + $0xfc0] sm:$0xff]
          %v1607 = vld [vmem:[#allocation14 + $0xfc8] sm:$0xff]
          %v1608 = vld [vmem:[#allocation14 + $0xfd0] sm:$0xff]
          %v1609 = vld [vmem:[#allocation14 + $0xfd8] sm:$0xff]
          %v1610 = vld [vmem:[#allocation14 + $0xfe0] sm:$0xff]
          %v1611 = vld [vmem:[#allocation14 + $0xfe8] sm:$0xff]
          %v1612 = vld [vmem:[#allocation14 + $0xff0] sm:$0xff]
          %v1613 = vld [vmem:[#allocation14 + $0xff8] sm:$0xff]
          %v1614 = vld [vmem:[#allocation15] sm:$0xf]
          %v1616 = vperm.slane %v1101, 0
          %v1617 = vperm.slane %v1101, 1
          %v1618 = vperm.slane %v1101, 2
          %v1619 = vperm.slane %v1101, 3
          %v1620 = vperm.slane %v1101, 4
          %v1621 = vperm.slane %v1101, 5
          %v1622 = vperm.slane %v1101, 6
          %v1623 = vperm.slane %v1101, 7
          %v1633 = vperm.slane %v1614, 0
          %v1634 = vperm.slane %v1614, 1
          %v1635 = vperm.slane %v1614, 2
          %v1636 = vperm.slane %v1614, 3
          %1641 = vmatpush.msra.mxu0 %v1162
          %1642 = vmatpush.msra.mxu0 %v1158
          %1643 = vmatpush.msra.mxu0 %v1154
          %1644 = vmatpush.msra.mxu0 %v1150
          %1645 = vmatpush.msra.mxu0 %v1146
          %1646 = vmatpush.msra.mxu0 %v1142
          %1647 = vmatpush.msra.mxu0 %v1138
          %1648 = vmatpush.msra.mxu0 %v1134
          %1649 = vmatpush.msra.mxu0 %v1130
          %1650 = vmatpush.msra.mxu0 %v1126
          %1651 = vmatpush.msra.mxu0 %v1122
          %1652 = vmatpush.msra.mxu0 %v1118
          %1653 = vmatpush.msra.mxu0 %v1114
          %1654 = vmatpush.msra.mxu0 %v1110
          %1655 = vmatpush.msra.mxu0 %v1106
          %1656 = vmatpush.msra.mxu0 %v1102
          %1657 = vmatmul.f32.gmra.mxu0 %v1616
          %v1658 = vpop.f32.mrf.mxu0
          %v1659 = vadd.f32 %v1633, %v1658
          %1660 = vdwg.mxu0
          %1661 = vmatpush.msra.mxu0 %v1226
          %1662 = vmatpush.msra.mxu0 %v1222
          %1663 = vmatpush.msra.mxu0 %v1218
          %1664 = vmatpush.msra.mxu0 %v1214
          %1665 = vmatpush.msra.mxu0 %v1210
          %1666 = vmatpush.msra.mxu0 %v1206
          %1667 = vmatpush.msra.mxu0 %v1202
          %1668 = vmatpush.msra.mxu0 %v1198
          %1669 = vmatpush.msra.mxu0 %v1194
          %1670 = vmatpush.msra.mxu0 %v1190
          %1671 = vmatpush.msra.mxu0 %v1186
          %1672 = vmatpush.msra.mxu0 %v1182
          %1673 = vmatpush.msra.mxu0 %v1178
          %1674 = vmatpush.msra.mxu0 %v1174
          %1675 = vmatpush.msra.mxu0 %v1170
          %1676 = vmatpush.msra.mxu0 %v1166
          %1677 = vmatmul.f32.gmra.mxu0 %v1617
          %v1678 = vpop.f32.mrf.mxu0
          %v1679 = vadd.f32 %v1659, %v1678
          %1680 = vdwg.mxu0
          %1681 = vmatpush.msra.mxu0 %v1290
          %1682 = vmatpush.msra.mxu0 %v1286
          %1683 = vmatpush.msra.mxu0 %v1282
          %1684 = vmatpush.msra.mxu0 %v1278
          %1685 = vmatpush.msra.mxu0 %v1274
          %1686 = vmatpush.msra.mxu0 %v1270
          %1687 = vmatpush.msra.mxu0 %v1266
          %1688 = vmatpush.msra.mxu0 %v1262
          %1689 = vmatpush.msra.mxu0 %v1258
          %1690 = vmatpush.msra.mxu0 %v1254
          %1691 = vmatpush.msra.mxu0 %v1250
          %1692 = vmatpush.msra.mxu0 %v1246
          %1693 = vmatpush.msra.mxu0 %v1242
          %1694 = vmatpush.msra.mxu0 %v1238
          %1695 = vmatpush.msra.mxu0 %v1234
          %1696 = vmatpush.msra.mxu0 %v1230
          %1697 = vmatmul.f32.gmra.mxu0 %v1618
          %v1698 = vpop.f32.mrf.mxu0
          %v1699 = vadd.f32 %v1679, %v1698
          %1700 = vdwg.mxu0
          %1701 = vmatpush.msra.mxu0 %v1354
          %1702 = vmatpush.msra.mxu0 %v1350
          %1703 = vmatpush.msra.mxu0 %v1346
          %1704 = vmatpush.msra.mxu0 %v1342
          %1705 = vmatpush.msra.mxu0 %v1338
          %1706 = vmatpush.msra.mxu0 %v1334
          %1707 = vmatpush.msra.mxu0 %v1330
          %1708 = vmatpush.msra.mxu0 %v1326
          %1709 = vmatpush.msra.mxu0 %v1322
          %1710 = vmatpush.msra.mxu0 %v1318
          %1711 = vmatpush.msra.mxu0 %v1314
          %1712 = vmatpush.msra.mxu0 %v1310
          %1713 = vmatpush.msra.mxu0 %v1306
          %1714 = vmatpush.msra.mxu0 %v1302
          %1715 = vmatpush.msra.mxu0 %v1298
          %1716 = vmatpush.msra.mxu0 %v1294
          %1717 = vmatmul.f32.gmra.mxu0 %v1619
          %v1718 = vpop.f32.mrf.mxu0
          %v1719 = vadd.f32 %v1699, %v1718
          %1720 = vdwg.mxu0
          %1721 = vmatpush.msra.mxu0 %v1418
          %1722 = vmatpush.msra.mxu0 %v1414
          %1723 = vmatpush.msra.mxu0 %v1410
          %1724 = vmatpush.msra.mxu0 %v1406
          %1725 = vmatpush.msra.mxu0 %v1402
          %1726 = vmatpush.msra.mxu0 %v1398
          %1727 = vmatpush.msra.mxu0 %v1394
          %1728 = vmatpush.msra.mxu0 %v1390
          %1729 = vmatpush.msra.mxu0 %v1386
          %1730 = vmatpush.msra.mxu0 %v1382
          %1731 = vmatpush.msra.mxu0 %v1378
          %1732 = vmatpush.msra.mxu0 %v1374
          %1733 = vmatpush.msra.mxu0 %v1370
          %1734 = vmatpush.msra.mxu0 %v1366
          %1735 = vmatpush.msra.mxu0 %v1362
          %1736 = vmatpush.msra.mxu0 %v1358
          %1737 = vmatmul.f32.gmra.mxu0 %v1620
          %v1738 = vpop.f32.mrf.mxu0
          %v1739 = vadd.f32 %v1719, %v1738
          %1740 = vdwg.mxu0
          %1741 = vmatpush.msra.mxu0 %v1482
          %1742 = vmatpush.msra.mxu0 %v1478
          %1743 = vmatpush.msra.mxu0 %v1474
          %1744 = vmatpush.msra.mxu0 %v1470
          %1745 = vmatpush.msra.mxu0 %v1466
          %1746 = vmatpush.msra.mxu0 %v1462
          %1747 = vmatpush.msra.mxu0 %v1458
          %1748 = vmatpush.msra.mxu0 %v1454
          %1749 = vmatpush.msra.mxu0 %v1450
          %1750 = vmatpush.msra.mxu0 %v1446
          %1751 = vmatpush.msra.mxu0 %v1442
          %1752 = vmatpush.msra.mxu0 %v1438
          %1753 = vmatpush.msra.mxu0 %v1434
          %1754 = vmatpush.msra.mxu0 %v1430
          %1755 = vmatpush.msra.mxu0 %v1426
          %1756 = vmatpush.msra.mxu0 %v1422
          %1757 = vmatmul.f32.gmra.mxu0 %v1621
          %v1758 = vpop.f32.mrf.mxu0
          %v1759 = vadd.f32 %v1739, %v1758
          %1760 = vdwg.mxu0
          %1761 = vmatpush.msra.mxu0 %v1546
          %1762 = vmatpush.msra.mxu0 %v1542
          %1763 = vmatpush.msra.mxu0 %v1538
          %1764 = vmatpush.msra.mxu0 %v1534
          %1765 = vmatpush.msra.mxu0 %v1530
          %1766 = vmatpush.msra.mxu0 %v1526
          %1767 = vmatpush.msra.mxu0 %v1522
          %1768 = vmatpush.msra.mxu0 %v1518
          %1769 = vmatpush.msra.mxu0 %v1514
          %1770 = vmatpush.msra.mxu0 %v1510
          %1771 = vmatpush.msra.mxu0 %v1506
          %1772 = vmatpush.msra.mxu0 %v1502
          %1773 = vmatpush.msra.mxu0 %v1498
          %1774 = vmatpush.msra.mxu0 %v1494
          %1775 = vmatpush.msra.mxu0 %v1490
          %1776 = vmatpush.msra.mxu0 %v1486
          %1777 = vmatmul.f32.gmra.mxu0 %v1622
          %v1778 = vpop.f32.mrf.mxu0
          %v1779 = vadd.f32 %v1759, %v1778
          %1780 = vdwg.mxu0
          %1781 = vmatpush.msra.mxu0 %v1610
          %1782 = vmatpush.msra.mxu0 %v1606
          %1783 = vmatpush.msra.mxu0 %v1602
          %1784 = vmatpush.msra.mxu0 %v1598
          %1785 = vmatpush.msra.mxu0 %v1594
          %1786 = vmatpush.msra.mxu0 %v1590
          %1787 = vmatpush.msra.mxu0 %v1586
          %1788 = vmatpush.msra.mxu0 %v1582
          %1789 = vmatpush.msra.mxu0 %v1578
          %1790 = vmatpush.msra.mxu0 %v1574
          %1791 = vmatpush.msra.mxu0 %v1570
          %1792 = vmatpush.msra.mxu0 %v1566
          %1793 = vmatpush.msra.mxu0 %v1562
          %1794 = vmatpush.msra.mxu0 %v1558
          %1795 = vmatpush.msra.mxu0 %v1554
          %1796 = vmatpush.msra.mxu0 %v1550
          %1797 = vmatmul.f32.gmra.mxu0 %v1623
          %v1798 = vpop.f32.mrf.mxu0
          %v1799 = vadd.f32 %v1779, %v1798
          %1800 = vdwg.mxu0
          %1801 = vmatpush.msra.mxu0 %v1163
          %1802 = vmatpush.msra.mxu0 %v1159
          %1803 = vmatpush.msra.mxu0 %v1155
          %1804 = vmatpush.msra.mxu0 %v1151
          %1805 = vmatpush.msra.mxu0 %v1147
          %1806 = vmatpush.msra.mxu0 %v1143
          %1807 = vmatpush.msra.mxu0 %v1139
          %1808 = vmatpush.msra.mxu0 %v1135
          %1809 = vmatpush.msra.mxu0 %v1131
          %1810 = vmatpush.msra.mxu0 %v1127
          %1811 = vmatpush.msra.mxu0 %v1123
          %1812 = vmatpush.msra.mxu0 %v1119
          %1813 = vmatpush.msra.mxu0 %v1115
          %1814 = vmatpush.msra.mxu0 %v1111
          %1815 = vmatpush.msra.mxu0 %v1107
          %1816 = vmatpush.msra.mxu0 %v1103
          %1817 = vmatmul.f32.gmra.mxu0 %v1616
          %v1818 = vpop.f32.mrf.mxu0
          %v1819 = vadd.f32 %v1634, %v1818
          %1820 = vdwg.mxu0
          %1821 = vmatpush.msra.mxu0 %v1227
          %1822 = vmatpush.msra.mxu0 %v1223
          %1823 = vmatpush.msra.mxu0 %v1219
          %1824 = vmatpush.msra.mxu0 %v1215
          %1825 = vmatpush.msra.mxu0 %v1211
          %1826 = vmatpush.msra.mxu0 %v1207
          %1827 = vmatpush.msra.mxu0 %v1203
          %1828 = vmatpush.msra.mxu0 %v1199
          %1829 = vmatpush.msra.mxu0 %v1195
          %1830 = vmatpush.msra.mxu0 %v1191
          %1831 = vmatpush.msra.mxu0 %v1187
          %1832 = vmatpush.msra.mxu0 %v1183
          %1833 = vmatpush.msra.mxu0 %v1179
          %1834 = vmatpush.msra.mxu0 %v1175
          %1835 = vmatpush.msra.mxu0 %v1171
          %1836 = vmatpush.msra.mxu0 %v1167
          %1837 = vmatmul.f32.gmra.mxu0 %v1617
          %v1838 = vpop.f32.mrf.mxu0
          %v1839 = vadd.f32 %v1819, %v1838
          %1840 = vdwg.mxu0
          %1841 = vmatpush.msra.mxu0 %v1291
          %1842 = vmatpush.msra.mxu0 %v1287
          %1843 = vmatpush.msra.mxu0 %v1283
          %1844 = vmatpush.msra.mxu0 %v1279
          %1845 = vmatpush.msra.mxu0 %v1275
          %1846 = vmatpush.msra.mxu0 %v1271
          %1847 = vmatpush.msra.mxu0 %v1267
          %1848 = vmatpush.msra.mxu0 %v1263
          %1849 = vmatpush.msra.mxu0 %v1259
          %1850 = vmatpush.msra.mxu0 %v1255
          %1851 = vmatpush.msra.mxu0 %v1251
          %1852 = vmatpush.msra.mxu0 %v1247
          %1853 = vmatpush.msra.mxu0 %v1243
          %1854 = vmatpush.msra.mxu0 %v1239
          %1855 = vmatpush.msra.mxu0 %v1235
          %1856 = vmatpush.msra.mxu0 %v1231
          %1857 = vmatmul.f32.gmra.mxu0 %v1618
          %v1858 = vpop.f32.mrf.mxu0
          %v1859 = vadd.f32 %v1839, %v1858
          %1860 = vdwg.mxu0
          %1861 = vmatpush.msra.mxu0 %v1355
          %1862 = vmatpush.msra.mxu0 %v1351
          %1863 = vmatpush.msra.mxu0 %v1347
          %1864 = vmatpush.msra.mxu0 %v1343
          %1865 = vmatpush.msra.mxu0 %v1339
          %1866 = vmatpush.msra.mxu0 %v1335
          %1867 = vmatpush.msra.mxu0 %v1331
          %1868 = vmatpush.msra.mxu0 %v1327
          %1869 = vmatpush.msra.mxu0 %v1323
          %1870 = vmatpush.msra.mxu0 %v1319
          %1871 = vmatpush.msra.mxu0 %v1315
          %1872 = vmatpush.msra.mxu0 %v1311
          %1873 = vmatpush.msra.mxu0 %v1307
          %1874 = vmatpush.msra.mxu0 %v1303
          %1875 = vmatpush.msra.mxu0 %v1299
          %1876 = vmatpush.msra.mxu0 %v1295
          %1877 = vmatmul.f32.gmra.mxu0 %v1619
          %v1878 = vpop.f32.mrf.mxu0
          %v1879 = vadd.f32 %v1859, %v1878
          %1880 = vdwg.mxu0
          %1881 = vmatpush.msra.mxu0 %v1419
          %1882 = vmatpush.msra.mxu0 %v1415
          %1883 = vmatpush.msra.mxu0 %v1411
          %1884 = vmatpush.msra.mxu0 %v1407
          %1885 = vmatpush.msra.mxu0 %v1403
          %1886 = vmatpush.msra.mxu0 %v1399
          %1887 = vmatpush.msra.mxu0 %v1395
          %1888 = vmatpush.msra.mxu0 %v1391
          %1889 = vmatpush.msra.mxu0 %v1387
          %1890 = vmatpush.msra.mxu0 %v1383
          %1891 = vmatpush.msra.mxu0 %v1379
          %1892 = vmatpush.msra.mxu0 %v1375
          %1893 = vmatpush.msra.mxu0 %v1371
          %1894 = vmatpush.msra.mxu0 %v1367
          %1895 = vmatpush.msra.mxu0 %v1363
          %1896 = vmatpush.msra.mxu0 %v1359
          %1897 = vmatmul.f32.gmra.mxu0 %v1620
          %v1898 = vpop.f32.mrf.mxu0
          %v1899 = vadd.f32 %v1879, %v1898
          %1900 = vdwg.mxu0
          %1901 = vmatpush.msra.mxu0 %v1483
          %1902 = vmatpush.msra.mxu0 %v1479
          %1903 = vmatpush.msra.mxu0 %v1475
          %1904 = vmatpush.msra.mxu0 %v1471
          %1905 = vmatpush.msra.mxu0 %v1467
          %1906 = vmatpush.msra.mxu0 %v1463
          %1907 = vmatpush.msra.mxu0 %v1459
          %1908 = vmatpush.msra.mxu0 %v1455
          %1909 = vmatpush.msra.mxu0 %v1451
          %1910 = vmatpush.msra.mxu0 %v1447
          %1911 = vmatpush.msra.mxu0 %v1443
          %1912 = vmatpush.msra.mxu0 %v1439
          %1913 = vmatpush.msra.mxu0 %v1435
          %1914 = vmatpush.msra.mxu0 %v1431
          %1915 = vmatpush.msra.mxu0 %v1427
          %1916 = vmatpush.msra.mxu0 %v1423
          %1917 = vmatmul.f32.gmra.mxu0 %v1621
          %v1918 = vpop.f32.mrf.mxu0
          %v1919 = vadd.f32 %v1899, %v1918
          %1920 = vdwg.mxu0
          %1921 = vmatpush.msra.mxu0 %v1547
          %1922 = vmatpush.msra.mxu0 %v1543
          %1923 = vmatpush.msra.mxu0 %v1539
          %1924 = vmatpush.msra.mxu0 %v1535
          %1925 = vmatpush.msra.mxu0 %v1531
          %1926 = vmatpush.msra.mxu0 %v1527
          %1927 = vmatpush.msra.mxu0 %v1523
          %1928 = vmatpush.msra.mxu0 %v1519
          %1929 = vmatpush.msra.mxu0 %v1515
          %1930 = vmatpush.msra.mxu0 %v1511
          %1931 = vmatpush.msra.mxu0 %v1507
          %1932 = vmatpush.msra.mxu0 %v1503
          %1933 = vmatpush.msra.mxu0 %v1499
          %1934 = vmatpush.msra.mxu0 %v1495
          %1935 = vmatpush.msra.mxu0 %v1491
          %1936 = vmatpush.msra.mxu0 %v1487
          %1937 = vmatmul.f32.gmra.mxu0 %v1622
          %v1938 = vpop.f32.mrf.mxu0
          %v1939 = vadd.f32 %v1919, %v1938
          %1940 = vdwg.mxu0
          %1941 = vmatpush.msra.mxu0 %v1611
          %1942 = vmatpush.msra.mxu0 %v1607
          %1943 = vmatpush.msra.mxu0 %v1603
          %1944 = vmatpush.msra.mxu0 %v1599
          %1945 = vmatpush.msra.mxu0 %v1595
          %1946 = vmatpush.msra.mxu0 %v1591
          %1947 = vmatpush.msra.mxu0 %v1587
          %1948 = vmatpush.msra.mxu0 %v1583
          %1949 = vmatpush.msra.mxu0 %v1579
          %1950 = vmatpush.msra.mxu0 %v1575
          %1951 = vmatpush.msra.mxu0 %v1571
          %1952 = vmatpush.msra.mxu0 %v1567
          %1953 = vmatpush.msra.mxu0 %v1563
          %1954 = vmatpush.msra.mxu0 %v1559
          %1955 = vmatpush.msra.mxu0 %v1555
          %1956 = vmatpush.msra.mxu0 %v1551
          %1957 = vmatmul.f32.gmra.mxu0 %v1623
          %v1958 = vpop.f32.mrf.mxu0
          %v1959 = vadd.f32 %v1939, %v1958
          %1960 = vdwg.mxu0
          %1961 = vmatpush.msra.mxu0 %v1164
          %1962 = vmatpush.msra.mxu0 %v1160
          %1963 = vmatpush.msra.mxu0 %v1156
          %1964 = vmatpush.msra.mxu0 %v1152
          %1965 = vmatpush.msra.mxu0 %v1148
          %1966 = vmatpush.msra.mxu0 %v1144
          %1967 = vmatpush.msra.mxu0 %v1140
          %1968 = vmatpush.msra.mxu0 %v1136
          %1969 = vmatpush.msra.mxu0 %v1132
          %1970 = vmatpush.msra.mxu0 %v1128
          %1971 = vmatpush.msra.mxu0 %v1124
          %1972 = vmatpush.msra.mxu0 %v1120
          %1973 = vmatpush.msra.mxu0 %v1116
          %1974 = vmatpush.msra.mxu0 %v1112
          %1975 = vmatpush.msra.mxu0 %v1108
          %1976 = vmatpush.msra.mxu0 %v1104
          %1977 = vmatmul.f32.gmra.mxu0 %v1616
          %v1978 = vpop.f32.mrf.mxu0
          %v1979 = vadd.f32 %v1635, %v1978
          %1980 = vdwg.mxu0
          %1981 = vmatpush.msra.mxu0 %v1228
          %1982 = vmatpush.msra.mxu0 %v1224
          %1983 = vmatpush.msra.mxu0 %v1220
          %1984 = vmatpush.msra.mxu0 %v1216
          %1985 = vmatpush.msra.mxu0 %v1212
          %1986 = vmatpush.msra.mxu0 %v1208
          %1987 = vmatpush.msra.mxu0 %v1204
          %1988 = vmatpush.msra.mxu0 %v1200
          %1989 = vmatpush.msra.mxu0 %v1196
          %1990 = vmatpush.msra.mxu0 %v1192
          %1991 = vmatpush.msra.mxu0 %v1188
          %1992 = vmatpush.msra.mxu0 %v1184
          %1993 = vmatpush.msra.mxu0 %v1180
          %1994 = vmatpush.msra.mxu0 %v1176
          %1995 = vmatpush.msra.mxu0 %v1172
          %1996 = vmatpush.msra.mxu0 %v1168
          %1997 = vmatmul.f32.gmra.mxu0 %v1617
          %v1998 = vpop.f32.mrf.mxu0
          %v1999 = vadd.f32 %v1979, %v1998
          %2000 = vdwg.mxu0
          %2001 = vmatpush.msra.mxu0 %v1292
          %2002 = vmatpush.msra.mxu0 %v1288
          %2003 = vmatpush.msra.mxu0 %v1284
          %2004 = vmatpush.msra.mxu0 %v1280
          %2005 = vmatpush.msra.mxu0 %v1276
          %2006 = vmatpush.msra.mxu0 %v1272
          %2007 = vmatpush.msra.mxu0 %v1268
          %2008 = vmatpush.msra.mxu0 %v1264
          %2009 = vmatpush.msra.mxu0 %v1260
          %2010 = vmatpush.msra.mxu0 %v1256
          %2011 = vmatpush.msra.mxu0 %v1252
          %2012 = vmatpush.msra.mxu0 %v1248
          %2013 = vmatpush.msra.mxu0 %v1244
          %2014 = vmatpush.msra.mxu0 %v1240
          %2015 = vmatpush.msra.mxu0 %v1236
          %2016 = vmatpush.msra.mxu0 %v1232
          %2017 = vmatmul.f32.gmra.mxu0 %v1618
          %v2018 = vpop.f32.mrf.mxu0
          %v2019 = vadd.f32 %v1999, %v2018
          %2020 = vdwg.mxu0
          %2021 = vmatpush.msra.mxu0 %v1356
          %2022 = vmatpush.msra.mxu0 %v1352
          %2023 = vmatpush.msra.mxu0 %v1348
          %2024 = vmatpush.msra.mxu0 %v1344
          %2025 = vmatpush.msra.mxu0 %v1340
          %2026 = vmatpush.msra.mxu0 %v1336
          %2027 = vmatpush.msra.mxu0 %v1332
          %2028 = vmatpush.msra.mxu0 %v1328
          %2029 = vmatpush.msra.mxu0 %v1324
          %2030 = vmatpush.msra.mxu0 %v1320
          %2031 = vmatpush.msra.mxu0 %v1316
          %2032 = vmatpush.msra.mxu0 %v1312
          %2033 = vmatpush.msra.mxu0 %v1308
          %2034 = vmatpush.msra.mxu0 %v1304
          %2035 = vmatpush.msra.mxu0 %v1300
          %2036 = vmatpush.msra.mxu0 %v1296
          %2037 = vmatmul.f32.gmra.mxu0 %v1619
          %v2038 = vpop.f32.mrf.mxu0
          %v2039 = vadd.f32 %v2019, %v2038
          %2040 = vdwg.mxu0
          %2041 = vmatpush.msra.mxu0 %v1420
          %2042 = vmatpush.msra.mxu0 %v1416
          %2043 = vmatpush.msra.mxu0 %v1412
          %2044 = vmatpush.msra.mxu0 %v1408
          %2045 = vmatpush.msra.mxu0 %v1404
          %2046 = vmatpush.msra.mxu0 %v1400
          %2047 = vmatpush.msra.mxu0 %v1396
          %2048 = vmatpush.msra.mxu0 %v1392
          %2049 = vmatpush.msra.mxu0 %v1388
          %2050 = vmatpush.msra.mxu0 %v1384
          %2051 = vmatpush.msra.mxu0 %v1380
          %2052 = vmatpush.msra.mxu0 %v1376
          %2053 = vmatpush.msra.mxu0 %v1372
          %2054 = vmatpush.msra.mxu0 %v1368
          %2055 = vmatpush.msra.mxu0 %v1364
          %2056 = vmatpush.msra.mxu0 %v1360
          %2057 = vmatmul.f32.gmra.mxu0 %v1620
          %v2058 = vpop.f32.mrf.mxu0
          %v2059 = vadd.f32 %v2039, %v2058
          %2060 = vdwg.mxu0
          %2061 = vmatpush.msra.mxu0 %v1484
          %2062 = vmatpush.msra.mxu0 %v1480
          %2063 = vmatpush.msra.mxu0 %v1476
          %2064 = vmatpush.msra.mxu0 %v1472
          %2065 = vmatpush.msra.mxu0 %v1468
          %2066 = vmatpush.msra.mxu0 %v1464
          %2067 = vmatpush.msra.mxu0 %v1460
          %2068 = vmatpush.msra.mxu0 %v1456
          %2069 = vmatpush.msra.mxu0 %v1452
          %2070 = vmatpush.msra.mxu0 %v1448
          %2071 = vmatpush.msra.mxu0 %v1444
          %2072 = vmatpush.msra.mxu0 %v1440
          %2073 = vmatpush.msra.mxu0 %v1436
          %2074 = vmatpush.msra.mxu0 %v1432
          %2075 = vmatpush.msra.mxu0 %v1428
          %2076 = vmatpush.msra.mxu0 %v1424
          %2077 = vmatmul.f32.gmra.mxu0 %v1621
          %v2078 = vpop.f32.mrf.mxu0
          %v2079 = vadd.f32 %v2059, %v2078
          %2080 = vdwg.mxu0
          %2081 = vmatpush.msra.mxu0 %v1548
          %2082 = vmatpush.msra.mxu0 %v1544
          %2083 = vmatpush.msra.mxu0 %v1540
          %2084 = vmatpush.msra.mxu0 %v1536
          %2085 = vmatpush.msra.mxu0 %v1532
          %2086 = vmatpush.msra.mxu0 %v1528
          %2087 = vmatpush.msra.mxu0 %v1524
          %2088 = vmatpush.msra.mxu0 %v1520
          %2089 = vmatpush.msra.mxu0 %v1516
          %2090 = vmatpush.msra.mxu0 %v1512
          %2091 = vmatpush.msra.mxu0 %v1508
          %2092 = vmatpush.msra.mxu0 %v1504
          %2093 = vmatpush.msra.mxu0 %v1500
          %2094 = vmatpush.msra.mxu0 %v1496
          %2095 = vmatpush.msra.mxu0 %v1492
          %2096 = vmatpush.msra.mxu0 %v1488
          %2097 = vmatmul.f32.gmra.mxu0 %v1622
          %v2098 = vpop.f32.mrf.mxu0
          %v2099 = vadd.f32 %v2079, %v2098
          %2100 = vdwg.mxu0
          %2101 = vmatpush.msra.mxu0 %v1612
          %2102 = vmatpush.msra.mxu0 %v1608
          %2103 = vmatpush.msra.mxu0 %v1604
          %2104 = vmatpush.msra.mxu0 %v1600
          %2105 = vmatpush.msra.mxu0 %v1596
          %2106 = vmatpush.msra.mxu0 %v1592
          %2107 = vmatpush.msra.mxu0 %v1588
          %2108 = vmatpush.msra.mxu0 %v1584
          %2109 = vmatpush.msra.mxu0 %v1580
          %2110 = vmatpush.msra.mxu0 %v1576
          %2111 = vmatpush.msra.mxu0 %v1572
          %2112 = vmatpush.msra.mxu0 %v1568
          %2113 = vmatpush.msra.mxu0 %v1564
          %2114 = vmatpush.msra.mxu0 %v1560
          %2115 = vmatpush.msra.mxu0 %v1556
          %2116 = vmatpush.msra.mxu0 %v1552
          %2117 = vmatmul.f32.gmra.mxu0 %v1623
          %v2118 = vpop.f32.mrf.mxu0
          %v2119 = vadd.f32 %v2099, %v2118
          %2120 = vdwg.mxu0
          %2121 = vmatpush.msra.mxu0 %v1165
          %2122 = vmatpush.msra.mxu0 %v1161
          %2123 = vmatpush.msra.mxu0 %v1157
          %2124 = vmatpush.msra.mxu0 %v1153
          %2125 = vmatpush.msra.mxu0 %v1149
          %2126 = vmatpush.msra.mxu0 %v1145
          %2127 = vmatpush.msra.mxu0 %v1141
          %2128 = vmatpush.msra.mxu0 %v1137
          %2129 = vmatpush.msra.mxu0 %v1133
          %2130 = vmatpush.msra.mxu0 %v1129
          %2131 = vmatpush.msra.mxu0 %v1125
          %2132 = vmatpush.msra.mxu0 %v1121
          %2133 = vmatpush.msra.mxu0 %v1117
          %2134 = vmatpush.msra.mxu0 %v1113
          %2135 = vmatpush.msra.mxu0 %v1109
          %2136 = vmatpush.msra.mxu0 %v1105
          %2137 = vmatmul.f32.gmra.mxu0 %v1616
          %v2138 = vpop.f32.mrf.mxu0
          %v2139 = vadd.f32 %v1636, %v2138
          %2140 = vdwg.mxu0
          %2141 = vmatpush.msra.mxu0 %v1229
          %2142 = vmatpush.msra.mxu0 %v1225
          %2143 = vmatpush.msra.mxu0 %v1221
          %2144 = vmatpush.msra.mxu0 %v1217
          %2145 = vmatpush.msra.mxu0 %v1213
          %2146 = vmatpush.msra.mxu0 %v1209
          %2147 = vmatpush.msra.mxu0 %v1205
          %2148 = vmatpush.msra.mxu0 %v1201
          %2149 = vmatpush.msra.mxu0 %v1197
          %2150 = vmatpush.msra.mxu0 %v1193
          %2151 = vmatpush.msra.mxu0 %v1189
          %2152 = vmatpush.msra.mxu0 %v1185
          %2153 = vmatpush.msra.mxu0 %v1181
          %2154 = vmatpush.msra.mxu0 %v1177
          %2155 = vmatpush.msra.mxu0 %v1173
          %2156 = vmatpush.msra.mxu0 %v1169
          %2157 = vmatmul.f32.gmra.mxu0 %v1617
          %v2158 = vpop.f32.mrf.mxu0
          %v2159 = vadd.f32 %v2139, %v2158
          %2160 = vdwg.mxu0
          %2161 = vmatpush.msra.mxu0 %v1293
          %2162 = vmatpush.msra.mxu0 %v1289
          %2163 = vmatpush.msra.mxu0 %v1285
          %2164 = vmatpush.msra.mxu0 %v1281
          %2165 = vmatpush.msra.mxu0 %v1277
          %2166 = vmatpush.msra.mxu0 %v1273
          %2167 = vmatpush.msra.mxu0 %v1269
          %2168 = vmatpush.msra.mxu0 %v1265
          %2169 = vmatpush.msra.mxu0 %v1261
          %2170 = vmatpush.msra.mxu0 %v1257
          %2171 = vmatpush.msra.mxu0 %v1253
          %2172 = vmatpush.msra.mxu0 %v1249
          %2173 = vmatpush.msra.mxu0 %v1245
          %2174 = vmatpush.msra.mxu0 %v1241
          %2175 = vmatpush.msra.mxu0 %v1237
          %2176 = vmatpush.msra.mxu0 %v1233
          %2177 = vmatmul.f32.gmra.mxu0 %v1618
          %v2178 = vpop.f32.mrf.mxu0
          %v2179 = vadd.f32 %v2159, %v2178
          %2180 = vdwg.mxu0
          %2181 = vmatpush.msra.mxu0 %v1357
          %2182 = vmatpush.msra.mxu0 %v1353
          %2183 = vmatpush.msra.mxu0 %v1349
          %2184 = vmatpush.msra.mxu0 %v1345
          %2185 = vmatpush.msra.mxu0 %v1341
          %2186 = vmatpush.msra.mxu0 %v1337
          %2187 = vmatpush.msra.mxu0 %v1333
          %2188 = vmatpush.msra.mxu0 %v1329
          %2189 = vmatpush.msra.mxu0 %v1325
          %2190 = vmatpush.msra.mxu0 %v1321
          %2191 = vmatpush.msra.mxu0 %v1317
          %2192 = vmatpush.msra.mxu0 %v1313
          %2193 = vmatpush.msra.mxu0 %v1309
          %2194 = vmatpush.msra.mxu0 %v1305
          %2195 = vmatpush.msra.mxu0 %v1301
          %2196 = vmatpush.msra.mxu0 %v1297
          %2197 = vmatmul.f32.gmra.mxu0 %v1619
          %v2198 = vpop.f32.mrf.mxu0
          %v2199 = vadd.f32 %v2179, %v2198
          %2200 = vdwg.mxu0
          %2201 = vmatpush.msra.mxu0 %v1421
          %2202 = vmatpush.msra.mxu0 %v1417
          %2203 = vmatpush.msra.mxu0 %v1413
          %2204 = vmatpush.msra.mxu0 %v1409
          %2205 = vmatpush.msra.mxu0 %v1405
          %2206 = vmatpush.msra.mxu0 %v1401
          %2207 = vmatpush.msra.mxu0 %v1397
          %2208 = vmatpush.msra.mxu0 %v1393
          %2209 = vmatpush.msra.mxu0 %v1389
          %2210 = vmatpush.msra.mxu0 %v1385
          %2211 = vmatpush.msra.mxu0 %v1381
          %2212 = vmatpush.msra.mxu0 %v1377
          %2213 = vmatpush.msra.mxu0 %v1373
          %2214 = vmatpush.msra.mxu0 %v1369
          %2215 = vmatpush.msra.mxu0 %v1365
          %2216 = vmatpush.msra.mxu0 %v1361
          %2217 = vmatmul.f32.gmra.mxu0 %v1620
          %v2218 = vpop.f32.mrf.mxu0
          %v2219 = vadd.f32 %v2199, %v2218
          %2220 = vdwg.mxu0
          %2221 = vmatpush.msra.mxu0 %v1485
          %2222 = vmatpush.msra.mxu0 %v1481
          %2223 = vmatpush.msra.mxu0 %v1477
          %2224 = vmatpush.msra.mxu0 %v1473
          %2225 = vmatpush.msra.mxu0 %v1469
          %2226 = vmatpush.msra.mxu0 %v1465
          %2227 = vmatpush.msra.mxu0 %v1461
          %2228 = vmatpush.msra.mxu0 %v1457
          %2229 = vmatpush.msra.mxu0 %v1453
          %2230 = vmatpush.msra.mxu0 %v1449
          %2231 = vmatpush.msra.mxu0 %v1445
          %2232 = vmatpush.msra.mxu0 %v1441
          %2233 = vmatpush.msra.mxu0 %v1437
          %2234 = vmatpush.msra.mxu0 %v1433
          %2235 = vmatpush.msra.mxu0 %v1429
          %2236 = vmatpush.msra.mxu0 %v1425
          %2237 = vmatmul.f32.gmra.mxu0 %v1621
          %v2238 = vpop.f32.mrf.mxu0
          %v2239 = vadd.f32 %v2219, %v2238
          %2240 = vdwg.mxu0
          %2241 = vmatpush.msra.mxu0 %v1549
          %2242 = vmatpush.msra.mxu0 %v1545
          %2243 = vmatpush.msra.mxu0 %v1541
          %2244 = vmatpush.msra.mxu0 %v1537
          %2245 = vmatpush.msra.mxu0 %v1533
          %2246 = vmatpush.msra.mxu0 %v1529
          %2247 = vmatpush.msra.mxu0 %v1525
          %2248 = vmatpush.msra.mxu0 %v1521
          %2249 = vmatpush.msra.mxu0 %v1517
          %2250 = vmatpush.msra.mxu0 %v1513
          %2251 = vmatpush.msra.mxu0 %v1509
          %2252 = vmatpush.msra.mxu0 %v1505
          %2253 = vmatpush.msra.mxu0 %v1501
          %2254 = vmatpush.msra.mxu0 %v1497
          %2255 = vmatpush.msra.mxu0 %v1493
          %2256 = vmatpush.msra.mxu0 %v1489
          %2257 = vmatmul.f32.gmra.mxu0 %v1622
          %v2258 = vpop.f32.mrf.mxu0
          %v2259 = vadd.f32 %v2239, %v2258
          %2260 = vdwg.mxu0
          %2261 = vmatpush.msra.mxu0 %v1613
          %2262 = vmatpush.msra.mxu0 %v1609
          %2263 = vmatpush.msra.mxu0 %v1605
          %2264 = vmatpush.msra.mxu0 %v1601
          %2265 = vmatpush.msra.mxu0 %v1597
          %2266 = vmatpush.msra.mxu0 %v1593
          %2267 = vmatpush.msra.mxu0 %v1589
          %2268 = vmatpush.msra.mxu0 %v1585
          %2269 = vmatpush.msra.mxu0 %v1581
          %2270 = vmatpush.msra.mxu0 %v1577
          %2271 = vmatpush.msra.mxu0 %v1573
          %2272 = vmatpush.msra.mxu0 %v1569
          %2273 = vmatpush.msra.mxu0 %v1565
          %2274 = vmatpush.msra.mxu0 %v1561
          %2275 = vmatpush.msra.mxu0 %v1557
          %2276 = vmatpush.msra.mxu0 %v1553
          %2277 = vmatmul.f32.gmra.mxu0 %v1623
          %v2278 = vpop.f32.mrf.mxu0
          %v2279 = vadd.f32 %v2259, %v2278
          %2280 = vdwg.mxu0
          %v2281 = vmax.f32 %v1799, 0.0
          %v2282 = vmax.f32 %v1959, 0.0
          %v2283 = vmax.f32 %v2119, 0.0
          %v2284 = vmax.f32 %v2279, 0.0
          %v2285 = vld [vmem:[#allocation17] sm:$0xff]
          %v2286 = vld [vmem:[#allocation17 + $0x8] sm:$0xff]
          %v2287 = vld [vmem:[#allocation17 + $0x10] sm:$0xff]
          %v2288 = vld [vmem:[#allocation17 + $0x18] sm:$0xff]
          %v2289 = vld [vmem:[#allocation17 + $0x20] sm:$0xff]
          %v2290 = vld [vmem:[#allocation17 + $0x28] sm:$0xff]
          %v2291 = vld [vmem:[#allocation17 + $0x30] sm:$0xff]
          %v2292 = vld [vmem:[#allocation17 + $0x38] sm:$0xff]
          %v2293 = vld [vmem:[#allocation17 + $0x40] sm:$0xff]
          %v2294 = vld [vmem:[#allocation17 + $0x48] sm:$0xff]
          %v2295 = vld [vmem:[#allocation17 + $0x50] sm:$0xff]
          %v2296 = vld [vmem:[#allocation17 + $0x58] sm:$0xff]
          %v2297 = vld [vmem:[#allocation17 + $0x60] sm:$0xff]
          %v2298 = vld [vmem:[#allocation17 + $0x68] sm:$0xff]
          %v2299 = vld [vmem:[#allocation17 + $0x70] sm:$0xff]
          %v2300 = vld [vmem:[#allocation17 + $0x78] sm:$0xff]
          %v2301 = vld [vmem:[#allocation17 + $0x80] sm:$0xff]
          %v2302 = vld [vmem:[#allocation17 + $0x88] sm:$0xff]
          %v2303 = vld [vmem:[#allocation17 + $0x90] sm:$0xff]
          %v2304 = vld [vmem:[#allocation17 + $0x98] sm:$0xff]
          %v2305 = vld [vmem:[#allocation17 + $0xa0] sm:$0xff]
          %v2306 = vld [vmem:[#allocation17 + $0xa8] sm:$0xff]
          %v2307 = vld [vmem:[#allocation17 + $0xb0] sm:$0xff]
          %v2308 = vld [vmem:[#allocation17 + $0xb8] sm:$0xff]
          %v2309 = vld [vmem:[#allocation17 + $0xc0] sm:$0xff]
          %v2310 = vld [vmem:[#allocation17 + $0xc8] sm:$0xff]
          %v2311 = vld [vmem:[#allocation17 + $0xd0] sm:$0xff]
          %v2312 = vld [vmem:[#allocation17 + $0xd8] sm:$0xff]
          %v2313 = vld [vmem:[#allocation17 + $0xe0] sm:$0xff]
          %v2314 = vld [vmem:[#allocation17 + $0xe8] sm:$0xff]
          %v2315 = vld [vmem:[#allocation17 + $0xf0] sm:$0xff]
          %v2316 = vld [vmem:[#allocation17 + $0xf8] sm:$0xff]
          %v2317 = vld [vmem:[#allocation17 + $0x100] sm:$0xff]
          %v2318 = vld [vmem:[#allocation17 + $0x108] sm:$0xff]
          %v2319 = vld [vmem:[#allocation17 + $0x110] sm:$0xff]
          %v2320 = vld [vmem:[#allocation17 + $0x118] sm:$0xff]
          %v2321 = vld [vmem:[#allocation17 + $0x120] sm:$0xff]
          %v2322 = vld [vmem:[#allocation17 + $0x128] sm:$0xff]
          %v2323 = vld [vmem:[#allocation17 + $0x130] sm:$0xff]
          %v2324 = vld [vmem:[#allocation17 + $0x138] sm:$0xff]
          %v2325 = vld [vmem:[#allocation17 + $0x140] sm:$0xff]
          %v2326 = vld [vmem:[#allocation17 + $0x148] sm:$0xff]
          %v2327 = vld [vmem:[#allocation17 + $0x150] sm:$0xff]
          %v2328 = vld [vmem:[#allocation17 + $0x158] sm:$0xff]
          %v2329 = vld [vmem:[#allocation17 + $0x160] sm:$0xff]
          %v2330 = vld [vmem:[#allocation17 + $0x168] sm:$0xff]
          %v2331 = vld [vmem:[#allocation17 + $0x170] sm:$0xff]
          %v2332 = vld [vmem:[#allocation17 + $0x178] sm:$0xff]
          %v2333 = vld [vmem:[#allocation17 + $0x180] sm:$0xff]
          %v2334 = vld [vmem:[#allocation17 + $0x188] sm:$0xff]
          %v2335 = vld [vmem:[#allocation17 + $0x190] sm:$0xff]
          %v2336 = vld [vmem:[#allocation17 + $0x198] sm:$0xff]
          %v2337 = vld [vmem:[#allocation17 + $0x1a0] sm:$0xff]
          %v2338 = vld [vmem:[#allocation17 + $0x1a8] sm:$0xff]
          %v2339 = vld [vmem:[#allocation17 + $0x1b0] sm:$0xff]
          %v2340 = vld [vmem:[#allocation17 + $0x1b8] sm:$0xff]
          %v2341 = vld [vmem:[#allocation17 + $0x1c0] sm:$0xff]
          %v2342 = vld [vmem:[#allocation17 + $0x1c8] sm:$0xff]
          %v2343 = vld [vmem:[#allocation17 + $0x1d0] sm:$0xff]
          %v2344 = vld [vmem:[#allocation17 + $0x1d8] sm:$0xff]
          %v2345 = vld [vmem:[#allocation17 + $0x1e0] sm:$0xff]
          %v2346 = vld [vmem:[#allocation17 + $0x1e8] sm:$0xff]
          %v2347 = vld [vmem:[#allocation17 + $0x1f0] sm:$0xff]
          %v2348 = vld [vmem:[#allocation17 + $0x1f8] sm:$0xff]
          %v2349 = vld [vmem:[#allocation17 + $0x200] sm:$0xff]
          %v2350 = vld [vmem:[#allocation17 + $0x208] sm:$0xff]
          %v2351 = vld [vmem:[#allocation17 + $0x210] sm:$0xff]
          %v2352 = vld [vmem:[#allocation17 + $0x218] sm:$0xff]
          %v2353 = vld [vmem:[#allocation17 + $0x220] sm:$0xff]
          %v2354 = vld [vmem:[#allocation17 + $0x228] sm:$0xff]
          %v2355 = vld [vmem:[#allocation17 + $0x230] sm:$0xff]
          %v2356 = vld [vmem:[#allocation17 + $0x238] sm:$0xff]
          %v2357 = vld [vmem:[#allocation17 + $0x240] sm:$0xff]
          %v2358 = vld [vmem:[#allocation17 + $0x248] sm:$0xff]
          %v2359 = vld [vmem:[#allocation17 + $0x250] sm:$0xff]
          %v2360 = vld [vmem:[#allocation17 + $0x258] sm:$0xff]
          %v2361 = vld [vmem:[#allocation17 + $0x260] sm:$0xff]
          %v2362 = vld [vmem:[#allocation17 + $0x268] sm:$0xff]
          %v2363 = vld [vmem:[#allocation17 + $0x270] sm:$0xff]
          %v2364 = vld [vmem:[#allocation17 + $0x278] sm:$0xff]
          %v2365 = vld [vmem:[#allocation17 + $0x280] sm:$0xff]
          %v2366 = vld [vmem:[#allocation17 + $0x288] sm:$0xff]
          %v2367 = vld [vmem:[#allocation17 + $0x290] sm:$0xff]
          %v2368 = vld [vmem:[#allocation17 + $0x298] sm:$0xff]
          %v2369 = vld [vmem:[#allocation17 + $0x2a0] sm:$0xff]
          %v2370 = vld [vmem:[#allocation17 + $0x2a8] sm:$0xff]
          %v2371 = vld [vmem:[#allocation17 + $0x2b0] sm:$0xff]
          %v2372 = vld [vmem:[#allocation17 + $0x2b8] sm:$0xff]
          %v2373 = vld [vmem:[#allocation17 + $0x2c0] sm:$0xff]
          %v2374 = vld [vmem:[#allocation17 + $0x2c8] sm:$0xff]
          %v2375 = vld [vmem:[#allocation17 + $0x2d0] sm:$0xff]
          %v2376 = vld [vmem:[#allocation17 + $0x2d8] sm:$0xff]
          %v2377 = vld [vmem:[#allocation17 + $0x2e0] sm:$0xff]
          %v2378 = vld [vmem:[#allocation17 + $0x2e8] sm:$0xff]
          %v2379 = vld [vmem:[#allocation17 + $0x2f0] sm:$0xff]
          %v2380 = vld [vmem:[#allocation17 + $0x2f8] sm:$0xff]
          %v2381 = vld [vmem:[#allocation17 + $0x300] sm:$0xff]
          %v2382 = vld [vmem:[#allocation17 + $0x308] sm:$0xff]
          %v2383 = vld [vmem:[#allocation17 + $0x310] sm:$0xff]
          %v2384 = vld [vmem:[#allocation17 + $0x318] sm:$0xff]
          %v2385 = vld [vmem:[#allocation17 + $0x320] sm:$0xff]
          %v2386 = vld [vmem:[#allocation17 + $0x328] sm:$0xff]
          %v2387 = vld [vmem:[#allocation17 + $0x330] sm:$0xff]
          %v2388 = vld [vmem:[#allocation17 + $0x338] sm:$0xff]
          %v2389 = vld [vmem:[#allocation17 + $0x340] sm:$0xff]
          %v2390 = vld [vmem:[#allocation17 + $0x348] sm:$0xff]
          %v2391 = vld [vmem:[#allocation17 + $0x350] sm:$0xff]
          %v2392 = vld [vmem:[#allocation17 + $0x358] sm:$0xff]
          %v2393 = vld [vmem:[#allocation17 + $0x360] sm:$0xff]
          %v2394 = vld [vmem:[#allocation17 + $0x368] sm:$0xff]
          %v2395 = vld [vmem:[#allocation17 + $0x370] sm:$0xff]
          %v2396 = vld [vmem:[#allocation17 + $0x378] sm:$0xff]
          %v2397 = vld [vmem:[#allocation17 + $0x380] sm:$0xff]
          %v2398 = vld [vmem:[#allocation17 + $0x388] sm:$0xff]
          %v2399 = vld [vmem:[#allocation17 + $0x390] sm:$0xff]
          %v2400 = vld [vmem:[#allocation17 + $0x398] sm:$0xff]
          %v2401 = vld [vmem:[#allocation17 + $0x3a0] sm:$0xff]
          %v2402 = vld [vmem:[#allocation17 + $0x3a8] sm:$0xff]
          %v2403 = vld [vmem:[#allocation17 + $0x3b0] sm:$0xff]
          %v2404 = vld [vmem:[#allocation17 + $0x3b8] sm:$0xff]
          %v2405 = vld [vmem:[#allocation17 + $0x3c0] sm:$0xff]
          %v2406 = vld [vmem:[#allocation17 + $0x3c8] sm:$0xff]
          %v2407 = vld [vmem:[#allocation17 + $0x3d0] sm:$0xff]
          %v2408 = vld [vmem:[#allocation17 + $0x3d8] sm:$0xff]
          %v2409 = vld [vmem:[#allocation17 + $0x3e0] sm:$0xff]
          %v2410 = vld [vmem:[#allocation17 + $0x3e8] sm:$0xff]
          %v2411 = vld [vmem:[#allocation17 + $0x3f0] sm:$0xff]
          %v2412 = vld [vmem:[#allocation17 + $0x3f8] sm:$0xff]
          %v2413 = vld [vmem:[#allocation18] sm:$0x3]
          %v2415 = vperm.slane %v2413, 0
          %v2416 = vperm.slane %v2413, 1
          %2419 = vmatpush.msra.mxu0 %v2315
          %2420 = vmatpush.msra.mxu0 %v2313
          %2421 = vmatpush.msra.mxu0 %v2311
          %2422 = vmatpush.msra.mxu0 %v2309
          %2423 = vmatpush.msra.mxu0 %v2307
          %2424 = vmatpush.msra.mxu0 %v2305
          %2425 = vmatpush.msra.mxu0 %v2303
          %2426 = vmatpush.msra.mxu0 %v2301
          %2427 = vmatpush.msra.mxu0 %v2299
          %2428 = vmatpush.msra.mxu0 %v2297
          %2429 = vmatpush.msra.mxu0 %v2295
          %2430 = vmatpush.msra.mxu0 %v2293
          %2431 = vmatpush.msra.mxu0 %v2291
          %2432 = vmatpush.msra.mxu0 %v2289
          %2433 = vmatpush.msra.mxu0 %v2287
          %2434 = vmatpush.msra.mxu0 %v2285
          %2435 = vmatmul.f32.gmra.mxu0 %v2281
          %v2436 = vpop.f32.mrf.mxu0
          %v2437 = vadd.f32 %v2415, %v2436
          %2438 = vdwg.mxu0
          %2439 = vmatpush.msra.mxu0 %v2347
          %2440 = vmatpush.msra.mxu0 %v2345
          %2441 = vmatpush.msra.mxu0 %v2343
          %2442 = vmatpush.msra.mxu0 %v2341
          %2443 = vmatpush.msra.mxu0 %v2339
          %2444 = vmatpush.msra.mxu0 %v2337
          %2445 = vmatpush.msra.mxu0 %v2335
          %2446 = vmatpush.msra.mxu0 %v2333
          %2447 = vmatpush.msra.mxu0 %v2331
          %2448 = vmatpush.msra.mxu0 %v2329
          %2449 = vmatpush.msra.mxu0 %v2327
          %2450 = vmatpush.msra.mxu0 %v2325
          %2451 = vmatpush.msra.mxu0 %v2323
          %2452 = vmatpush.msra.mxu0 %v2321
          %2453 = vmatpush.msra.mxu0 %v2319
          %2454 = vmatpush.msra.mxu0 %v2317
          %2455 = vmatmul.f32.gmra.mxu0 %v2282
          %v2456 = vpop.f32.mrf.mxu0
          %v2457 = vadd.f32 %v2437, %v2456
          %2458 = vdwg.mxu0
          %2459 = vmatpush.msra.mxu0 %v2379
          %2460 = vmatpush.msra.mxu0 %v2377
          %2461 = vmatpush.msra.mxu0 %v2375
          %2462 = vmatpush.msra.mxu0 %v2373
          %2463 = vmatpush.msra.mxu0 %v2371
          %2464 = vmatpush.msra.mxu0 %v2369
          %2465 = vmatpush.msra.mxu0 %v2367
          %2466 = vmatpush.msra.mxu0 %v2365
          %2467 = vmatpush.msra.mxu0 %v2363
          %2468 = vmatpush.msra.mxu0 %v2361
          %2469 = vmatpush.msra.mxu0 %v2359
          %2470 = vmatpush.msra.mxu0 %v2357
          %2471 = vmatpush.msra.mxu0 %v2355
          %2472 = vmatpush.msra.mxu0 %v2353
          %2473 = vmatpush.msra.mxu0 %v2351
          %2474 = vmatpush.msra.mxu0 %v2349
          %2475 = vmatmul.f32.gmra.mxu0 %v2283
          %v2476 = vpop.f32.mrf.mxu0
          %v2477 = vadd.f32 %v2457, %v2476
          %2478 = vdwg.mxu0
          %2479 = vmatpush.msra.mxu0 %v2411
          %2480 = vmatpush.msra.mxu0 %v2409
          %2481 = vmatpush.msra.mxu0 %v2407
          %2482 = vmatpush.msra.mxu0 %v2405
          %2483 = vmatpush.msra.mxu0 %v2403
          %2484 = vmatpush.msra.mxu0 %v2401
          %2485 = vmatpush.msra.mxu0 %v2399
          %2486 = vmatpush.msra.mxu0 %v2397
          %2487 = vmatpush.msra.mxu0 %v2395
          %2488 = vmatpush.msra.mxu0 %v2393
          %2489 = vmatpush.msra.mxu0 %v2391
          %2490 = vmatpush.msra.mxu0 %v2389
          %2491 = vmatpush.msra.mxu0 %v2387
          %2492 = vmatpush.msra.mxu0 %v2385
          %2493 = vmatpush.msra.mxu0 %v2383
          %2494 = vmatpush.msra.mxu0 %v2381
          %2495 = vmatmul.f32.gmra.mxu0 %v2284
          %v2496 = vpop.f32.mrf.mxu0
          %v2497 = vadd.f32 %v2477, %v2496
          %2498 = vdwg.mxu0
          %2499 = vmatpush.msra.mxu0 %v2316
          %2500 = vmatpush.msra.mxu0 %v2314
          %2501 = vmatpush.msra.mxu0 %v2312
          %2502 = vmatpush.msra.mxu0 %v2310
          %2503 = vmatpush.msra.mxu0 %v2308
          %2504 = vmatpush.msra.mxu0 %v2306
          %2505 = vmatpush.msra.mxu0 %v2304
          %2506 = vmatpush.msra.mxu0 %v2302
          %2507 = vmatpush.msra.mxu0 %v2300
          %2508 = vmatpush.msra.mxu0 %v2298
          %2509 = vmatpush.msra.mxu0 %v2296
          %2510 = vmatpush.msra.mxu0 %v2294
          %2511 = vmatpush.msra.mxu0 %v2292
          %2512 = vmatpush.msra.mxu0 %v2290
          %2513 = vmatpush.msra.mxu0 %v2288
          %2514 = vmatpush.msra.mxu0 %v2286
          %2515 = vmatmul.f32.gmra.mxu0 %v2281
          %v2516 = vpop.f32.mrf.mxu0
          %v2517 = vadd.f32 %v2416, %v2516
          %2518 = vdwg.mxu0
          %2519 = vmatpush.msra.mxu0 %v2348
          %2520 = vmatpush.msra.mxu0 %v2346
          %2521 = vmatpush.msra.mxu0 %v2344
          %2522 = vmatpush.msra.mxu0 %v2342
          %2523 = vmatpush.msra.mxu0 %v2340
          %2524 = vmatpush.msra.mxu0 %v2338
          %2525 = vmatpush.msra.mxu0 %v2336
          %2526 = vmatpush.msra.mxu0 %v2334
          %2527 = vmatpush.msra.mxu0 %v2332
          %2528 = vmatpush.msra.mxu0 %v2330
          %2529 = vmatpush.msra.mxu0 %v2328
          %2530 = vmatpush.msra.mxu0 %v2326
          %2531 = vmatpush.msra.mxu0 %v2324
          %2532 = vmatpush.msra.mxu0 %v2322
          %2533 = vmatpush.msra.mxu0 %v2320
          %2534 = vmatpush.msra.mxu0 %v2318
          %2535 = vmatmul.f32.gmra.mxu0 %v2282
          %v2536 = vpop.f32.mrf.mxu0
          %v2537 = vadd.f32 %v2517, %v2536
          %2538 = vdwg.mxu0
          %2539 = vmatpush.msra.mxu0 %v2380
          %2540 = vmatpush.msra.mxu0 %v2378
          %2541 = vmatpush.msra.mxu0 %v2376
          %2542 = vmatpush.msra.mxu0 %v2374
          %2543 = vmatpush.msra.mxu0 %v2372
          %2544 = vmatpush.msra.mxu0 %v2370
          %2545 = vmatpush.msra.mxu0 %v2368
          %2546 = vmatpush.msra.mxu0 %v2366
          %2547 = vmatpush.msra.mxu0 %v2364
          %2548 = vmatpush.msra.mxu0 %v2362
          %2549 = vmatpush.msra.mxu0 %v2360
          %2550 = vmatpush.msra.mxu0 %v2358
          %2551 = vmatpush.msra.mxu0 %v2356
          %2552 = vmatpush.msra.mxu0 %v2354
          %2553 = vmatpush.msra.mxu0 %v2352
          %2554 = vmatpush.msra.mxu0 %v2350
          %2555 = vmatmul.f32.gmra.mxu0 %v2283
          %v2556 = vpop.f32.mrf.mxu0
          %v2557 = vadd.f32 %v2537, %v2556
          %2558 = vdwg.mxu0
          %2559 = vmatpush.msra.mxu0 %v2412
          %2560 = vmatpush.msra.mxu0 %v2410
          %2561 = vmatpush.msra.mxu0 %v2408
          %2562 = vmatpush.msra.mxu0 %v2406
          %2563 = vmatpush.msra.mxu0 %v2404
          %2564 = vmatpush.msra.mxu0 %v2402
          %2565 = vmatpush.msra.mxu0 %v2400
          %2566 = vmatpush.msra.mxu0 %v2398
          %2567 = vmatpush.msra.mxu0 %v2396
          %2568 = vmatpush.msra.mxu0 %v2394
          %2569 = vmatpush.msra.mxu0 %v2392
          %2570 = vmatpush.msra.mxu0 %v2390
          %2571 = vmatpush.msra.mxu0 %v2388
          %2572 = vmatpush.msra.mxu0 %v2386
          %2573 = vmatpush.msra.mxu0 %v2384
          %2574 = vmatpush.msra.mxu0 %v2382
          %2575 = vmatmul.f32.gmra.mxu0 %v2284
          %v2576 = vpop.f32.mrf.mxu0
          %v2577 = vadd.f32 %v2557, %v2576
          %2578 = vdwg.mxu0
          %v2579 = vmax.f32 %v2497, 0.0
          %v2580 = vmax.f32 %v2577, 0.0
          %v2581 = vld [vmem:[%s11] sm:$0xff]
          %v2582 = vld [vmem:[%s11 + $0x8] sm:$0xff]
          %v2583 = vld [vmem:[%s11 + $0x10] sm:$0xff]
          %v2584 = vld [vmem:[%s11 + $0x18] sm:$0xff]
          %v2585 = vld [vmem:[%s11 + $0x20] sm:$0xff]
          %v2586 = vld [vmem:[%s11 + $0x28] sm:$0xff]
          %v2587 = vld [vmem:[%s11 + $0x30] sm:$0xff]
          %v2588 = vld [vmem:[%s11 + $0x38] sm:$0xff]
          %v2589 = vld [vmem:[%s11 + $0x40] sm:$0xff]
          %v2590 = vld [vmem:[%s11 + $0x48] sm:$0xff]
          %v2591 = vld [vmem:[%s11 + $0x50] sm:$0xff]
          %v2592 = vld [vmem:[%s11 + $0x58] sm:$0xff]
          %v2593 = vld [vmem:[%s11 + $0x60] sm:$0xff]
          %v2594 = vld [vmem:[%s11 + $0x68] sm:$0xff]
          %v2595 = vld [vmem:[%s11 + $0x70] sm:$0xff]
          %v2596 = vld [vmem:[%s11 + $0x78] sm:$0xff]
          %v2597 = vld [vmem:[%s11 + $0x80] sm:$0xff]
          %v2598 = vld [vmem:[%s11 + $0x88] sm:$0xff]
          %v2599 = vld [vmem:[%s11 + $0x90] sm:$0xff]
          %v2600 = vld [vmem:[%s11 + $0x98] sm:$0xff]
          %v2601 = vld [vmem:[%s11 + $0xa0] sm:$0xff]
          %v2602 = vld [vmem:[%s11 + $0xa8] sm:$0xff]
          %v2603 = vld [vmem:[%s11 + $0xb0] sm:$0xff]
          %v2604 = vld [vmem:[%s11 + $0xb8] sm:$0xff]
          %v2605 = vld [vmem:[%s11 + $0xc0] sm:$0xff]
          %v2606 = vld [vmem:[%s11 + $0xc8] sm:$0xff]
          %v2607 = vld [vmem:[%s11 + $0xd0] sm:$0xff]
          %v2608 = vld [vmem:[%s11 + $0xd8] sm:$0xff]
          %v2609 = vld [vmem:[%s11 + $0xe0] sm:$0xff]
          %v2610 = vld [vmem:[%s11 + $0xe8] sm:$0xff]
          %v2611 = vld [vmem:[%s11 + $0xf0] sm:$0xff]
          %v2612 = vld [vmem:[%s11 + $0xf8] sm:$0xff]
          %v2613 = vld [vmem:[#allocation20] sm:$0x1]
          %2614 = vmatpush.msra.mxu0 %v2596
          %2615 = vmatpush.msra.mxu0 %v2595
          %2616 = vmatpush.msra.mxu0 %v2594
          %2617 = vmatpush.msra.mxu0 %v2593
          %2618 = vmatpush.msra.mxu0 %v2592
          %2619 = vmatpush.msra.mxu0 %v2591
          %2620 = vmatpush.msra.mxu0 %v2590
          %2621 = vmatpush.msra.mxu0 %v2589
          %2622 = vmatpush.msra.mxu0 %v2588
          %2623 = vmatpush.msra.mxu0 %v2587
          %2624 = vmatpush.msra.mxu0 %v2586
          %2625 = vmatpush.msra.mxu0 %v2585
          %2626 = vmatpush.msra.mxu0 %v2584
          %2627 = vmatpush.msra.mxu0 %v2583
          %2628 = vmatpush.msra.mxu0 %v2582
          %2629 = vmatpush.msra.mxu0 %v2581
          %2630 = vmatmul.f32.gmra.mxu0 %v2579
          %v2631 = vpop.f32.mrf.mxu0
          %v2632 = vadd.f32 %v2613, %v2631
          %2633 = vdwg.mxu0
          %2634 = vmatpush.msra.mxu0 %v2612
          %2635 = vmatpush.msra.mxu0 %v2611
          %2636 = vmatpush.msra.mxu0 %v2610
          %2637 = vmatpush.msra.mxu0 %v2609
          %2638 = vmatpush.msra.mxu0 %v2608
          %2639 = vmatpush.msra.mxu0 %v2607
          %2640 = vmatpush.msra.mxu0 %v2606
          %2641 = vmatpush.msra.mxu0 %v2605
          %2642 = vmatpush.msra.mxu0 %v2604
          %2643 = vmatpush.msra.mxu0 %v2603
          %2644 = vmatpush.msra.mxu0 %v2602
          %2645 = vmatpush.msra.mxu0 %v2601
          %2646 = vmatpush.msra.mxu0 %v2600
          %2647 = vmatpush.msra.mxu0 %v2599
          %2648 = vmatpush.msra.mxu0 %v2598
          %2649 = vmatpush.msra.mxu0 %v2597
          %2650 = vmatmul.f32.gmra.mxu0 %v2580
          %v2651 = vpop.f32.mrf.mxu0
          %v2652 = vadd.f32 %v2632, %v2651
          %2653 = vdwg.mxu0
          %vm2654 = vcmask 16384
          %2655 = vst.msk [vmem:[%s620] sm:$0x1] %vm2654, %v2652
        $region124: #{tpu_custom_call.1} parent=71 // pred_fallthru
          _
        %s2656 = sand.u32 %s335, 1
        %s2657 = scalar_lea.sflag [#allocation5], %s2656
        %s2658 = sand.u32 %s335, 1
        %s2659 = scalar_lea.vmem [#allocation21], %s2658
        // Predicated region
        $region125: #{tpu_custom_call.1} parent=71 // pred_check
          %p2660 = pneg %p345
        $region126: #{tpu_custom_call.1} parent=71 // pred_check_branch
          %2662 = sbr.rel (%p2660) target = $region128
        $region127: #{tpu_custom_call.1} parent=71 // pred_region
          %2664 = vsyncadd %s2657, 0
          %s2665 = scalar_lea.hbm %s13, %s37
          %s2667 = sshll.u32 %s2659, 4
          %s2668 = int_to_ptr.vmem [resolvable:$true] %s2667
          %s2669 = sshll.u32 %s2665, 4
          %s2670 = int_to_ptr.hbm [resolvable:$true] %s2669
          %2672 = dma.vmem_to_hbm [thread:$0]  %s2668, 16, %s2670, %s2657
        $region128: #{tpu_custom_call.1} parent=71 // pred_fallthru
          _
      $region72: #{tpu_custom_call.1} parent=5 // pred_fallthru
        _
      %p2673 = scmp.le.s32.totalorder 2, %s28
      // Predicated region
      $region129: #{tpu_custom_call.1} parent=5 // pred_check
        %p2674 = pneg %p2673
      $region130: #{tpu_custom_call.1} parent=5 // pred_check_branch
        %2676 = sbr.rel (%p2674) target = $region132
      $region131: #{tpu_custom_call.1} parent=5 // pred_region
        %s2677 = ssub.s32 %s28, 2
        // Predicated region
        $region133: #{tpu_custom_call.1} parent=131 // pred_check
          %p2678 = pneg %p351
        $region134: #{tpu_custom_call.1} parent=131 // pred_check_branch
          %2680 = sbr.rel (%p2678) target = $region136
        $region135: #{tpu_custom_call.1} parent=131 // pred_region
          %s2681 = sand.u32 %s336, 1
          %s2682 = scalar_lea.sflag [#allocation5], %s2681
          %s2683 = sand.u32 %s336, 1
          %s2684 = scalar_lea.vmem [#allocation21], %s2683
          %2686 = dma.done %s2682, 16
        $region136: #{tpu_custom_call.1} parent=131 // pred_fallthru
          _
      $region132: #{tpu_custom_call.1} parent=5 // pred_fallthru
        _
    $region6: #{tpu_custom_call.1} parent=1 // loop_footer
      %s32 = sadd.s32 1, %s28
    $region7: #{tpu_custom_call.1} parent=1 // loop_footer_branch
      %27 = sbr.rel target = $region3
    $region8: #{tpu_custom_call.1} parent=1 // loop_exit
      _
    %2687 = vsyncpa [#allocation4], 1
    %s2688 = scalar_lea.sflag [#allocation4], 1
    %2689 = vsyncpa %s2688, 1
    %2690 = vsyncpa [#allocation7], 1
    %2691 = vsyncpa [#allocation10], 1
    %2692 = vsyncpa [#allocation13], 1
    %2693 = vsyncpa [#allocation16], 1
    %2694 = vsyncpa [#allocation19], 1
    %2695 = vsyncpa [#allocation5], 1
    %s2696 = scalar_lea.sflag [#allocation5], 1
    %2697 = vsyncpa %s2696, 1

</llo_original>
